<compile_context>
chip_gen: v6e
topology: v6e:2x2x1
jax: 0.10.0
libtpu: 0.0.40
codegen_flags: <defaults>
</compile_context>

<pallas_src>
import jax
import jax.numpy as jnp
from jax.experimental import pallas as pl
from jax.experimental.pallas import tpu as pltpu

# ------------------------- small, module-consistent sizes -------------------------
VOCAB   = 16    # dicts.size()
EMB     = 32    # opt.word_vec_size
HID     = 32    # opt.rnn_size
LAYERS  = 2     # opt.layers
BATCH   = 8     # multiple of 8 -> full sublane occupancy (perf review)
SRC_LEN = 8     # power of two (summat mask uses a bitwise-and modulo)
TGT_LEN = 6
PAD     = 0     # onmt.Constants.PAD (embedding row zeroed)

# packed-weight row offsets (all matmul sections 8-aligned)
W1_OFF     = EMB + 2 * HID          # 96  : start of [W_ih1 ; W_hh1]
B0_ROW     = W1_OFF + 2 * HID       # 160 : layer-0 bias row
B1_ROW     = B0_ROW + 1             # 161 : layer-1 bias row
WPACK_ROWS = B1_ROW + 1             # 162


# ------------------------------- Pallas kernel ------------------------------------
def decoder_kernel(tok_ref, h0_ref, c0_ref, feed0_ref, ctx_ref,
                   emb_tbl_ref, wpack_ref, wattn_ref,
                   out_ref, hN_ref, cN_ref, attn_ref):
    f32 = jnp.float32

    # ---------------- loop-invariant setup (hoisted out of the recurrence) ---------
    # weight sections read straight from the packed ref (static, 8-aligned slices)
    w0_emb  = wpack_ref[0:EMB, :]                              # (E, 4H)
    w0_feed = wpack_ref[EMB:EMB + HID, :]                      # (H, 4H)
    w0_h    = wpack_ref[EMB + HID:EMB + 2 * HID, :]            # (H, 4H)
    w1_x    = wpack_ref[W1_OFF:W1_OFF + HID, :]                # (H, 4H)
    w1_h    = wpack_ref[W1_OFF + HID:W1_OFF + 2 * HID, :]      # (H, 4H)
    # bias broadcasts hoisted (JAX does not CSE broadcast_in_dim across the unroll)
    b0b = jnp.broadcast_to(wpack_ref[B0_ROW:B0_ROW + 1, :], (BATCH, 4 * HID))
    b1b = jnp.broadcast_to(wpack_ref[B1_ROW:B1_ROW + 1, :], (BATCH, 4 * HID))

    w_in    = wattn_ref[0:HID, :]                              # attn linear_in   (H, H)
    w_out_c = wattn_ref[HID:2 * HID, :]                        # linear_out, ctx rows
    w_out_r = wattn_ref[2 * HID:3 * HID, :]                    # linear_out, rnn rows

    # context arrives in its native (S, B, H) layout; flatten to batch-major
    # (B*S, H) once (replaces the per-step broadcast + XLU-reduce path).
    ctx = ctx_ref[...]                                         # (S, B, H)
    ctx_flat = jnp.concatenate([ctx[:, b, :] for b in range(BATCH)], axis=0)  # (B*S, H)
    # Fold the loop-invariant attention projections into the context once:
    #   rnn_out @ w_sc    == (rnn_out @ w_in) @ ctx_flat.T     (scores, pre-mask)
    #   ae      @ ctx_out == (ae @ ctx_flat) @ w_out_c         (weighted-ctx proj)
    w_sc    = jnp.dot(w_in, ctx_flat.T, preferred_element_type=f32)    # (H, B*S)
    ctx_out = jnp.dot(ctx_flat, w_out_c, preferred_element_type=f32)   # (B*S, H)

    # block-diagonal helpers: keep the batched attention on the MXU, no relayouts
    col = jax.lax.broadcasted_iota(jnp.int32, (BATCH, BATCH * SRC_LEN), 1)
    row = jax.lax.broadcasted_iota(jnp.int32, (BATCH, BATCH * SRC_LEN), 0)
    lo = row * SRC_LEN
    blockmask = ((col >= lo) & (col < lo + SRC_LEN)).astype(f32)        # (B, B*S)
    jj = jax.lax.broadcasted_iota(jnp.int32, (BATCH * SRC_LEN, SRC_LEN), 0)
    ss = jax.lax.broadcasted_iota(jnp.int32, (BATCH * SRC_LEN, SRC_LEN), 1)
    summat = (jnp.bitwise_and(jj, SRC_LEN - 1) == ss).astype(f32)       # (B*S, S)

    # in-kernel embedding lookup: one one-hot matmul for the whole target sequence
    tok = tok_ref[...]                                                  # (T*B, 1) i32
    viota = jax.lax.broadcasted_iota(jnp.int32, (TGT_LEN * BATCH, VOCAB), 1)
    onehot = (viota == tok).astype(f32)                                 # (T*B, V)
    emb_all = jnp.dot(onehot, emb_tbl_ref[...],
                      preferred_element_type=f32)                       # (T*B, E)

    def lstm_cell(gates, c_p):
        # full-vreg nonlinearities: 2 EUP passes per cell instead of 4
        sig = jax.nn.sigmoid(gates)                                     # (B, 4H)
        th  = jnp.tanh(gates)                                           # (B, 4H)
        i = sig[:, 0 * HID:1 * HID]
        f = sig[:, 1 * HID:2 * HID]
        g = th[:, 2 * HID:3 * HID]
        o = sig[:, 3 * HID:4 * HID]
        c_n = f * c_p + i * g
        return o * jnp.tanh(c_n), c_n

    h_prev = [h0_ref[l] for l in range(LAYERS)]
    c_prev = [c0_ref[l] for l in range(LAYERS)]
    feed = feed0_ref[...]                     # (B, H) input-feed (prev attn output)
    attn = None

    # T is tiny: fully unroll the sequential recurrence in ONE invocation.
    for t in range(TGT_LEN):
        emb_t = emb_all[t * BATCH:(t + 1) * BATCH, :]                   # (B, E)

        # --- StackedLSTM layer 0: split dots over [emb ; feed ; h_prev0]
        #     (no scratch-concat round trip; partials summed -- MXU is idle anyway).
        gates0 = (jnp.dot(emb_t, w0_emb, preferred_element_type=f32)
                  + jnp.dot(feed, w0_feed, preferred_element_type=f32)
                  + jnp.dot(h_prev[0], w0_h, preferred_element_type=f32)
                  + b0b)
        h0n, c0n = lstm_cell(gates0, c_prev[0])

        # TODO(synk): inter-layer dropout omitted (p=0.0 / eval mode).

        # --- StackedLSTM layer 1: split dots over [h0n ; h_prev1].
        gates1 = (jnp.dot(h0n, w1_x, preferred_element_type=f32)
                  + jnp.dot(h_prev[1], w1_h, preferred_element_type=f32)
                  + b1b)
        h1n, c1n = lstm_cell(gates1, c_prev[1])

        h_prev = [h0n, h1n]
        c_prev = [c0n, c1n]
        rnn_out = h1n                                                   # (B, H)

        # --- GlobalAttention: batched block-diagonal MXU formulation.
        sf = jnp.dot(rnn_out, w_sc, preferred_element_type=f32) * blockmask  # (B, B*S)
        scores = jnp.dot(sf, summat, preferred_element_type=f32)             # (B, S)
        scores = scores - jnp.max(scores, axis=-1, keepdims=True)
        e = jnp.exp(scores)
        denom = jnp.sum(e, axis=-1, keepdims=True)
        r = pl.reciprocal(denom, approx=True)        # EUP vrcp (separate VLIW slot)
        r = r * (2.0 - denom * r)                    # one Newton step -> f32 accuracy
        attn = e * r                                                          # (B, S)

        ae = jnp.concatenate([attn] * BATCH, axis=1) * blockmask              # (B, B*S)
        attn_out = jnp.tanh(
            jnp.dot(ae, ctx_out, preferred_element_type=f32)
            + jnp.dot(rnn_out, w_out_r, preferred_element_type=f32))

        # dropout(attn_out) with p=0.0 == identity
        out_ref[t] = attn_out
        feed = attn_out

    # Final states / last-step attention (the module returns only the last attn).
    for l in range(LAYERS):
        hN_ref[l] = h_prev[l]
        cN_ref[l] = c_prev[l]
    attn_ref[...] = attn


# ------------------------------- wrapper -------------------------------------------
def pack_params(params):
    """One-time parameter packing (done at init, NOT per forward)."""
    w0 = jnp.concatenate([params["wih0"], params["whh0"]], axis=0)   # (E+2H, 4H)
    w1 = jnp.concatenate([params["wih1"], params["whh1"]], axis=0)   # (2H, 4H)
    wpack = jnp.concatenate([w0, w1, params["b0"], params["b1"]], axis=0)   # (162, 4H)
    wattn = jnp.concatenate([params["w_attn_in"], params["w_attn_out"]], axis=0)  # (3H, H)
    return {"emb_table": params["emb_table"], "wpack": wpack, "wattn": wattn}


def decoder_forward(tokens, hidden, context, init_output, packed):
    """tokens: (T, B) int32; hidden: (h, c) each (L, B, H);
    context: (S, B, H) (native PyTorch layout, consumed as-is); init_output: (B, H)."""
    h0, c0 = hidden
    tok_col = tokens.reshape(TGT_LEN * BATCH, 1).astype(jnp.int32)   # only wrapper glue

    vmem = pl.BlockSpec(memory_space=pltpu.MemorySpace.VMEM)
    out_shape = (
        jax.ShapeDtypeStruct((TGT_LEN, BATCH, HID), jnp.float32),
        jax.ShapeDtypeStruct((LAYERS, BATCH, HID), jnp.float32),
        jax.ShapeDtypeStruct((LAYERS, BATCH, HID), jnp.float32),
        jax.ShapeDtypeStruct((BATCH, SRC_LEN), jnp.float32),
    )
    f = pl.pallas_call(
        decoder_kernel,
        out_shape=out_shape,
        in_specs=[vmem] * 8,
        out_specs=(vmem, vmem, vmem, vmem),
    )
    outputs, hN, cN, attn = f(tok_col, h0, c0, init_output, context,
                              packed["emb_table"], packed["wpack"], packed["wattn"])
    return outputs, (hN, cN), attn


# ------------------------------ pure-JAX reference ---------------------------------
def decoder_reference(tokens, hidden, context, init_output, p):
    h0, c0 = hidden
    emb = p["emb_table"][tokens]
    ctx_bf = jnp.transpose(context, (1, 0, 2))

    def cell(x, h, c, w_ih_T, w_hh_T, b):
        gates = x @ w_ih_T + h @ w_hh_T + b
        i, f, g, o = jnp.split(gates, 4, axis=1)
        c2 = jax.nn.sigmoid(f) * c + jax.nn.sigmoid(i) * jnp.tanh(g)
        return jax.nn.sigmoid(o) * jnp.tanh(c2), c2

    h = [h0[l] for l in range(LAYERS)]
    c = [c0[l] for l in range(LAYERS)]
    feed = init_output
    outs, attn = [], None
    for t in range(TGT_LEN):
        x = jnp.concatenate([emb[t], feed], axis=1)
        h[0], c[0] = cell(x, h[0], c[0], p["wih0"], p["whh0"], p["b0"])
        h[1], c[1] = cell(h[0], h[1], c[1], p["wih1"], p["whh1"], p["b1"])
        rnn_out = h[1]
        target = rnn_out @ p["w_attn_in"]
        scores = jnp.einsum("bsh,bh->bs", ctx_bf, target)
        attn = jax.nn.softmax(scores, axis=-1)
        wctx = jnp.einsum("bs,bsh->bh", attn, ctx_bf)
        feed = jnp.tanh(jnp.concatenate([wctx, rnn_out], axis=1) @ p["w_attn_out"])
        outs.append(feed)
    return jnp.stack(outs), (jnp.stack(h), jnp.stack(c)), attn


# --------------------------------- main ---------------------------------------------
if __name__ == "__main__":
    key = jax.random.PRNGKey(0)
    ks = jax.random.split(key, 16)
    scale = 0.1

    emb_table = scale * jax.random.normal(ks[0], (VOCAB, EMB), jnp.float32)
    emb_table = emb_table.at[PAD].set(0.0)   # padding_idx=PAD row is zero

    # PyTorch LSTMCell weights are (4H, in) / (4H, H); stored pre-transposed, bias combined.
    params = {
        "emb_table": emb_table,
        "wih0": scale * jax.random.normal(ks[1], (EMB + HID, 4 * HID), jnp.float32),
        "whh0": scale * jax.random.normal(ks[2], (HID, 4 * HID), jnp.float32),
        "b0":   scale * jax.random.normal(ks[3], (1, 4 * HID), jnp.float32),
        "wih1": scale * jax.random.normal(ks[4], (HID, 4 * HID), jnp.float32),
        "whh1": scale * jax.random.normal(ks[5], (HID, 4 * HID), jnp.float32),
        "b1":   scale * jax.random.normal(ks[6], (1, 4 * HID), jnp.float32),
        "w_attn_in":  scale * jax.random.normal(ks[7], (HID, HID), jnp.float32),
        "w_attn_out": scale * jax.random.normal(ks[8], (2 * HID, HID), jnp.float32),
    }
    packed = pack_params(params)   # one-time packing; no per-forward weight glue

    tokens = jax.random.randint(ks[9], (TGT_LEN, BATCH), 0, VOCAB, jnp.int32)
    h0 = scale * jax.random.normal(ks[10], (LAYERS, BATCH, HID), jnp.float32)
    c0 = scale * jax.random.normal(ks[11], (LAYERS, BATCH, HID), jnp.float32)
    context = scale * jax.random.normal(ks[12], (SRC_LEN, BATCH, HID), jnp.float32)
    init_output = scale * jax.random.normal(ks[13], (BATCH, HID), jnp.float32)

    outputs, (hN, cN), attn = decoder_forward(tokens, (h0, c0), context,
                                              init_output, packed)
    jax.block_until_ready((outputs, hN, cN, attn))

    r_out, (r_h, r_c), r_attn = decoder_reference(tokens, (h0, c0), context,
                                                  init_output, params)
    assert jnp.allclose(outputs, r_out, rtol=1e-4, atol=1e-5), "outputs mismatch"
    assert jnp.allclose(hN, r_h, rtol=1e-4, atol=1e-5), "h mismatch"
    assert jnp.allclose(cN, r_c, rtol=1e-4, atol=1e-5), "c mismatch"
    assert jnp.allclose(attn, r_attn, rtol=1e-4, atol=1e-5), "attn mismatch"

    print("KERNEL_OK")
</pallas_src>

<mosaic_0001>
module attributes {stable_mosaic.version = 11 : i64} {
  func.func @decoder_kernel(%arg0: memref<48x1xi32, #tpu.memory_space<vmem>>, %arg1: memref<2x8x32xf32, #tpu.memory_space<vmem>>, %arg2: memref<2x8x32xf32, #tpu.memory_space<vmem>>, %arg3: memref<8x32xf32, #tpu.memory_space<vmem>>, %arg4: memref<8x8x32xf32, #tpu.memory_space<vmem>>, %arg5: memref<16x32xf32, #tpu.memory_space<vmem>>, %arg6: memref<162x128xf32, #tpu.memory_space<vmem>>, %arg7: memref<96x32xf32, #tpu.memory_space<vmem>>, %arg8: memref<6x8x32xf32, #tpu.memory_space<vmem>>, %arg9: memref<2x8x32xf32, #tpu.memory_space<vmem>>, %arg10: memref<2x8x32xf32, #tpu.memory_space<vmem>>, %arg11: memref<8x8xf32, #tpu.memory_space<vmem>>) attributes {dimension_semantics = [], scalar_prefetch = 0 : i64, scratch_operands = 0 : i64, tpu.core_type = #tpu.core_type<tc>} {
    %c0 = arith.constant 0 : index
    %c0_0 = arith.constant 0 : index
    %0 = vector.load %arg6[%c0, %c0_0] : memref<162x128xf32, #tpu.memory_space<vmem>>, vector<32x128xf32>
    %c32 = arith.constant 32 : index
    %c0_1 = arith.constant 0 : index
    %1 = vector.load %arg6[%c32, %c0_1] : memref<162x128xf32, #tpu.memory_space<vmem>>, vector<32x128xf32>
    %c64 = arith.constant 64 : index
    %c0_2 = arith.constant 0 : index
    %2 = vector.load %arg6[%c64, %c0_2] : memref<162x128xf32, #tpu.memory_space<vmem>>, vector<32x128xf32>
    %c96 = arith.constant 96 : index
    %c0_3 = arith.constant 0 : index
    %3 = vector.load %arg6[%c96, %c0_3] : memref<162x128xf32, #tpu.memory_space<vmem>>, vector<32x128xf32>
    %c128 = arith.constant 128 : index
    %c0_4 = arith.constant 0 : index
    %4 = vector.load %arg6[%c128, %c0_4] : memref<162x128xf32, #tpu.memory_space<vmem>>, vector<32x128xf32>
    %c160 = arith.constant 160 : index
    %c0_5 = arith.constant 0 : index
    %5 = vector.load %arg6[%c160, %c0_5] : memref<162x128xf32, #tpu.memory_space<vmem>>, vector<1x128xf32>
    %6 = vector.shape_cast %5 : vector<1x128xf32> to vector<1x128xf32>
    %7 = vector.broadcast %6 : vector<1x128xf32> to vector<8x128xf32>
    %c161 = arith.constant 161 : index
    %c0_6 = arith.constant 0 : index
    %8 = vector.load %arg6[%c161, %c0_6] : memref<162x128xf32, #tpu.memory_space<vmem>>, vector<1x128xf32>
    %9 = vector.shape_cast %8 : vector<1x128xf32> to vector<1x128xf32>
    %10 = vector.broadcast %9 : vector<1x128xf32> to vector<8x128xf32>
    %c0_7 = arith.constant 0 : index
    %c0_8 = arith.constant 0 : index
    %11 = vector.load %arg7[%c0_7, %c0_8] : memref<96x32xf32, #tpu.memory_space<vmem>>, vector<32x32xf32>
    %c32_9 = arith.constant 32 : index
    %c0_10 = arith.constant 0 : index
    %12 = vector.load %arg7[%c32_9, %c0_10] : memref<96x32xf32, #tpu.memory_space<vmem>>, vector<32x32xf32>
    %c64_11 = arith.constant 64 : index
    %c0_12 = arith.constant 0 : index
    %13 = vector.load %arg7[%c64_11, %c0_12] : memref<96x32xf32, #tpu.memory_space<vmem>>, vector<32x32xf32>
    %c0_13 = arith.constant 0 : index
    %c0_14 = arith.constant 0 : index
    %c0_15 = arith.constant 0 : index
    %14 = vector.load %arg4[%c0_13, %c0_14, %c0_15] : memref<8x8x32xf32, #tpu.memory_space<vmem>>, vector<8x8x32xf32>
    %15 = vector.extract_strided_slice %14 {offsets = [0, 0, 0], sizes = [8, 1, 32], strides = [1, 1, 1]} : vector<8x8x32xf32> to vector<8x1x32xf32>
    %16 = vector.shape_cast %15 : vector<8x1x32xf32> to vector<8x32xf32>
    %17 = vector.extract_strided_slice %14 {offsets = [0, 1, 0], sizes = [8, 1, 32], strides = [1, 1, 1]} : vector<8x8x32xf32> to vector<8x1x32xf32>
    %18 = vector.shape_cast %17 : vector<8x1x32xf32> to vector<8x32xf32>
    %19 = vector.extract_strided_slice %14 {offsets = [0, 2, 0], sizes = [8, 1, 32], strides = [1, 1, 1]} : vector<8x8x32xf32> to vector<8x1x32xf32>
    %20 = vector.shape_cast %19 : vector<8x1x32xf32> to vector<8x32xf32>
    %21 = vector.extract_strided_slice %14 {offsets = [0, 3, 0], sizes = [8, 1, 32], strides = [1, 1, 1]} : vector<8x8x32xf32> to vector<8x1x32xf32>
    %22 = vector.shape_cast %21 : vector<8x1x32xf32> to vector<8x32xf32>
    %23 = vector.extract_strided_slice %14 {offsets = [0, 4, 0], sizes = [8, 1, 32], strides = [1, 1, 1]} : vector<8x8x32xf32> to vector<8x1x32xf32>
    %24 = vector.shape_cast %23 : vector<8x1x32xf32> to vector<8x32xf32>
    %25 = vector.extract_strided_slice %14 {offsets = [0, 5, 0], sizes = [8, 1, 32], strides = [1, 1, 1]} : vector<8x8x32xf32> to vector<8x1x32xf32>
    %26 = vector.shape_cast %25 : vector<8x1x32xf32> to vector<8x32xf32>
    %27 = vector.extract_strided_slice %14 {offsets = [0, 6, 0], sizes = [8, 1, 32], strides = [1, 1, 1]} : vector<8x8x32xf32> to vector<8x1x32xf32>
    %28 = vector.shape_cast %27 : vector<8x1x32xf32> to vector<8x32xf32>
    %29 = vector.extract_strided_slice %14 {offsets = [0, 7, 0], sizes = [8, 1, 32], strides = [1, 1, 1]} : vector<8x8x32xf32> to vector<8x1x32xf32>
    %30 = vector.shape_cast %29 : vector<8x1x32xf32> to vector<8x32xf32>
    %31 = tpu.concatenate %16, %18, %20, %22, %24, %26, %28, %30 in 0 : vector<8x32xf32>, vector<8x32xf32>, vector<8x32xf32>, vector<8x32xf32>, vector<8x32xf32>, vector<8x32xf32>, vector<8x32xf32>, vector<8x32xf32> -> vector<64x32xf32>
    %32 = tpu.transpose %31, [1, 0] : vector<64x32xf32> -> vector<32x64xf32>
    %cst = arith.constant dense<0.000000e+00> : vector<32x64xf32>
    %33 = tpu.matmul %11, %32, %cst {dimension_numbers = #tpu.dot_dimension_numbers<[1], [0], [0], [1], [0, 0, 1, 1], [], []>} : vector<32x32xf32>, vector<32x64xf32>, vector<32x64xf32> -> vector<32x64xf32>
    %cst_16 = arith.constant dense<0.000000e+00> : vector<64x32xf32>
    %34 = tpu.matmul %31, %12, %cst_16 {dimension_numbers = #tpu.dot_dimension_numbers<[1], [0], [0], [1], [0, 0, 1, 1], [], []>} : vector<64x32xf32>, vector<32x32xf32>, vector<64x32xf32> -> vector<64x32xf32>
    %35 = tpu.iota {dimensions = array<i32: 1>} : vector<8x64xi32>
    %36 = tpu.iota {dimensions = array<i32: 0>} : vector<8x64xi32>
    %c8_i32 = arith.constant 8 : i32
    %37 = vector.broadcast %c8_i32 : i32 to vector<8x64xi32>
    %38 = arith.muli %36, %37 : vector<8x64xi32>
    %39 = arith.cmpi sge, %35, %38 : vector<8x64xi32>
    %c8_i32_17 = arith.constant 8 : i32
    %40 = vector.broadcast %c8_i32_17 : i32 to vector<8x64xi32>
    %41 = arith.addi %38, %40 : vector<8x64xi32>
    %42 = arith.cmpi slt, %35, %41 : vector<8x64xi32>
    %43 = arith.andi %39, %42 : vector<8x64xi1>
    %44 = arith.extui %43 : vector<8x64xi1> to vector<8x64xi32>
    %45 = arith.sitofp %44 : vector<8x64xi32> to vector<8x64xf32>
    %46 = tpu.iota {dimensions = array<i32: 0>} : vector<64x8xi32>
    %47 = tpu.iota {dimensions = array<i32: 1>} : vector<64x8xi32>
    %c7_i32 = arith.constant 7 : i32
    %48 = vector.broadcast %c7_i32 : i32 to vector<64x8xi32>
    %49 = arith.andi %46, %48 : vector<64x8xi32>
    %50 = arith.cmpi eq, %49, %47 : vector<64x8xi32>
    %51 = arith.extui %50 : vector<64x8xi1> to vector<64x8xi32>
    %52 = arith.sitofp %51 : vector<64x8xi32> to vector<64x8xf32>
    %c0_18 = arith.constant 0 : index
    %c0_19 = arith.constant 0 : index
    %53 = vector.load %arg0[%c0_18, %c0_19] : memref<48x1xi32, #tpu.memory_space<vmem>>, vector<48x1xi32>
    %54 = tpu.iota {dimensions = array<i32: 1>} : vector<48x16xi32>
    %55 = vector.broadcast %53 : vector<48x1xi32> to vector<48x16xi32>
    %56 = arith.cmpi eq, %54, %55 : vector<48x16xi32>
    %57 = arith.extui %56 : vector<48x16xi1> to vector<48x16xi32>
    %58 = arith.sitofp %57 : vector<48x16xi32> to vector<48x16xf32>
    %c0_20 = arith.constant 0 : index
    %c0_21 = arith.constant 0 : index
    %59 = vector.load %arg5[%c0_20, %c0_21] : memref<16x32xf32, #tpu.memory_space<vmem>>, vector<16x32xf32>
    %cst_22 = arith.constant dense<0.000000e+00> : vector<48x32xf32>
    %60 = tpu.matmul %58, %59, %cst_22 {dimension_numbers = #tpu.dot_dimension_numbers<[1], [0], [0], [1], [0, 0, 1, 1], [], []>} : vector<48x16xf32>, vector<16x32xf32>, vector<48x32xf32> -> vector<48x32xf32>
    %c0_23 = arith.constant 0 : index
    %c0_24 = arith.constant 0 : index
    %c0_25 = arith.constant 0 : index
    %61 = vector.load %arg1[%c0_23, %c0_24, %c0_25] : memref<2x8x32xf32, #tpu.memory_space<vmem>>, vector<1x8x32xf32>
    %62 = vector.shape_cast %61 : vector<1x8x32xf32> to vector<8x32xf32>
    %c1 = arith.constant 1 : index
    %c0_26 = arith.constant 0 : index
    %c0_27 = arith.constant 0 : index
    %63 = vector.load %arg1[%c1, %c0_26, %c0_27] : memref<2x8x32xf32, #tpu.memory_space<vmem>>, vector<1x8x32xf32>
    %64 = vector.shape_cast %63 : vector<1x8x32xf32> to vector<8x32xf32>
    %c0_28 = arith.constant 0 : index
    %c0_29 = arith.constant 0 : index
    %c0_30 = arith.constant 0 : index
    %65 = vector.load %arg2[%c0_28, %c0_29, %c0_30] : memref<2x8x32xf32, #tpu.memory_space<vmem>>, vector<1x8x32xf32>
    %66 = vector.shape_cast %65 : vector<1x8x32xf32> to vector<8x32xf32>
    %c1_31 = arith.constant 1 : index
    %c0_32 = arith.constant 0 : index
    %c0_33 = arith.constant 0 : index
    %67 = vector.load %arg2[%c1_31, %c0_32, %c0_33] : memref<2x8x32xf32, #tpu.memory_space<vmem>>, vector<1x8x32xf32>
    %68 = vector.shape_cast %67 : vector<1x8x32xf32> to vector<8x32xf32>
    %c0_34 = arith.constant 0 : index
    %c0_35 = arith.constant 0 : index
    %69 = vector.load %arg3[%c0_34, %c0_35] : memref<8x32xf32, #tpu.memory_space<vmem>>, vector<8x32xf32>
    %70 = vector.extract_strided_slice %60 {offsets = [0, 0], sizes = [8, 32], strides = [1, 1]} : vector<48x32xf32> to vector<8x32xf32>
    %cst_36 = arith.constant dense<0.000000e+00> : vector<8x128xf32>
    %71 = tpu.matmul %70, %0, %cst_36 {dimension_numbers = #tpu.dot_dimension_numbers<[1], [0], [0], [1], [0, 0, 1, 1], [], []>} : vector<8x32xf32>, vector<32x128xf32>, vector<8x128xf32> -> vector<8x128xf32>
    %cst_37 = arith.constant dense<0.000000e+00> : vector<8x128xf32>
    %72 = tpu.matmul %69, %1, %cst_37 {dimension_numbers = #tpu.dot_dimension_numbers<[1], [0], [0], [1], [0, 0, 1, 1], [], []>} : vector<8x32xf32>, vector<32x128xf32>, vector<8x128xf32> -> vector<8x128xf32>
    %73 = arith.addf %71, %72 : vector<8x128xf32>
    %cst_38 = arith.constant dense<0.000000e+00> : vector<8x128xf32>
    %74 = tpu.matmul %62, %2, %cst_38 {dimension_numbers = #tpu.dot_dimension_numbers<[1], [0], [0], [1], [0, 0, 1, 1], [], []>} : vector<8x32xf32>, vector<32x128xf32>, vector<8x128xf32> -> vector<8x128xf32>
    %75 = arith.addf %73, %74 : vector<8x128xf32>
    %76 = arith.addf %75, %7 : vector<8x128xf32>
    %77 = arith.negf %76 : vector<8x128xf32>
    %78 = math.exp %77 : vector<8x128xf32>
    %cst_39 = arith.constant 1.000000e+00 : f32
    %79 = vector.broadcast %cst_39 : f32 to vector<8x128xf32>
    %80 = arith.addf %79, %78 : vector<8x128xf32>
    %81 = arith.divf %79, %80 : vector<8x128xf32>
    %82 = math.tanh %76 : vector<8x128xf32>
    %83 = vector.extract_strided_slice %81 {offsets = [0, 0], sizes = [8, 32], strides = [1, 1]} : vector<8x128xf32> to vector<8x32xf32>
    %84 = vector.extract_strided_slice %81 {offsets = [0, 32], sizes = [8, 32], strides = [1, 1]} : vector<8x128xf32> to vector<8x32xf32>
    %85 = vector.extract_strided_slice %82 {offsets = [0, 64], sizes = [8, 32], strides = [1, 1]} : vector<8x128xf32> to vector<8x32xf32>
    %86 = vector.extract_strided_slice %81 {offsets = [0, 96], sizes = [8, 32], strides = [1, 1]} : vector<8x128xf32> to vector<8x32xf32>
    %87 = arith.mulf %84, %66 : vector<8x32xf32>
    %88 = arith.mulf %83, %85 : vector<8x32xf32>
    %89 = arith.addf %87, %88 : vector<8x32xf32>
    %90 = math.tanh %89 : vector<8x32xf32>
    %91 = arith.mulf %86, %90 : vector<8x32xf32>
    %cst_40 = arith.constant dense<0.000000e+00> : vector<8x128xf32>
    %92 = tpu.matmul %91, %3, %cst_40 {dimension_numbers = #tpu.dot_dimension_numbers<[1], [0], [0], [1], [0, 0, 1, 1], [], []>} : vector<8x32xf32>, vector<32x128xf32>, vector<8x128xf32> -> vector<8x128xf32>
    %cst_41 = arith.constant dense<0.000000e+00> : vector<8x128xf32>
    %93 = tpu.matmul %64, %4, %cst_41 {dimension_numbers = #tpu.dot_dimension_numbers<[1], [0], [0], [1], [0, 0, 1, 1], [], []>} : vector<8x32xf32>, vector<32x128xf32>, vector<8x128xf32> -> vector<8x128xf32>
    %94 = arith.addf %92, %93 : vector<8x128xf32>
    %95 = arith.addf %94, %10 : vector<8x128xf32>
    %96 = arith.negf %95 : vector<8x128xf32>
    %97 = math.exp %96 : vector<8x128xf32>
    %cst_42 = arith.constant 1.000000e+00 : f32
    %98 = vector.broadcast %cst_42 : f32 to vector<8x128xf32>
    %99 = arith.addf %98, %97 : vector<8x128xf32>
    %100 = arith.divf %98, %99 : vector<8x128xf32>
    %101 = math.tanh %95 : vector<8x128xf32>
    %102 = vector.extract_strided_slice %100 {offsets = [0, 0], sizes = [8, 32], strides = [1, 1]} : vector<8x128xf32> to vector<8x32xf32>
    %103 = vector.extract_strided_slice %100 {offsets = [0, 32], sizes = [8, 32], strides = [1, 1]} : vector<8x128xf32> to vector<8x32xf32>
    %104 = vector.extract_strided_slice %101 {offsets = [0, 64], sizes = [8, 32], strides = [1, 1]} : vector<8x128xf32> to vector<8x32xf32>
    %105 = vector.extract_strided_slice %100 {offsets = [0, 96], sizes = [8, 32], strides = [1, 1]} : vector<8x128xf32> to vector<8x32xf32>
    %106 = arith.mulf %103, %68 : vector<8x32xf32>
    %107 = arith.mulf %102, %104 : vector<8x32xf32>
    %108 = arith.addf %106, %107 : vector<8x32xf32>
    %109 = math.tanh %108 : vector<8x32xf32>
    %110 = arith.mulf %105, %109 : vector<8x32xf32>
    %cst_43 = arith.constant dense<0.000000e+00> : vector<8x64xf32>
    %111 = tpu.matmul %110, %33, %cst_43 {dimension_numbers = #tpu.dot_dimension_numbers<[1], [0], [0], [1], [0, 0, 1, 1], [], []>} : vector<8x32xf32>, vector<32x64xf32>, vector<8x64xf32> -> vector<8x64xf32>
    %112 = arith.mulf %111, %45 : vector<8x64xf32>
    %cst_44 = arith.constant dense<0.000000e+00> : vector<8x8xf32>
    %113 = tpu.matmul %112, %52, %cst_44 {dimension_numbers = #tpu.dot_dimension_numbers<[1], [0], [0], [1], [0, 0, 1, 1], [], []>} : vector<8x64xf32>, vector<64x8xf32>, vector<8x8xf32> -> vector<8x8xf32>
    %cst_45 = arith.constant dense<0xFF800000> : vector<8xf32>
    %114 = vector.multi_reduction <maximumf>, %113, %cst_45 [1] : vector<8x8xf32> to vector<8xf32>
    %115 = vector.shape_cast %114 : vector<8xf32> to vector<8x1xf32>
    %116 = vector.broadcast %115 : vector<8x1xf32> to vector<8x8xf32>
    %117 = arith.subf %113, %116 : vector<8x8xf32>
    %118 = math.exp %117 : vector<8x8xf32>
    %cst_46 = arith.constant dense<0.000000e+00> : vector<8xf32>
    %119 = vector.multi_reduction <add>, %118, %cst_46 [1] : vector<8x8xf32> to vector<8xf32>
    %120 = vector.shape_cast %119 : vector<8xf32> to vector<8x1xf32>
    %121 = tpu.reciprocal %120 {approx = true} : vector<8x1xf32> -> vector<8x1xf32>
    %122 = arith.mulf %120, %121 : vector<8x1xf32>
    %cst_47 = arith.constant 2.000000e+00 : f32
    %123 = vector.broadcast %cst_47 : f32 to vector<8x1xf32>
    %124 = arith.subf %123, %122 : vector<8x1xf32>
    %125 = arith.mulf %121, %124 : vector<8x1xf32>
    %126 = vector.broadcast %125 : vector<8x1xf32> to vector<8x8xf32>
    %127 = arith.mulf %118, %126 : vector<8x8xf32>
    %128 = tpu.concatenate %127, %127, %127, %127, %127, %127, %127, %127 in 1 : vector<8x8xf32>, vector<8x8xf32>, vector<8x8xf32>, vector<8x8xf32>, vector<8x8xf32>, vector<8x8xf32>, vector<8x8xf32>, vector<8x8xf32> -> vector<8x64xf32>
    %129 = arith.mulf %128, %45 : vector<8x64xf32>
    %cst_48 = arith.constant dense<0.000000e+00> : vector<8x32xf32>
    %130 = tpu.matmul %129, %34, %cst_48 {dimension_numbers = #tpu.dot_dimension_numbers<[1], [0], [0], [1], [0, 0, 1, 1], [], []>} : vector<8x64xf32>, vector<64x32xf32>, vector<8x32xf32> -> vector<8x32xf32>
    %cst_49 = arith.constant dense<0.000000e+00> : vector<8x32xf32>
    %131 = tpu.matmul %110, %13, %cst_49 {dimension_numbers = #tpu.dot_dimension_numbers<[1], [0], [0], [1], [0, 0, 1, 1], [], []>} : vector<8x32xf32>, vector<32x32xf32>, vector<8x32xf32> -> vector<8x32xf32>
    %132 = arith.addf %130, %131 : vector<8x32xf32>
    %133 = math.tanh %132 : vector<8x32xf32>
    %c0_50 = arith.constant 0 : index
    %c0_51 = arith.constant 0 : index
    %c0_52 = arith.constant 0 : index
    %134 = vector.load %arg8[%c0_50, %c0_51, %c0_52] : memref<6x8x32xf32, #tpu.memory_space<vmem>>, vector<1x8x32xf32>
    %135 = vector.shape_cast %134 : vector<1x8x32xf32> to vector<8x32xf32>
    %136 = vector.shape_cast %133 : vector<8x32xf32> to vector<1x8x32xf32>
    tpu.vector_store %arg8[%c0_50, %c0_51, %c0_52], %136 {strides = array<i32>} : memref<6x8x32xf32, #tpu.memory_space<vmem>>, vector<1x8x32xf32>,
    %137 = vector.extract_strided_slice %60 {offsets = [8, 0], sizes = [8, 32], strides = [1, 1]} : vector<48x32xf32> to vector<8x32xf32>
    %cst_53 = arith.constant dense<0.000000e+00> : vector<8x128xf32>
    %138 = tpu.matmul %137, %0, %cst_53 {dimension_numbers = #tpu.dot_dimension_numbers<[1], [0], [0], [1], [0, 0, 1, 1], [], []>} : vector<8x32xf32>, vector<32x128xf32>, vector<8x128xf32> -> vector<8x128xf32>
    %cst_54 = arith.constant dense<0.000000e+00> : vector<8x128xf32>
    %139 = tpu.matmul %133, %1, %cst_54 {dimension_numbers = #tpu.dot_dimension_numbers<[1], [0], [0], [1], [0, 0, 1, 1], [], []>} : vector<8x32xf32>, vector<32x128xf32>, vector<8x128xf32> -> vector<8x128xf32>
    %140 = arith.addf %138, %139 : vector<8x128xf32>
    %cst_55 = arith.constant dense<0.000000e+00> : vector<8x128xf32>
    %141 = tpu.matmul %91, %2, %cst_55 {dimension_numbers = #tpu.dot_dimension_numbers<[1], [0], [0], [1], [0, 0, 1, 1], [], []>} : vector<8x32xf32>, vector<32x128xf32>, vector<8x128xf32> -> vector<8x128xf32>
    %142 = arith.addf %140, %141 : vector<8x128xf32>
    %143 = arith.addf %142, %7 : vector<8x128xf32>
    %144 = arith.negf %143 : vector<8x128xf32>
    %145 = math.exp %144 : vector<8x128xf32>
    %cst_56 = arith.constant 1.000000e+00 : f32
    %146 = vector.broadcast %cst_56 : f32 to vector<8x128xf32>
    %147 = arith.addf %146, %145 : vector<8x128xf32>
    %148 = arith.divf %146, %147 : vector<8x128xf32>
    %149 = math.tanh %143 : vector<8x128xf32>
    %150 = vector.extract_strided_slice %148 {offsets = [0, 0], sizes = [8, 32], strides = [1, 1]} : vector<8x128xf32> to vector<8x32xf32>
    %151 = vector.extract_strided_slice %148 {offsets = [0, 32], sizes = [8, 32], strides = [1, 1]} : vector<8x128xf32> to vector<8x32xf32>
    %152 = vector.extract_strided_slice %149 {offsets = [0, 64], sizes = [8, 32], strides = [1, 1]} : vector<8x128xf32> to vector<8x32xf32>
    %153 = vector.extract_strided_slice %148 {offsets = [0, 96], sizes = [8, 32], strides = [1, 1]} : vector<8x128xf32> to vector<8x32xf32>
    %154 = arith.mulf %151, %89 : vector<8x32xf32>
    %155 = arith.mulf %150, %152 : vector<8x32xf32>
    %156 = arith.addf %154, %155 : vector<8x32xf32>
    %157 = math.tanh %156 : vector<8x32xf32>
    %158 = arith.mulf %153, %157 : vector<8x32xf32>
    %cst_57 = arith.constant dense<0.000000e+00> : vector<8x128xf32>
    %159 = tpu.matmul %158, %3, %cst_57 {dimension_numbers = #tpu.dot_dimension_numbers<[1], [0], [0], [1], [0, 0, 1, 1], [], []>} : vector<8x32xf32>, vector<32x128xf32>, vector<8x128xf32> -> vector<8x128xf32>
    %cst_58 = arith.constant dense<0.000000e+00> : vector<8x128xf32>
    %160 = tpu.matmul %110, %4, %cst_58 {dimension_numbers = #tpu.dot_dimension_numbers<[1], [0], [0], [1], [0, 0, 1, 1], [], []>} : vector<8x32xf32>, vector<32x128xf32>, vector<8x128xf32> -> vector<8x128xf32>
    %161 = arith.addf %159, %160 : vector<8x128xf32>
    %162 = arith.addf %161, %10 : vector<8x128xf32>
    %163 = arith.negf %162 : vector<8x128xf32>
    %164 = math.exp %163 : vector<8x128xf32>
    %cst_59 = arith.constant 1.000000e+00 : f32
    %165 = vector.broadcast %cst_59 : f32 to vector<8x128xf32>
    %166 = arith.addf %165, %164 : vector<8x128xf32>
    %167 = arith.divf %165, %166 : vector<8x128xf32>
    %168 = math.tanh %162 : vector<8x128xf32>
    %169 = vector.extract_strided_slice %167 {offsets = [0, 0], sizes = [8, 32], strides = [1, 1]} : vector<8x128xf32> to vector<8x32xf32>
    %170 = vector.extract_strided_slice %167 {offsets = [0, 32], sizes = [8, 32], strides = [1, 1]} : vector<8x128xf32> to vector<8x32xf32>
    %171 = vector.extract_strided_slice %168 {offsets = [0, 64], sizes = [8, 32], strides = [1, 1]} : vector<8x128xf32> to vector<8x32xf32>
    %172 = vector.extract_strided_slice %167 {offsets = [0, 96], sizes = [8, 32], strides = [1, 1]} : vector<8x128xf32> to vector<8x32xf32>
    %173 = arith.mulf %170, %108 : vector<8x32xf32>
    %174 = arith.mulf %169, %171 : vector<8x32xf32>
    %175 = arith.addf %173, %174 : vector<8x32xf32>
    %176 = math.tanh %175 : vector<8x32xf32>
    %177 = arith.mulf %172, %176 : vector<8x32xf32>
    %cst_60 = arith.constant dense<0.000000e+00> : vector<8x64xf32>
    %178 = tpu.matmul %177, %33, %cst_60 {dimension_numbers = #tpu.dot_dimension_numbers<[1], [0], [0], [1], [0, 0, 1, 1], [], []>} : vector<8x32xf32>, vector<32x64xf32>, vector<8x64xf32> -> vector<8x64xf32>
    %179 = arith.mulf %178, %45 : vector<8x64xf32>
    %cst_61 = arith.constant dense<0.000000e+00> : vector<8x8xf32>
    %180 = tpu.matmul %179, %52, %cst_61 {dimension_numbers = #tpu.dot_dimension_numbers<[1], [0], [0], [1], [0, 0, 1, 1], [], []>} : vector<8x64xf32>, vector<64x8xf32>, vector<8x8xf32> -> vector<8x8xf32>
    %cst_62 = arith.constant dense<0xFF800000> : vector<8xf32>
    %181 = vector.multi_reduction <maximumf>, %180, %cst_62 [1] : vector<8x8xf32> to vector<8xf32>
    %182 = vector.shape_cast %181 : vector<8xf32> to vector<8x1xf32>
    %183 = vector.broadcast %182 : vector<8x1xf32> to vector<8x8xf32>
    %184 = arith.subf %180, %183 : vector<8x8xf32>
    %185 = math.exp %184 : vector<8x8xf32>
    %cst_63 = arith.constant dense<0.000000e+00> : vector<8xf32>
    %186 = vector.multi_reduction <add>, %185, %cst_63 [1] : vector<8x8xf32> to vector<8xf32>
    %187 = vector.shape_cast %186 : vector<8xf32> to vector<8x1xf32>
    %188 = tpu.reciprocal %187 {approx = true} : vector<8x1xf32> -> vector<8x1xf32>
    %189 = arith.mulf %187, %188 : vector<8x1xf32>
    %cst_64 = arith.constant 2.000000e+00 : f32
    %190 = vector.broadcast %cst_64 : f32 to vector<8x1xf32>
    %191 = arith.subf %190, %189 : vector<8x1xf32>
    %192 = arith.mulf %188, %191 : vector<8x1xf32>
    %193 = vector.broadcast %192 : vector<8x1xf32> to vector<8x8xf32>
    %194 = arith.mulf %185, %193 : vector<8x8xf32>
    %195 = tpu.concatenate %194, %194, %194, %194, %194, %194, %194, %194 in 1 : vector<8x8xf32>, vector<8x8xf32>, vector<8x8xf32>, vector<8x8xf32>, vector<8x8xf32>, vector<8x8xf32>, vector<8x8xf32>, vector<8x8xf32> -> vector<8x64xf32>
    %196 = arith.mulf %195, %45 : vector<8x64xf32>
    %cst_65 = arith.constant dense<0.000000e+00> : vector<8x32xf32>
    %197 = tpu.matmul %196, %34, %cst_65 {dimension_numbers = #tpu.dot_dimension_numbers<[1], [0], [0], [1], [0, 0, 1, 1], [], []>} : vector<8x64xf32>, vector<64x32xf32>, vector<8x32xf32> -> vector<8x32xf32>
    %cst_66 = arith.constant dense<0.000000e+00> : vector<8x32xf32>
    %198 = tpu.matmul %177, %13, %cst_66 {dimension_numbers = #tpu.dot_dimension_numbers<[1], [0], [0], [1], [0, 0, 1, 1], [], []>} : vector<8x32xf32>, vector<32x32xf32>, vector<8x32xf32> -> vector<8x32xf32>
    %199 = arith.addf %197, %198 : vector<8x32xf32>
    %200 = math.tanh %199 : vector<8x32xf32>
    %c1_67 = arith.constant 1 : index
    %c0_68 = arith.constant 0 : index
    %c0_69 = arith.constant 0 : index
    %201 = vector.load %arg8[%c1_67, %c0_68, %c0_69] : memref<6x8x32xf32, #tpu.memory_space<vmem>>, vector<1x8x32xf32>
    %202 = vector.shape_cast %201 : vector<1x8x32xf32> to vector<8x32xf32>
    %203 = vector.shape_cast %200 : vector<8x32xf32> to vector<1x8x32xf32>
    tpu.vector_store %arg8[%c1_67, %c0_68, %c0_69], %203 {strides = array<i32>} : memref<6x8x32xf32, #tpu.memory_space<vmem>>, vector<1x8x32xf32>,
    %204 = vector.extract_strided_slice %60 {offsets = [16, 0], sizes = [8, 32], strides = [1, 1]} : vector<48x32xf32> to vector<8x32xf32>
    %cst_70 = arith.constant dense<0.000000e+00> : vector<8x128xf32>
    %205 = tpu.matmul %204, %0, %cst_70 {dimension_numbers = #tpu.dot_dimension_numbers<[1], [0], [0], [1], [0, 0, 1, 1], [], []>} : vector<8x32xf32>, vector<32x128xf32>, vector<8x128xf32> -> vector<8x128xf32>
    %cst_71 = arith.constant dense<0.000000e+00> : vector<8x128xf32>
    %206 = tpu.matmul %200, %1, %cst_71 {dimension_numbers = #tpu.dot_dimension_numbers<[1], [0], [0], [1], [0, 0, 1, 1], [], []>} : vector<8x32xf32>, vector<32x128xf32>, vector<8x128xf32> -> vector<8x128xf32>
    %207 = arith.addf %205, %206 : vector<8x128xf32>
    %cst_72 = arith.constant dense<0.000000e+00> : vector<8x128xf32>
    %208 = tpu.matmul %158, %2, %cst_72 {dimension_numbers = #tpu.dot_dimension_numbers<[1], [0], [0], [1], [0, 0, 1, 1], [], []>} : vector<8x32xf32>, vector<32x128xf32>, vector<8x128xf32> -> vector<8x128xf32>
    %209 = arith.addf %207, %208 : vector<8x128xf32>
    %210 = arith.addf %209, %7 : vector<8x128xf32>
    %211 = arith.negf %210 : vector<8x128xf32>
    %212 = math.exp %211 : vector<8x128xf32>
    %cst_73 = arith.constant 1.000000e+00 : f32
    %213 = vector.broadcast %cst_73 : f32 to vector<8x128xf32>
    %214 = arith.addf %213, %212 : vector<8x128xf32>
    %215 = arith.divf %213, %214 : vector<8x128xf32>
    %216 = math.tanh %210 : vector<8x128xf32>
    %217 = vector.extract_strided_slice %215 {offsets = [0, 0], sizes = [8, 32], strides = [1, 1]} : vector<8x128xf32> to vector<8x32xf32>
    %218 = vector.extract_strided_slice %215 {offsets = [0, 32], sizes = [8, 32], strides = [1, 1]} : vector<8x128xf32> to vector<8x32xf32>
    %219 = vector.extract_strided_slice %216 {offsets = [0, 64], sizes = [8, 32], strides = [1, 1]} : vector<8x128xf32> to vector<8x32xf32>
    %220 = vector.extract_strided_slice %215 {offsets = [0, 96], sizes = [8, 32], strides = [1, 1]} : vector<8x128xf32> to vector<8x32xf32>
    %221 = arith.mulf %218, %156 : vector<8x32xf32>
    %222 = arith.mulf %217, %219 : vector<8x32xf32>
    %223 = arith.addf %221, %222 : vector<8x32xf32>
    %224 = math.tanh %223 : vector<8x32xf32>
    %225 = arith.mulf %220, %224 : vector<8x32xf32>
    %cst_74 = arith.constant dense<0.000000e+00> : vector<8x128xf32>
    %226 = tpu.matmul %225, %3, %cst_74 {dimension_numbers = #tpu.dot_dimension_numbers<[1], [0], [0], [1], [0, 0, 1, 1], [], []>} : vector<8x32xf32>, vector<32x128xf32>, vector<8x128xf32> -> vector<8x128xf32>
    %cst_75 = arith.constant dense<0.000000e+00> : vector<8x128xf32>
    %227 = tpu.matmul %177, %4, %cst_75 {dimension_numbers = #tpu.dot_dimension_numbers<[1], [0], [0], [1], [0, 0, 1, 1], [], []>} : vector<8x32xf32>, vector<32x128xf32>, vector<8x128xf32> -> vector<8x128xf32>
    %228 = arith.addf %226, %227 : vector<8x128xf32>
    %229 = arith.addf %228, %10 : vector<8x128xf32>
    %230 = arith.negf %229 : vector<8x128xf32>
    %231 = math.exp %230 : vector<8x128xf32>
    %cst_76 = arith.constant 1.000000e+00 : f32
    %232 = vector.broadcast %cst_76 : f32 to vector<8x128xf32>
    %233 = arith.addf %232, %231 : vector<8x128xf32>
    %234 = arith.divf %232, %233 : vector<8x128xf32>
    %235 = math.tanh %229 : vector<8x128xf32>
    %236 = vector.extract_strided_slice %234 {offsets = [0, 0], sizes = [8, 32], strides = [1, 1]} : vector<8x128xf32> to vector<8x32xf32>
    %237 = vector.extract_strided_slice %234 {offsets = [0, 32], sizes = [8, 32], strides = [1, 1]} : vector<8x128xf32> to vector<8x32xf32>
    %238 = vector.extract_strided_slice %235 {offsets = [0, 64], sizes = [8, 32], strides = [1, 1]} : vector<8x128xf32> to vector<8x32xf32>
    %239 = vector.extract_strided_slice %234 {offsets = [0, 96], sizes = [8, 32], strides = [1, 1]} : vector<8x128xf32> to vector<8x32xf32>
    %240 = arith.mulf %237, %175 : vector<8x32xf32>
    %241 = arith.mulf %236, %238 : vector<8x32xf32>
    %242 = arith.addf %240, %241 : vector<8x32xf32>
    %243 = math.tanh %242 : vector<8x32xf32>
    %244 = arith.mulf %239, %243 : vector<8x32xf32>
    %cst_77 = arith.constant dense<0.000000e+00> : vector<8x64xf32>
    %245 = tpu.matmul %244, %33, %cst_77 {dimension_numbers = #tpu.dot_dimension_numbers<[1], [0], [0], [1], [0, 0, 1, 1], [], []>} : vector<8x32xf32>, vector<32x64xf32>, vector<8x64xf32> -> vector<8x64xf32>
    %246 = arith.mulf %245, %45 : vector<8x64xf32>
    %cst_78 = arith.constant dense<0.000000e+00> : vector<8x8xf32>
    %247 = tpu.matmul %246, %52, %cst_78 {dimension_numbers = #tpu.dot_dimension_numbers<[1], [0], [0], [1], [0, 0, 1, 1], [], []>} : vector<8x64xf32>, vector<64x8xf32>, vector<8x8xf32> -> vector<8x8xf32>
    %cst_79 = arith.constant dense<0xFF800000> : vector<8xf32>
    %248 = vector.multi_reduction <maximumf>, %247, %cst_79 [1] : vector<8x8xf32> to vector<8xf32>
    %249 = vector.shape_cast %248 : vector<8xf32> to vector<8x1xf32>
    %250 = vector.broadcast %249 : vector<8x1xf32> to vector<8x8xf32>
    %251 = arith.subf %247, %250 : vector<8x8xf32>
    %252 = math.exp %251 : vector<8x8xf32>
    %cst_80 = arith.constant dense<0.000000e+00> : vector<8xf32>
    %253 = vector.multi_reduction <add>, %252, %cst_80 [1] : vector<8x8xf32> to vector<8xf32>
    %254 = vector.shape_cast %253 : vector<8xf32> to vector<8x1xf32>
    %255 = tpu.reciprocal %254 {approx = true} : vector<8x1xf32> -> vector<8x1xf32>
    %256 = arith.mulf %254, %255 : vector<8x1xf32>
    %cst_81 = arith.constant 2.000000e+00 : f32
    %257 = vector.broadcast %cst_81 : f32 to vector<8x1xf32>
    %258 = arith.subf %257, %256 : vector<8x1xf32>
    %259 = arith.mulf %255, %258 : vector<8x1xf32>
    %260 = vector.broadcast %259 : vector<8x1xf32> to vector<8x8xf32>
    %261 = arith.mulf %252, %260 : vector<8x8xf32>
    %262 = tpu.concatenate %261, %261, %261, %261, %261, %261, %261, %261 in 1 : vector<8x8xf32>, vector<8x8xf32>, vector<8x8xf32>, vector<8x8xf32>, vector<8x8xf32>, vector<8x8xf32>, vector<8x8xf32>, vector<8x8xf32> -> vector<8x64xf32>
    %263 = arith.mulf %262, %45 : vector<8x64xf32>
    %cst_82 = arith.constant dense<0.000000e+00> : vector<8x32xf32>
    %264 = tpu.matmul %263, %34, %cst_82 {dimension_numbers = #tpu.dot_dimension_numbers<[1], [0], [0], [1], [0, 0, 1, 1], [], []>} : vector<8x64xf32>, vector<64x32xf32>, vector<8x32xf32> -> vector<8x32xf32>
    %cst_83 = arith.constant dense<0.000000e+00> : vector<8x32xf32>
    %265 = tpu.matmul %244, %13, %cst_83 {dimension_numbers = #tpu.dot_dimension_numbers<[1], [0], [0], [1], [0, 0, 1, 1], [], []>} : vector<8x32xf32>, vector<32x32xf32>, vector<8x32xf32> -> vector<8x32xf32>
    %266 = arith.addf %264, %265 : vector<8x32xf32>
    %267 = math.tanh %266 : vector<8x32xf32>
    %c2 = arith.constant 2 : index
    %c0_84 = arith.constant 0 : index
    %c0_85 = arith.constant 0 : index
    %268 = vector.load %arg8[%c2, %c0_84, %c0_85] : memref<6x8x32xf32, #tpu.memory_space<vmem>>, vector<1x8x32xf32>
    %269 = vector.shape_cast %268 : vector<1x8x32xf32> to vector<8x32xf32>
    %270 = vector.shape_cast %267 : vector<8x32xf32> to vector<1x8x32xf32>
    tpu.vector_store %arg8[%c2, %c0_84, %c0_85], %270 {strides = array<i32>} : memref<6x8x32xf32, #tpu.memory_space<vmem>>, vector<1x8x32xf32>,
    %271 = vector.extract_strided_slice %60 {offsets = [24, 0], sizes = [8, 32], strides = [1, 1]} : vector<48x32xf32> to vector<8x32xf32>
    %cst_86 = arith.constant dense<0.000000e+00> : vector<8x128xf32>
    %272 = tpu.matmul %271, %0, %cst_86 {dimension_numbers = #tpu.dot_dimension_numbers<[1], [0], [0], [1], [0, 0, 1, 1], [], []>} : vector<8x32xf32>, vector<32x128xf32>, vector<8x128xf32> -> vector<8x128xf32>
    %cst_87 = arith.constant dense<0.000000e+00> : vector<8x128xf32>
    %273 = tpu.matmul %267, %1, %cst_87 {dimension_numbers = #tpu.dot_dimension_numbers<[1], [0], [0], [1], [0, 0, 1, 1], [], []>} : vector<8x32xf32>, vector<32x128xf32>, vector<8x128xf32> -> vector<8x128xf32>
    %274 = arith.addf %272, %273 : vector<8x128xf32>
    %cst_88 = arith.constant dense<0.000000e+00> : vector<8x128xf32>
    %275 = tpu.matmul %225, %2, %cst_88 {dimension_numbers = #tpu.dot_dimension_numbers<[1], [0], [0], [1], [0, 0, 1, 1], [], []>} : vector<8x32xf32>, vector<32x128xf32>, vector<8x128xf32> -> vector<8x128xf32>
    %276 = arith.addf %274, %275 : vector<8x128xf32>
    %277 = arith.addf %276, %7 : vector<8x128xf32>
    %278 = arith.negf %277 : vector<8x128xf32>
    %279 = math.exp %278 : vector<8x128xf32>
    %cst_89 = arith.constant 1.000000e+00 : f32
    %280 = vector.broadcast %cst_89 : f32 to vector<8x128xf32>
    %281 = arith.addf %280, %279 : vector<8x128xf32>
    %282 = arith.divf %280, %281 : vector<8x128xf32>
    %283 = math.tanh %277 : vector<8x128xf32>
    %284 = vector.extract_strided_slice %282 {offsets = [0, 0], sizes = [8, 32], strides = [1, 1]} : vector<8x128xf32> to vector<8x32xf32>
    %285 = vector.extract_strided_slice %282 {offsets = [0, 32], sizes = [8, 32], strides = [1, 1]} : vector<8x128xf32> to vector<8x32xf32>
    %286 = vector.extract_strided_slice %283 {offsets = [0, 64], sizes = [8, 32], strides = [1, 1]} : vector<8x128xf32> to vector<8x32xf32>
    %287 = vector.extract_strided_slice %282 {offsets = [0, 96], sizes = [8, 32], strides = [1, 1]} : vector<8x128xf32> to vector<8x32xf32>
    %288 = arith.mulf %285, %223 : vector<8x32xf32>
    %289 = arith.mulf %284, %286 : vector<8x32xf32>
    %290 = arith.addf %288, %289 : vector<8x32xf32>
    %291 = math.tanh %290 : vector<8x32xf32>
    %292 = arith.mulf %287, %291 : vector<8x32xf32>
    %cst_90 = arith.constant dense<0.000000e+00> : vector<8x128xf32>
    %293 = tpu.matmul %292, %3, %cst_90 {dimension_numbers = #tpu.dot_dimension_numbers<[1], [0], [0], [1], [0, 0, 1, 1], [], []>} : vector<8x32xf32>, vector<32x128xf32>, vector<8x128xf32> -> vector<8x128xf32>
    %cst_91 = arith.constant dense<0.000000e+00> : vector<8x128xf32>
    %294 = tpu.matmul %244, %4, %cst_91 {dimension_numbers = #tpu.dot_dimension_numbers<[1], [0], [0], [1], [0, 0, 1, 1], [], []>} : vector<8x32xf32>, vector<32x128xf32>, vector<8x128xf32> -> vector<8x128xf32>
    %295 = arith.addf %293, %294 : vector<8x128xf32>
    %296 = arith.addf %295, %10 : vector<8x128xf32>
    %297 = arith.negf %296 : vector<8x128xf32>
    %298 = math.exp %297 : vector<8x128xf32>
    %cst_92 = arith.constant 1.000000e+00 : f32
    %299 = vector.broadcast %cst_92 : f32 to vector<8x128xf32>
    %300 = arith.addf %299, %298 : vector<8x128xf32>
    %301 = arith.divf %299, %300 : vector<8x128xf32>
    %302 = math.tanh %296 : vector<8x128xf32>
    %303 = vector.extract_strided_slice %301 {offsets = [0, 0], sizes = [8, 32], strides = [1, 1]} : vector<8x128xf32> to vector<8x32xf32>
    %304 = vector.extract_strided_slice %301 {offsets = [0, 32], sizes = [8, 32], strides = [1, 1]} : vector<8x128xf32> to vector<8x32xf32>
    %305 = vector.extract_strided_slice %302 {offsets = [0, 64], sizes = [8, 32], strides = [1, 1]} : vector<8x128xf32> to vector<8x32xf32>
    %306 = vector.extract_strided_slice %301 {offsets = [0, 96], sizes = [8, 32], strides = [1, 1]} : vector<8x128xf32> to vector<8x32xf32>
    %307 = arith.mulf %304, %242 : vector<8x32xf32>
    %308 = arith.mulf %303, %305 : vector<8x32xf32>
    %309 = arith.addf %307, %308 : vector<8x32xf32>
    %310 = math.tanh %309 : vector<8x32xf32>
    %311 = arith.mulf %306, %310 : vector<8x32xf32>
    %cst_93 = arith.constant dense<0.000000e+00> : vector<8x64xf32>
    %312 = tpu.matmul %311, %33, %cst_93 {dimension_numbers = #tpu.dot_dimension_numbers<[1], [0], [0], [1], [0, 0, 1, 1], [], []>} : vector<8x32xf32>, vector<32x64xf32>, vector<8x64xf32> -> vector<8x64xf32>
    %313 = arith.mulf %312, %45 : vector<8x64xf32>
    %cst_94 = arith.constant dense<0.000000e+00> : vector<8x8xf32>
    %314 = tpu.matmul %313, %52, %cst_94 {dimension_numbers = #tpu.dot_dimension_numbers<[1], [0], [0], [1], [0, 0, 1, 1], [], []>} : vector<8x64xf32>, vector<64x8xf32>, vector<8x8xf32> -> vector<8x8xf32>
    %cst_95 = arith.constant dense<0xFF800000> : vector<8xf32>
    %315 = vector.multi_reduction <maximumf>, %314, %cst_95 [1] : vector<8x8xf32> to vector<8xf32>
    %316 = vector.shape_cast %315 : vector<8xf32> to vector<8x1xf32>
    %317 = vector.broadcast %316 : vector<8x1xf32> to vector<8x8xf32>
    %318 = arith.subf %314, %317 : vector<8x8xf32>
    %319 = math.exp %318 : vector<8x8xf32>
    %cst_96 = arith.constant dense<0.000000e+00> : vector<8xf32>
    %320 = vector.multi_reduction <add>, %319, %cst_96 [1] : vector<8x8xf32> to vector<8xf32>
    %321 = vector.shape_cast %320 : vector<8xf32> to vector<8x1xf32>
    %322 = tpu.reciprocal %321 {approx = true} : vector<8x1xf32> -> vector<8x1xf32>
    %323 = arith.mulf %321, %322 : vector<8x1xf32>
    %cst_97 = arith.constant 2.000000e+00 : f32
    %324 = vector.broadcast %cst_97 : f32 to vector<8x1xf32>
    %325 = arith.subf %324, %323 : vector<8x1xf32>
    %326 = arith.mulf %322, %325 : vector<8x1xf32>
    %327 = vector.broadcast %326 : vector<8x1xf32> to vector<8x8xf32>
    %328 = arith.mulf %319, %327 : vector<8x8xf32>
    %329 = tpu.concatenate %328, %328, %328, %328, %328, %328, %328, %328 in 1 : vector<8x8xf32>, vector<8x8xf32>, vector<8x8xf32>, vector<8x8xf32>, vector<8x8xf32>, vector<8x8xf32>, vector<8x8xf32>, vector<8x8xf32> -> vector<8x64xf32>
    %330 = arith.mulf %329, %45 : vector<8x64xf32>
    %cst_98 = arith.constant dense<0.000000e+00> : vector<8x32xf32>
    %331 = tpu.matmul %330, %34, %cst_98 {dimension_numbers = #tpu.dot_dimension_numbers<[1], [0], [0], [1], [0, 0, 1, 1], [], []>} : vector<8x64xf32>, vector<64x32xf32>, vector<8x32xf32> -> vector<8x32xf32>
    %cst_99 = arith.constant dense<0.000000e+00> : vector<8x32xf32>
    %332 = tpu.matmul %311, %13, %cst_99 {dimension_numbers = #tpu.dot_dimension_numbers<[1], [0], [0], [1], [0, 0, 1, 1], [], []>} : vector<8x32xf32>, vector<32x32xf32>, vector<8x32xf32> -> vector<8x32xf32>
    %333 = arith.addf %331, %332 : vector<8x32xf32>
    %334 = math.tanh %333 : vector<8x32xf32>
    %c3 = arith.constant 3 : index
    %c0_100 = arith.constant 0 : index
    %c0_101 = arith.constant 0 : index
    %335 = vector.load %arg8[%c3, %c0_100, %c0_101] : memref<6x8x32xf32, #tpu.memory_space<vmem>>, vector<1x8x32xf32>
    %336 = vector.shape_cast %335 : vector<1x8x32xf32> to vector<8x32xf32>
    %337 = vector.shape_cast %334 : vector<8x32xf32> to vector<1x8x32xf32>
    tpu.vector_store %arg8[%c3, %c0_100, %c0_101], %337 {strides = array<i32>} : memref<6x8x32xf32, #tpu.memory_space<vmem>>, vector<1x8x32xf32>,
    %338 = vector.extract_strided_slice %60 {offsets = [32, 0], sizes = [8, 32], strides = [1, 1]} : vector<48x32xf32> to vector<8x32xf32>
    %cst_102 = arith.constant dense<0.000000e+00> : vector<8x128xf32>
    %339 = tpu.matmul %338, %0, %cst_102 {dimension_numbers = #tpu.dot_dimension_numbers<[1], [0], [0], [1], [0, 0, 1, 1], [], []>} : vector<8x32xf32>, vector<32x128xf32>, vector<8x128xf32> -> vector<8x128xf32>
    %cst_103 = arith.constant dense<0.000000e+00> : vector<8x128xf32>
    %340 = tpu.matmul %334, %1, %cst_103 {dimension_numbers = #tpu.dot_dimension_numbers<[1], [0], [0], [1], [0, 0, 1, 1], [], []>} : vector<8x32xf32>, vector<32x128xf32>, vector<8x128xf32> -> vector<8x128xf32>
    %341 = arith.addf %339, %340 : vector<8x128xf32>
    %cst_104 = arith.constant dense<0.000000e+00> : vector<8x128xf32>
    %342 = tpu.matmul %292, %2, %cst_104 {dimension_numbers = #tpu.dot_dimension_numbers<[1], [0], [0], [1], [0, 0, 1, 1], [], []>} : vector<8x32xf32>, vector<32x128xf32>, vector<8x128xf32> -> vector<8x128xf32>
    %343 = arith.addf %341, %342 : vector<8x128xf32>
    %344 = arith.addf %343, %7 : vector<8x128xf32>
    %345 = arith.negf %344 : vector<8x128xf32>
    %346 = math.exp %345 : vector<8x128xf32>
    %cst_105 = arith.constant 1.000000e+00 : f32
    %347 = vector.broadcast %cst_105 : f32 to vector<8x128xf32>
    %348 = arith.addf %347, %346 : vector<8x128xf32>
    %349 = arith.divf %347, %348 : vector<8x128xf32>
    %350 = math.tanh %344 : vector<8x128xf32>
    %351 = vector.extract_strided_slice %349 {offsets = [0, 0], sizes = [8, 32], strides = [1, 1]} : vector<8x128xf32> to vector<8x32xf32>
    %352 = vector.extract_strided_slice %349 {offsets = [0, 32], sizes = [8, 32], strides = [1, 1]} : vector<8x128xf32> to vector<8x32xf32>
    %353 = vector.extract_strided_slice %350 {offsets = [0, 64], sizes = [8, 32], strides = [1, 1]} : vector<8x128xf32> to vector<8x32xf32>
    %354 = vector.extract_strided_slice %349 {offsets = [0, 96], sizes = [8, 32], strides = [1, 1]} : vector<8x128xf32> to vector<8x32xf32>
    %355 = arith.mulf %352, %290 : vector<8x32xf32>
    %356 = arith.mulf %351, %353 : vector<8x32xf32>
    %357 = arith.addf %355, %356 : vector<8x32xf32>
    %358 = math.tanh %357 : vector<8x32xf32>
    %359 = arith.mulf %354, %358 : vector<8x32xf32>
    %cst_106 = arith.constant dense<0.000000e+00> : vector<8x128xf32>
    %360 = tpu.matmul %359, %3, %cst_106 {dimension_numbers = #tpu.dot_dimension_numbers<[1], [0], [0], [1], [0, 0, 1, 1], [], []>} : vector<8x32xf32>, vector<32x128xf32>, vector<8x128xf32> -> vector<8x128xf32>
    %cst_107 = arith.constant dense<0.000000e+00> : vector<8x128xf32>
    %361 = tpu.matmul %311, %4, %cst_107 {dimension_numbers = #tpu.dot_dimension_numbers<[1], [0], [0], [1], [0, 0, 1, 1], [], []>} : vector<8x32xf32>, vector<32x128xf32>, vector<8x128xf32> -> vector<8x128xf32>
    %362 = arith.addf %360, %361 : vector<8x128xf32>
    %363 = arith.addf %362, %10 : vector<8x128xf32>
    %364 = arith.negf %363 : vector<8x128xf32>
    %365 = math.exp %364 : vector<8x128xf32>
    %cst_108 = arith.constant 1.000000e+00 : f32
    %366 = vector.broadcast %cst_108 : f32 to vector<8x128xf32>
    %367 = arith.addf %366, %365 : vector<8x128xf32>
    %368 = arith.divf %366, %367 : vector<8x128xf32>
    %369 = math.tanh %363 : vector<8x128xf32>
    %370 = vector.extract_strided_slice %368 {offsets = [0, 0], sizes = [8, 32], strides = [1, 1]} : vector<8x128xf32> to vector<8x32xf32>
    %371 = vector.extract_strided_slice %368 {offsets = [0, 32], sizes = [8, 32], strides = [1, 1]} : vector<8x128xf32> to vector<8x32xf32>
    %372 = vector.extract_strided_slice %369 {offsets = [0, 64], sizes = [8, 32], strides = [1, 1]} : vector<8x128xf32> to vector<8x32xf32>
    %373 = vector.extract_strided_slice %368 {offsets = [0, 96], sizes = [8, 32], strides = [1, 1]} : vector<8x128xf32> to vector<8x32xf32>
    %374 = arith.mulf %371, %309 : vector<8x32xf32>
    %375 = arith.mulf %370, %372 : vector<8x32xf32>
    %376 = arith.addf %374, %375 : vector<8x32xf32>
    %377 = math.tanh %376 : vector<8x32xf32>
    %378 = arith.mulf %373, %377 : vector<8x32xf32>
    %cst_109 = arith.constant dense<0.000000e+00> : vector<8x64xf32>
    %379 = tpu.matmul %378, %33, %cst_109 {dimension_numbers = #tpu.dot_dimension_numbers<[1], [0], [0], [1], [0, 0, 1, 1], [], []>} : vector<8x32xf32>, vector<32x64xf32>, vector<8x64xf32> -> vector<8x64xf32>
    %380 = arith.mulf %379, %45 : vector<8x64xf32>
    %cst_110 = arith.constant dense<0.000000e+00> : vector<8x8xf32>
    %381 = tpu.matmul %380, %52, %cst_110 {dimension_numbers = #tpu.dot_dimension_numbers<[1], [0], [0], [1], [0, 0, 1, 1], [], []>} : vector<8x64xf32>, vector<64x8xf32>, vector<8x8xf32> -> vector<8x8xf32>
    %cst_111 = arith.constant dense<0xFF800000> : vector<8xf32>
    %382 = vector.multi_reduction <maximumf>, %381, %cst_111 [1] : vector<8x8xf32> to vector<8xf32>
    %383 = vector.shape_cast %382 : vector<8xf32> to vector<8x1xf32>
    %384 = vector.broadcast %383 : vector<8x1xf32> to vector<8x8xf32>
    %385 = arith.subf %381, %384 : vector<8x8xf32>
    %386 = math.exp %385 : vector<8x8xf32>
    %cst_112 = arith.constant dense<0.000000e+00> : vector<8xf32>
    %387 = vector.multi_reduction <add>, %386, %cst_112 [1] : vector<8x8xf32> to vector<8xf32>
    %388 = vector.shape_cast %387 : vector<8xf32> to vector<8x1xf32>
    %389 = tpu.reciprocal %388 {approx = true} : vector<8x1xf32> -> vector<8x1xf32>
    %390 = arith.mulf %388, %389 : vector<8x1xf32>
    %cst_113 = arith.constant 2.000000e+00 : f32
    %391 = vector.broadcast %cst_113 : f32 to vector<8x1xf32>
    %392 = arith.subf %391, %390 : vector<8x1xf32>
    %393 = arith.mulf %389, %392 : vector<8x1xf32>
    %394 = vector.broadcast %393 : vector<8x1xf32> to vector<8x8xf32>
    %395 = arith.mulf %386, %394 : vector<8x8xf32>
    %396 = tpu.concatenate %395, %395, %395, %395, %395, %395, %395, %395 in 1 : vector<8x8xf32>, vector<8x8xf32>, vector<8x8xf32>, vector<8x8xf32>, vector<8x8xf32>, vector<8x8xf32>, vector<8x8xf32>, vector<8x8xf32> -> vector<8x64xf32>
    %397 = arith.mulf %396, %45 : vector<8x64xf32>
    %cst_114 = arith.constant dense<0.000000e+00> : vector<8x32xf32>
    %398 = tpu.matmul %397, %34, %cst_114 {dimension_numbers = #tpu.dot_dimension_numbers<[1], [0], [0], [1], [0, 0, 1, 1], [], []>} : vector<8x64xf32>, vector<64x32xf32>, vector<8x32xf32> -> vector<8x32xf32>
    %cst_115 = arith.constant dense<0.000000e+00> : vector<8x32xf32>
    %399 = tpu.matmul %378, %13, %cst_115 {dimension_numbers = #tpu.dot_dimension_numbers<[1], [0], [0], [1], [0, 0, 1, 1], [], []>} : vector<8x32xf32>, vector<32x32xf32>, vector<8x32xf32> -> vector<8x32xf32>
    %400 = arith.addf %398, %399 : vector<8x32xf32>
    %401 = math.tanh %400 : vector<8x32xf32>
    %c4 = arith.constant 4 : index
    %c0_116 = arith.constant 0 : index
    %c0_117 = arith.constant 0 : index
    %402 = vector.load %arg8[%c4, %c0_116, %c0_117] : memref<6x8x32xf32, #tpu.memory_space<vmem>>, vector<1x8x32xf32>
    %403 = vector.shape_cast %402 : vector<1x8x32xf32> to vector<8x32xf32>
    %404 = vector.shape_cast %401 : vector<8x32xf32> to vector<1x8x32xf32>
    tpu.vector_store %arg8[%c4, %c0_116, %c0_117], %404 {strides = array<i32>} : memref<6x8x32xf32, #tpu.memory_space<vmem>>, vector<1x8x32xf32>,
    %405 = vector.extract_strided_slice %60 {offsets = [40, 0], sizes = [8, 32], strides = [1, 1]} : vector<48x32xf32> to vector<8x32xf32>
    %cst_118 = arith.constant dense<0.000000e+00> : vector<8x128xf32>
    %406 = tpu.matmul %405, %0, %cst_118 {dimension_numbers = #tpu.dot_dimension_numbers<[1], [0], [0], [1], [0, 0, 1, 1], [], []>} : vector<8x32xf32>, vector<32x128xf32>, vector<8x128xf32> -> vector<8x128xf32>
    %cst_119 = arith.constant dense<0.000000e+00> : vector<8x128xf32>
    %407 = tpu.matmul %401, %1, %cst_119 {dimension_numbers = #tpu.dot_dimension_numbers<[1], [0], [0], [1], [0, 0, 1, 1], [], []>} : vector<8x32xf32>, vector<32x128xf32>, vector<8x128xf32> -> vector<8x128xf32>
    %408 = arith.addf %406, %407 : vector<8x128xf32>
    %cst_120 = arith.constant dense<0.000000e+00> : vector<8x128xf32>
    %409 = tpu.matmul %359, %2, %cst_120 {dimension_numbers = #tpu.dot_dimension_numbers<[1], [0], [0], [1], [0, 0, 1, 1], [], []>} : vector<8x32xf32>, vector<32x128xf32>, vector<8x128xf32> -> vector<8x128xf32>
    %410 = arith.addf %408, %409 : vector<8x128xf32>
    %411 = arith.addf %410, %7 : vector<8x128xf32>
    %412 = arith.negf %411 : vector<8x128xf32>
    %413 = math.exp %412 : vector<8x128xf32>
    %cst_121 = arith.constant 1.000000e+00 : f32
    %414 = vector.broadcast %cst_121 : f32 to vector<8x128xf32>
    %415 = arith.addf %414, %413 : vector<8x128xf32>
    %416 = arith.divf %414, %415 : vector<8x128xf32>
    %417 = math.tanh %411 : vector<8x128xf32>
    %418 = vector.extract_strided_slice %416 {offsets = [0, 0], sizes = [8, 32], strides = [1, 1]} : vector<8x128xf32> to vector<8x32xf32>
    %419 = vector.extract_strided_slice %416 {offsets = [0, 32], sizes = [8, 32], strides = [1, 1]} : vector<8x128xf32> to vector<8x32xf32>
    %420 = vector.extract_strided_slice %417 {offsets = [0, 64], sizes = [8, 32], strides = [1, 1]} : vector<8x128xf32> to vector<8x32xf32>
    %421 = vector.extract_strided_slice %416 {offsets = [0, 96], sizes = [8, 32], strides = [1, 1]} : vector<8x128xf32> to vector<8x32xf32>
    %422 = arith.mulf %419, %357 : vector<8x32xf32>
    %423 = arith.mulf %418, %420 : vector<8x32xf32>
    %424 = arith.addf %422, %423 : vector<8x32xf32>
    %425 = math.tanh %424 : vector<8x32xf32>
    %426 = arith.mulf %421, %425 : vector<8x32xf32>
    %cst_122 = arith.constant dense<0.000000e+00> : vector<8x128xf32>
    %427 = tpu.matmul %426, %3, %cst_122 {dimension_numbers = #tpu.dot_dimension_numbers<[1], [0], [0], [1], [0, 0, 1, 1], [], []>} : vector<8x32xf32>, vector<32x128xf32>, vector<8x128xf32> -> vector<8x128xf32>
    %cst_123 = arith.constant dense<0.000000e+00> : vector<8x128xf32>
    %428 = tpu.matmul %378, %4, %cst_123 {dimension_numbers = #tpu.dot_dimension_numbers<[1], [0], [0], [1], [0, 0, 1, 1], [], []>} : vector<8x32xf32>, vector<32x128xf32>, vector<8x128xf32> -> vector<8x128xf32>
    %429 = arith.addf %427, %428 : vector<8x128xf32>
    %430 = arith.addf %429, %10 : vector<8x128xf32>
    %431 = arith.negf %430 : vector<8x128xf32>
    %432 = math.exp %431 : vector<8x128xf32>
    %cst_124 = arith.constant 1.000000e+00 : f32
    %433 = vector.broadcast %cst_124 : f32 to vector<8x128xf32>
    %434 = arith.addf %433, %432 : vector<8x128xf32>
    %435 = arith.divf %433, %434 : vector<8x128xf32>
    %436 = math.tanh %430 : vector<8x128xf32>
    %437 = vector.extract_strided_slice %435 {offsets = [0, 0], sizes = [8, 32], strides = [1, 1]} : vector<8x128xf32> to vector<8x32xf32>
    %438 = vector.extract_strided_slice %435 {offsets = [0, 32], sizes = [8, 32], strides = [1, 1]} : vector<8x128xf32> to vector<8x32xf32>
    %439 = vector.extract_strided_slice %436 {offsets = [0, 64], sizes = [8, 32], strides = [1, 1]} : vector<8x128xf32> to vector<8x32xf32>
    %440 = vector.extract_strided_slice %435 {offsets = [0, 96], sizes = [8, 32], strides = [1, 1]} : vector<8x128xf32> to vector<8x32xf32>
    %441 = arith.mulf %438, %376 : vector<8x32xf32>
    %442 = arith.mulf %437, %439 : vector<8x32xf32>
    %443 = arith.addf %441, %442 : vector<8x32xf32>
    %444 = math.tanh %443 : vector<8x32xf32>
    %445 = arith.mulf %440, %444 : vector<8x32xf32>
    %cst_125 = arith.constant dense<0.000000e+00> : vector<8x64xf32>
    %446 = tpu.matmul %445, %33, %cst_125 {dimension_numbers = #tpu.dot_dimension_numbers<[1], [0], [0], [1], [0, 0, 1, 1], [], []>} : vector<8x32xf32>, vector<32x64xf32>, vector<8x64xf32> -> vector<8x64xf32>
    %447 = arith.mulf %446, %45 : vector<8x64xf32>
    %cst_126 = arith.constant dense<0.000000e+00> : vector<8x8xf32>
    %448 = tpu.matmul %447, %52, %cst_126 {dimension_numbers = #tpu.dot_dimension_numbers<[1], [0], [0], [1], [0, 0, 1, 1], [], []>} : vector<8x64xf32>, vector<64x8xf32>, vector<8x8xf32> -> vector<8x8xf32>
    %cst_127 = arith.constant dense<0xFF800000> : vector<8xf32>
    %449 = vector.multi_reduction <maximumf>, %448, %cst_127 [1] : vector<8x8xf32> to vector<8xf32>
    %450 = vector.shape_cast %449 : vector<8xf32> to vector<8x1xf32>
    %451 = vector.broadcast %450 : vector<8x1xf32> to vector<8x8xf32>
    %452 = arith.subf %448, %451 : vector<8x8xf32>
    %453 = math.exp %452 : vector<8x8xf32>
    %cst_128 = arith.constant dense<0.000000e+00> : vector<8xf32>
    %454 = vector.multi_reduction <add>, %453, %cst_128 [1] : vector<8x8xf32> to vector<8xf32>
    %455 = vector.shape_cast %454 : vector<8xf32> to vector<8x1xf32>
    %456 = tpu.reciprocal %455 {approx = true} : vector<8x1xf32> -> vector<8x1xf32>
    %457 = arith.mulf %455, %456 : vector<8x1xf32>
    %cst_129 = arith.constant 2.000000e+00 : f32
    %458 = vector.broadcast %cst_129 : f32 to vector<8x1xf32>
    %459 = arith.subf %458, %457 : vector<8x1xf32>
    %460 = arith.mulf %456, %459 : vector<8x1xf32>
    %461 = vector.broadcast %460 : vector<8x1xf32> to vector<8x8xf32>
    %462 = arith.mulf %453, %461 : vector<8x8xf32>
    %463 = tpu.concatenate %462, %462, %462, %462, %462, %462, %462, %462 in 1 : vector<8x8xf32>, vector<8x8xf32>, vector<8x8xf32>, vector<8x8xf32>, vector<8x8xf32>, vector<8x8xf32>, vector<8x8xf32>, vector<8x8xf32> -> vector<8x64xf32>
    %464 = arith.mulf %463, %45 : vector<8x64xf32>
    %cst_130 = arith.constant dense<0.000000e+00> : vector<8x32xf32>
    %465 = tpu.matmul %464, %34, %cst_130 {dimension_numbers = #tpu.dot_dimension_numbers<[1], [0], [0], [1], [0, 0, 1, 1], [], []>} : vector<8x64xf32>, vector<64x32xf32>, vector<8x32xf32> -> vector<8x32xf32>
    %cst_131 = arith.constant dense<0.000000e+00> : vector<8x32xf32>
    %466 = tpu.matmul %445, %13, %cst_131 {dimension_numbers = #tpu.dot_dimension_numbers<[1], [0], [0], [1], [0, 0, 1, 1], [], []>} : vector<8x32xf32>, vector<32x32xf32>, vector<8x32xf32> -> vector<8x32xf32>
    %467 = arith.addf %465, %466 : vector<8x32xf32>
    %468 = math.tanh %467 : vector<8x32xf32>
    %c5 = arith.constant 5 : index
    %c0_132 = arith.constant 0 : index
    %c0_133 = arith.constant 0 : index
    %469 = vector.load %arg8[%c5, %c0_132, %c0_133] : memref<6x8x32xf32, #tpu.memory_space<vmem>>, vector<1x8x32xf32>
    %470 = vector.shape_cast %469 : vector<1x8x32xf32> to vector<8x32xf32>
    %471 = vector.shape_cast %468 : vector<8x32xf32> to vector<1x8x32xf32>
    tpu.vector_store %arg8[%c5, %c0_132, %c0_133], %471 {strides = array<i32>} : memref<6x8x32xf32, #tpu.memory_space<vmem>>, vector<1x8x32xf32>,
    %c0_134 = arith.constant 0 : index
    %c0_135 = arith.constant 0 : index
    %c0_136 = arith.constant 0 : index
    %472 = vector.load %arg9[%c0_134, %c0_135, %c0_136] : memref<2x8x32xf32, #tpu.memory_space<vmem>>, vector<1x8x32xf32>
    %473 = vector.shape_cast %472 : vector<1x8x32xf32> to vector<8x32xf32>
    %474 = vector.shape_cast %426 : vector<8x32xf32> to vector<1x8x32xf32>
    tpu.vector_store %arg9[%c0_134, %c0_135, %c0_136], %474 {strides = array<i32>} : memref<2x8x32xf32, #tpu.memory_space<vmem>>, vector<1x8x32xf32>,
    %c0_137 = arith.constant 0 : index
    %c0_138 = arith.constant 0 : index
    %c0_139 = arith.constant 0 : index
    %475 = vector.load %arg10[%c0_137, %c0_138, %c0_139] : memref<2x8x32xf32, #tpu.memory_space<vmem>>, vector<1x8x32xf32>
    %476 = vector.shape_cast %475 : vector<1x8x32xf32> to vector<8x32xf32>
    %477 = vector.shape_cast %424 : vector<8x32xf32> to vector<1x8x32xf32>
    tpu.vector_store %arg10[%c0_137, %c0_138, %c0_139], %477 {strides = array<i32>} : memref<2x8x32xf32, #tpu.memory_space<vmem>>, vector<1x8x32xf32>,
    %c1_140 = arith.constant 1 : index
    %c0_141 = arith.constant 0 : index
    %c0_142 = arith.constant 0 : index
    %478 = vector.load %arg9[%c1_140, %c0_141, %c0_142] : memref<2x8x32xf32, #tpu.memory_space<vmem>>, vector<1x8x32xf32>
    %479 = vector.shape_cast %478 : vector<1x8x32xf32> to vector<8x32xf32>
    %480 = vector.shape_cast %445 : vector<8x32xf32> to vector<1x8x32xf32>
    tpu.vector_store %arg9[%c1_140, %c0_141, %c0_142], %480 {strides = array<i32>} : memref<2x8x32xf32, #tpu.memory_space<vmem>>, vector<1x8x32xf32>,
    %c1_143 = arith.constant 1 : index
    %c0_144 = arith.constant 0 : index
    %c0_145 = arith.constant 0 : index
    %481 = vector.load %arg10[%c1_143, %c0_144, %c0_145] : memref<2x8x32xf32, #tpu.memory_space<vmem>>, vector<1x8x32xf32>
    %482 = vector.shape_cast %481 : vector<1x8x32xf32> to vector<8x32xf32>
    %483 = vector.shape_cast %443 : vector<8x32xf32> to vector<1x8x32xf32>
    tpu.vector_store %arg10[%c1_143, %c0_144, %c0_145], %483 {strides = array<i32>} : memref<2x8x32xf32, #tpu.memory_space<vmem>>, vector<1x8x32xf32>,
    %c0_146 = arith.constant 0 : index
    %c0_147 = arith.constant 0 : index
    %484 = vector.load %arg11[%c0_146, %c0_147] : memref<8x8xf32, #tpu.memory_space<vmem>>, vector<8x8xf32>
    tpu.vector_store %arg11[%c0_146, %c0_147], %462 {strides = array<i32>} : memref<8x8xf32, #tpu.memory_space<vmem>>, vector<8x8xf32>,
    return
  }
}

</mosaic_0001>

<llo_original>
// kernel: tpu_custom_call.1
$region0: #{tpu_custom_call.1}
  #allocation0 [shape = 'u32[]', space=smem, size = 0x4, offset = 0x4, fixed_abs, tag = 'smem constant byte address 0x4 - core index']
  #allocation1 [shape = 'u32[144,128]{1,0:T(1,128)}', space=vmem, size = 0x12000, scoped, tag = 'internal scratch']
  %s0 = inlined_call_operand.vmem [shape: s32[48,1], index: 0, kind: input, shape index: {}]
  %s1 = inlined_call_operand.vmem [shape: f32[2,8,32], index: 1, kind: input, shape index: {}]
  %s2 = inlined_call_operand.hbm [shape: f32[2,8,32], index: 2, kind: input, shape index: {}]
  %s3 = inlined_call_operand.hbm [shape: f32[8,32], index: 3, kind: input, shape index: {}]
  %s4 = inlined_call_operand.hbm [shape: f32[8,8,32], index: 4, kind: input, shape index: {}]
  %s5 = inlined_call_operand.hbm [shape: f32[16,32], index: 5, kind: input, shape index: {}]
  %s6 = inlined_call_operand.vmem [shape: f32[162,128], index: 6, kind: input, shape index: {}]
  %s7 = inlined_call_operand.vmem [shape: f32[96,32], index: 7, kind: input, shape index: {}]
  %s8 = inlined_call_operand.hbm [shape: f32[6,8,32], index: 8, kind: output, shape index: {0}]
  %s9 = inlined_call_operand.hbm [shape: f32[2,8,32], index: 9, kind: output, shape index: {1}]
  %s10 = inlined_call_operand.hbm [shape: f32[2,8,32], index: 10, kind: output, shape index: {2}]
  %s11 = inlined_call_operand.hbm [shape: f32[8,8], index: 11, kind: output, shape index: {3}]
  %12 = xla_tuple %s8, %s9, %s10, %s11
  %s13 = sld [smem:[#allocation0]]
  $region82: #{tpu_custom_call.1} parent=0
    _
  %s15 = ssub.s32 1, %s13
  %s16 = scalar_select 0, %s15, %s13
  $region1: #{tpu_custom_call.1} parent=0
    #allocation2 [shape = 'u8[8192]{0}', space=vmem, size = 0x2000, scoped, tag = 'input window, operand 2, single buffered']
    #allocation3 [shape = 's32[1]{0}', space=sflag, size = 0x4, scoped, tag = 'scoped memory for tpu_custom_call.1']
    #allocation4 [shape = 's32[1]{0}', space=sflag, size = 0x4, scoped, tag = 'scoped memory for tpu_custom_call.1']
    #allocation5 [shape = 'u8[4096]{0}', space=vmem, size = 0x1000, scoped, tag = 'input window, operand 3, single buffered']
    #allocation6 [shape = 's32[1]{0}', space=sflag, size = 0x4, scoped, tag = 'scoped memory for tpu_custom_call.1']
    #allocation7 [shape = 'u8[32768]{0}', space=vmem, size = 0x8000, scoped, tag = 'input window, operand 4, single buffered']
    #allocation8 [shape = 'u8[8192]{0}', space=vmem, size = 0x2000, scoped, tag = 'input window, operand 5, single buffered']
    #allocation9 [shape = 's32[1]{0}', space=sflag, size = 0x4, scoped, tag = 'scoped memory for tpu_custom_call.1']
    #allocation10 [shape = 'u8[24576]{0}', space=vmem, size = 0x6000, scoped, tag = 'output window, operand 0, single buffered']
    #allocation11 [shape = 'u8[8192]{0}', space=vmem, size = 0x2000, scoped, tag = 'output window, operand 1, single buffered']
    #allocation12 [shape = 's32[1]{0}', space=sflag, size = 0x4, scoped, tag = 'scoped memory for tpu_custom_call.1']
    #allocation13 [shape = 'u8[8192]{0}', space=vmem, size = 0x2000, scoped, tag = 'output window, operand 2, single buffered']
    #allocation14 [shape = 'u8[4096]{0}', space=vmem, size = 0x1000, scoped, tag = 'output window, operand 3, single buffered']
    #allocation15 [shape = 's32[1]{0}', space=sflag, size = 0x4, scoped, tag = 'scoped memory for tpu_custom_call.1']
    %17 = vsyncpa [#allocation3], 0
    %18 = vsyncpa [#allocation6], 0
    %19 = vsyncpa [#allocation9], 0
    %20 = vsyncpa [#allocation4], 0
    %21 = vsyncpa [#allocation12], 0
    %22 = vsyncpa [#allocation15], 0
    // Predicated region
    $region2: #{tpu_custom_call.1} parent=1 // pred_check
      _
    $region3: #{tpu_custom_call.1} parent=1 // pred_check_branch
      %24 = sbr.rel (0) target = $region5
    $region4: #{tpu_custom_call.1} parent=1 // pred_region
      _
    $region5: #{tpu_custom_call.1} parent=1 // pred_fallthru
      _
    // Predicated region
    $region6: #{tpu_custom_call.1} parent=1 // pred_check
      _
    $region7: #{tpu_custom_call.1} parent=1 // pred_check_branch
      %26 = sbr.rel (0) target = $region9
    $region8: #{tpu_custom_call.1} parent=1 // pred_region
      _
    $region9: #{tpu_custom_call.1} parent=1 // pred_fallthru
      _
    // Predicated region
    $region10: #{tpu_custom_call.1} parent=1 // pred_check
      _
    $region11: #{tpu_custom_call.1} parent=1 // pred_check_branch
      %28 = sbr.rel (0) target = $region13
    $region12: #{tpu_custom_call.1} parent=1 // pred_region
      %s30 = ssub.s32 256, 256
      %31 = vsyncadd [#allocation3], %s30
      %s32 = sshll.u32 [#allocation2], 4
      %s33 = int_to_ptr.vmem [resolvable:$true] %s32
      %38 = dma.hbm_to_vmem [thread:$0]  %s2, 256, %s33, [#allocation3], 128, 128, 8
    $region13: #{tpu_custom_call.1} parent=1 // pred_fallthru
      _
    // Predicated region
    $region14: #{tpu_custom_call.1} parent=1 // pred_check
      _
    $region15: #{tpu_custom_call.1} parent=1 // pred_check_branch
      %40 = sbr.rel (0) target = $region17
    $region16: #{tpu_custom_call.1} parent=1 // pred_region
      %s42 = ssub.s32 128, 128
      %43 = vsyncadd [#allocation6], %s42
      %s45 = sshll.u32 [#allocation5], 4
      %s46 = int_to_ptr.vmem [resolvable:$true] %s45
      %48 = dma.hbm_to_vmem [thread:$0]  %s3, 128, %s46, [#allocation6]
    $region17: #{tpu_custom_call.1} parent=1 // pred_fallthru
      _
    // Predicated region
    $region18: #{tpu_custom_call.1} parent=1 // pred_check
      _
    $region19: #{tpu_custom_call.1} parent=1 // pred_check_branch
      %50 = sbr.rel (0) target = $region21
    $region20: #{tpu_custom_call.1} parent=1 // pred_region
      %s52 = ssub.s32 1024, 1024
      %53 = vsyncadd [#allocation6], %s52
      %s54 = sshll.u32 [#allocation7], 4
      %s55 = int_to_ptr.vmem [resolvable:$true] %s54
      %60 = dma.hbm_to_vmem [thread:$0]  %s4, 1024, %s55, [#allocation6], 128, 128, 8
    $region21: #{tpu_custom_call.1} parent=1 // pred_fallthru
      _
    // Predicated region
    $region22: #{tpu_custom_call.1} parent=1 // pred_check
      _
    $region23: #{tpu_custom_call.1} parent=1 // pred_check_branch
      %62 = sbr.rel (0) target = $region25
    $region24: #{tpu_custom_call.1} parent=1 // pred_region
      %s64 = ssub.s32 256, 256
      %65 = vsyncadd [#allocation9], %s64
      %s66 = sshll.u32 [#allocation8], 4
      %s67 = int_to_ptr.vmem [resolvable:$true] %s66
      %72 = dma.hbm_to_vmem [thread:$0]  %s5, 256, %s67, [#allocation9], 128, 128, 8
    $region25: #{tpu_custom_call.1} parent=1 // pred_fallthru
      _
    // Predicated region
    $region26: #{tpu_custom_call.1} parent=1 // pred_check
      _
    $region27: #{tpu_custom_call.1} parent=1 // pred_check_branch
      %74 = sbr.rel (0) target = $region29
    $region28: #{tpu_custom_call.1} parent=1 // pred_region
      _
    $region29: #{tpu_custom_call.1} parent=1 // pred_fallthru
      _
    // Predicated region
    $region30: #{tpu_custom_call.1} parent=1 // pred_check
      _
    $region31: #{tpu_custom_call.1} parent=1 // pred_check_branch
      %76 = sbr.rel (0) target = $region33
    $region32: #{tpu_custom_call.1} parent=1 // pred_region
      _
    $region33: #{tpu_custom_call.1} parent=1 // pred_fallthru
      _
    // Predicated region
    $region34: #{tpu_custom_call.1} parent=1 // pred_check
      _
    $region35: #{tpu_custom_call.1} parent=1 // pred_check_branch
      %78 = sbr.rel (0) target = $region37
    $region36: #{tpu_custom_call.1} parent=1 // pred_region
      %79 = dma.done [#allocation3], 256
    $region37: #{tpu_custom_call.1} parent=1 // pred_fallthru
      _
    // Predicated region
    $region38: #{tpu_custom_call.1} parent=1 // pred_check
      _
    $region39: #{tpu_custom_call.1} parent=1 // pred_check_branch
      %81 = sbr.rel (0) target = $region41
    $region40: #{tpu_custom_call.1} parent=1 // pred_region
      %82 = dma.done [#allocation6], 128
    $region41: #{tpu_custom_call.1} parent=1 // pred_fallthru
      _
    // Predicated region
    $region42: #{tpu_custom_call.1} parent=1 // pred_check
      _
    $region43: #{tpu_custom_call.1} parent=1 // pred_check_branch
      %84 = sbr.rel (0) target = $region45
    $region44: #{tpu_custom_call.1} parent=1 // pred_region
      %85 = dma.done [#allocation6], 1024
    $region45: #{tpu_custom_call.1} parent=1 // pred_fallthru
      _
    // Predicated region
    $region46: #{tpu_custom_call.1} parent=1 // pred_check
      _
    $region47: #{tpu_custom_call.1} parent=1 // pred_check_branch
      %87 = sbr.rel (0) target = $region49
    $region48: #{tpu_custom_call.1} parent=1 // pred_region
      %88 = dma.done [#allocation9], 256
    $region49: #{tpu_custom_call.1} parent=1 // pred_fallthru
      _
    %v89 = vld [vmem:[%s6] sm:$0xff]
    %v90 = vld [vmem:[%s6 + $0x8] sm:$0xff]
    %v91 = vld [vmem:[%s6 + $0x10] sm:$0xff]
    %v92 = vld [vmem:[%s6 + $0x18] sm:$0xff]
    %v93 = vld [vmem:[%s6 + $0x20] sm:$0xff]
    %v94 = vld [vmem:[%s6 + $0x28] sm:$0xff]
    %v95 = vld [vmem:[%s6 + $0x30] sm:$0xff]
    %v96 = vld [vmem:[%s6 + $0x38] sm:$0xff]
    %v97 = vld [vmem:[%s6 + $0x40] sm:$0xff]
    %v98 = vld [vmem:[%s6 + $0x48] sm:$0xff]
    %v99 = vld [vmem:[%s6 + $0x50] sm:$0xff]
    %v100 = vld [vmem:[%s6 + $0x58] sm:$0xff]
    %v101 = vld [vmem:[%s6 + $0x60] sm:$0xff]
    %v102 = vld [vmem:[%s6 + $0x68] sm:$0xff]
    %v103 = vld [vmem:[%s6 + $0x70] sm:$0xff]
    %v104 = vld [vmem:[%s6 + $0x78] sm:$0xff]
    %v105 = vld [vmem:[%s6 + $0x80] sm:$0xff]
    %v106 = vld [vmem:[%s6 + $0x88] sm:$0xff]
    %v107 = vld [vmem:[%s6 + $0x90] sm:$0xff]
    %v108 = vld [vmem:[%s6 + $0x98] sm:$0xff]
    %v109 = vld [vmem:[%s6 + $0xa0] sm:$0x1]
    %v110 = vlaneseq
    %v111 = vshrl.u32 %v110, 7
    %v112 = vsub.s32 0, %v111
    %v113 = vrot.slane %v109, %v112
    %v114 = vld [vmem:[%s6 + $0xa1] sm:$0x1]
    %v115 = vlaneseq
    %v116 = vshrl.u32 %v115, 7
    %v117 = vsub.s32 0, %v116
    %v118 = vrot.slane %v114, %v117
    %v119 = vld [vmem:[%s7] sm:$0xff]
    %v120 = vld [vmem:[%s7 + $0x8] sm:$0xff]
    %v121 = vld [vmem:[%s7 + $0x10] sm:$0xff]
    %v122 = vld [vmem:[%s7 + $0x18] sm:$0xff]
    %v123 = vld [vmem:[%s7 + $0x20] sm:$0xff]
    %v124 = vld [vmem:[%s7 + $0x28] sm:$0xff]
    %v125 = vld [vmem:[%s7 + $0x30] sm:$0xff]
    %v126 = vld [vmem:[%s7 + $0x38] sm:$0xff]
    %v127 = vld [vmem:[%s7 + $0x40] sm:$0xff]
    %v128 = vld [vmem:[%s7 + $0x48] sm:$0xff]
    %v129 = vld [vmem:[%s7 + $0x50] sm:$0xff]
    %v130 = vld [vmem:[%s7 + $0x58] sm:$0xff]
    %v131 = vld [vmem:[#allocation7] sm:$0xff]
    %v132 = vld [vmem:[#allocation7 + $0x8] sm:$0xff]
    %v133 = vld [vmem:[#allocation7 + $0x10] sm:$0xff]
    %v134 = vld [vmem:[#allocation7 + $0x18] sm:$0xff]
    %v135 = vld [vmem:[#allocation7 + $0x20] sm:$0xff]
    %v136 = vld [vmem:[#allocation7 + $0x28] sm:$0xff]
    %v137 = vld [vmem:[#allocation7 + $0x30] sm:$0xff]
    %v138 = vld [vmem:[#allocation7 + $0x38] sm:$0xff]
    %v147 = vrot.slane %v132, 7
    %vm148 = vcmask 1041409
    %v149 = vsel %vm148, %v147, %v131
    %v150 = vrot.slane %v133, 6
    %vm151 = vcmask 1042434
    %v152 = vsel %vm151, %v150, %v149
    %v153 = vrot.slane %v134, 5
    %vm154 = vcmask 1043459
    %v155 = vsel %vm154, %v153, %v152
    %v156 = vrot.slane %v135, 4
    %vm157 = vcmask 1044484
    %v158 = vsel %vm157, %v156, %v155
    %v159 = vrot.slane %v136, 3
    %vm160 = vcmask 1045509
    %v161 = vsel %vm160, %v159, %v158
    %v162 = vrot.slane %v137, 2
    %vm163 = vcmask 1046534
    %v164 = vsel %vm163, %v162, %v161
    %v165 = vrot.slane %v138, 1
    %vm166 = vcmask 1047559
    %v167 = vsel %vm166, %v165, %v164
    %v168 = vrot.slane %v131, 1
    %v169 = vsel %vm148, %v132, %v168
    %v170 = vrot.slane %v133, 7
    %v171 = vsel %vm151, %v170, %v169
    %v172 = vrot.slane %v134, 6
    %v173 = vsel %vm154, %v172, %v171
    %v174 = vrot.slane %v135, 5
    %v175 = vsel %vm157, %v174, %v173
    %v176 = vrot.slane %v136, 4
    %v177 = vsel %vm160, %v176, %v175
    %v178 = vrot.slane %v137, 3
    %v179 = vsel %vm163, %v178, %v177
    %v180 = vrot.slane %v138, 2
    %v181 = vsel %vm166, %v180, %v179
    %v182 = vrot.slane %v131, 2
    %v183 = vrot.slane %v132, 1
    %v184 = vsel %vm148, %v183, %v182
    %v185 = vsel %vm151, %v133, %v184
    %v186 = vrot.slane %v134, 7
    %v187 = vsel %vm154, %v186, %v185
    %v188 = vrot.slane %v135, 6
    %v189 = vsel %vm157, %v188, %v187
    %v190 = vrot.slane %v136, 5
    %v191 = vsel %vm160, %v190, %v189
    %v192 = vrot.slane %v137, 4
    %v193 = vsel %vm163, %v192, %v191
    %v194 = vrot.slane %v138, 3
    %v195 = vsel %vm166, %v194, %v193
    %v196 = vrot.slane %v131, 3
    %v197 = vrot.slane %v132, 2
    %v198 = vsel %vm148, %v197, %v196
    %v199 = vrot.slane %v133, 1
    %v200 = vsel %vm151, %v199, %v198
    %v201 = vsel %vm154, %v134, %v200
    %v202 = vrot.slane %v135, 7
    %v203 = vsel %vm157, %v202, %v201
    %v204 = vrot.slane %v136, 6
    %v205 = vsel %vm160, %v204, %v203
    %v206 = vrot.slane %v137, 5
    %v207 = vsel %vm163, %v206, %v205
    %v208 = vrot.slane %v138, 4
    %v209 = vsel %vm166, %v208, %v207
    %v210 = vrot.slane %v131, 4
    %v211 = vrot.slane %v132, 3
    %v212 = vsel %vm148, %v211, %v210
    %v213 = vrot.slane %v133, 2
    %v214 = vsel %vm151, %v213, %v212
    %v215 = vrot.slane %v134, 1
    %v216 = vsel %vm154, %v215, %v214
    %v217 = vsel %vm157, %v135, %v216
    %v218 = vrot.slane %v136, 7
    %v219 = vsel %vm160, %v218, %v217
    %v220 = vrot.slane %v137, 6
    %v221 = vsel %vm163, %v220, %v219
    %v222 = vrot.slane %v138, 5
    %v223 = vsel %vm166, %v222, %v221
    %v224 = vrot.slane %v131, 5
    %v225 = vrot.slane %v132, 4
    %v226 = vsel %vm148, %v225, %v224
    %v227 = vrot.slane %v133, 3
    %v228 = vsel %vm151, %v227, %v226
    %v229 = vrot.slane %v134, 2
    %v230 = vsel %vm154, %v229, %v228
    %v231 = vrot.slane %v135, 1
    %v232 = vsel %vm157, %v231, %v230
    %v233 = vsel %vm160, %v136, %v232
    %v234 = vrot.slane %v137, 7
    %v235 = vsel %vm163, %v234, %v233
    %v236 = vrot.slane %v138, 6
    %v237 = vsel %vm166, %v236, %v235
    %v238 = vrot.slane %v131, 6
    %v239 = vrot.slane %v132, 5
    %v240 = vsel %vm148, %v239, %v238
    %v241 = vrot.slane %v133, 4
    %v242 = vsel %vm151, %v241, %v240
    %v243 = vrot.slane %v134, 3
    %v244 = vsel %vm154, %v243, %v242
    %v245 = vrot.slane %v135, 2
    %v246 = vsel %vm157, %v245, %v244
    %v247 = vrot.slane %v136, 1
    %v248 = vsel %vm160, %v247, %v246
    %v249 = vsel %vm163, %v137, %v248
    %v250 = vrot.slane %v138, 7
    %v251 = vsel %vm166, %v250, %v249
    %v252 = vrot.slane %v131, 7
    %v253 = vrot.slane %v132, 6
    %v254 = vsel %vm148, %v253, %v252
    %v255 = vrot.slane %v133, 5
    %v256 = vsel %vm151, %v255, %v254
    %v257 = vrot.slane %v134, 4
    %v258 = vsel %vm154, %v257, %v256
    %v259 = vrot.slane %v135, 3
    %v260 = vsel %vm157, %v259, %v258
    %v261 = vrot.slane %v136, 2
    %v262 = vsel %vm160, %v261, %v260
    %v263 = vrot.slane %v137, 1
    %v264 = vsel %vm163, %v263, %v262
    %v265 = vsel %vm166, %v138, %v264
    %vm266 = vcmask 261120
    %v268 = vsel %vm266, %v119, 0
    %v271 = vsel %vm266, %v120, 0
    %v274 = vsel %vm266, %v121, 0
    %v277 = vsel %vm266, %v122, 0
    %v279 = vsel %vm266, %v167, 0
    %v281 = vsel %vm266, %v181, 0
    %v283 = vsel %vm266, %v195, 0
    %v285 = vsel %vm266, %v209, 0
    %v287 = vsel %vm266, %v223, 0
    %v289 = vsel %vm266, %v237, 0
    %v291 = vsel %vm266, %v251, 0
    %v293 = vsel %vm266, %v265, 0
    %295 = vmatprep.subr.mxu0 0.0
    %296 = vmatpush1.xpose.msra.mxu0 0.0
    %297 = vmatprep.subr.mxu0 0.0
    %298 = vmatpush1.xpose.msra.mxu0 0.0
    %299 = vmatprep.subr.mxu0 0.0
    %300 = vmatpush1.xpose.msra.mxu0 0.0
    %301 = vmatprep.subr.mxu0 0.0
    %302 = vmatpush1.xpose.msra.mxu0 0.0
    %303 = vmatprep.subr.mxu0 0.0
    %304 = vmatpush1.xpose.msra.mxu0 0.0
    %305 = vmatprep.subr.mxu0 0.0
    %306 = vmatpush1.xpose.msra.mxu0 0.0
    %307 = vmatprep.subr.mxu0 0.0
    %308 = vmatpush1.xpose.msra.mxu0 0.0
    %309 = vmatprep.subr.mxu0 0.0
    %310 = vmatpush1.xpose.msra.mxu0 0.0
    %311 = vmatprep.subr.mxu0 0.0
    %312 = vmatpush1.xpose.msra.mxu0 %v293
    %313 = vmatprep.subr.mxu0 0.0
    %314 = vmatpush1.xpose.msra.mxu0 %v291
    %315 = vmatprep.subr.mxu0 0.0
    %316 = vmatpush1.xpose.msra.mxu0 %v289
    %317 = vmatprep.subr.mxu0 0.0
    %318 = vmatpush1.xpose.msra.mxu0 %v287
    %319 = vmatprep.subr.mxu0 0.0
    %320 = vmatpush1.xpose.msra.mxu0 %v285
    %321 = vmatprep.subr.mxu0 0.0
    %322 = vmatpush1.xpose.msra.mxu0 %v283
    %323 = vmatprep.subr.mxu0 0.0
    %324 = vmatpush1.xpose.msra.mxu0 %v281
    %325 = vmatprep.subr.mxu0 0.0
    %326 = vmatpush1.xpose.msra.mxu0 %v279
    %327 = vmatprep.subr.mxu0 0.0
    %328 = vmatpush2.xpose.msra.mxu0 0.0
    %329 = vmatprep.subr.mxu0 0.0
    %330 = vmatpush2.xpose.msra.mxu0 0.0
    %331 = vmatprep.subr.mxu0 0.0
    %332 = vmatpush2.xpose.msra.mxu0 0.0
    %333 = vmatprep.subr.mxu0 0.0
    %334 = vmatpush2.xpose.msra.mxu0 0.0
    %335 = vmatprep.subr.mxu0 0.0
    %336 = vmatpush2.xpose.msra.mxu0 0.0
    %337 = vmatprep.subr.mxu0 0.0
    %338 = vmatpush2.xpose.msra.mxu0 0.0
    %339 = vmatprep.subr.mxu0 0.0
    %340 = vmatpush2.xpose.msra.mxu0 0.0
    %341 = vmatprep.subr.mxu0 0.0
    %342 = vmatpush2.xpose.msra.mxu0 0.0
    %343 = vmatprep.subr.mxu0 0.0
    %344 = vmatpush2.xpose.msra.mxu0 0.0
    %345 = vmatprep.subr.mxu0 0.0
    %346 = vmatpush2.xpose.msra.mxu0 0.0
    %347 = vmatprep.subr.mxu0 0.0
    %348 = vmatpush2.xpose.msra.mxu0 0.0
    %349 = vmatprep.subr.mxu0 0.0
    %350 = vmatpush2.xpose.msra.mxu0 0.0
    %351 = vmatprep.subr.mxu0 0.0
    %352 = vmatpush2.xpose.msra.mxu0 0.0
    %353 = vmatprep.subr.mxu0 0.0
    %354 = vmatpush2.xpose.msra.mxu0 0.0
    %355 = vmatprep.subr.mxu0 0.0
    %356 = vmatpush2.xpose.msra.mxu0 0.0
    %357 = vmatprep.subr.mxu0 0.0
    %358 = vmatpush2.xpose.msra.mxu0 0.0
    %359 = vmatprep.mubr.f32.mxu0 0.0
    %360 = vmatmul.mubr.f32.gmra.mxu0 %v268
    %v361 = vpop.f32.mrf.mxu0
    %v362 = vadd.f32 0.0, %v361
    %v363 = vpop.f32.mrf.mxu0
    %364 = vmatprep.mubr.f32.mxu0 0.0
    %365 = vmatmul.mubr.f32.gmra.mxu0 %v271
    %v366 = vpop.f32.mrf.mxu0
    %v367 = vadd.f32 0.0, %v366
    %v368 = vpop.f32.mrf.mxu0
    %369 = vmatprep.mubr.f32.mxu0 0.0
    %370 = vmatmul.mubr.f32.gmra.mxu0 %v274
    %v371 = vpop.f32.mrf.mxu0
    %v372 = vadd.f32 0.0, %v371
    %v373 = vpop.f32.mrf.mxu0
    %374 = vmatprep.mubr.f32.mxu0 0.0
    %375 = vmatmul.mubr.f32.gmra.mxu0 %v277
    %v376 = vpop.f32.mrf.mxu0
    %v377 = vadd.f32 0.0, %v376
    %v378 = vpop.f32.mrf.mxu0
    %379 = vdwg.mxu0
    %380 = vmatprep.subr.mxu0 0.0
    %381 = vmatpush1.msra.mxu0 0.0
    %382 = vmatprep.subr.mxu0 0.0
    %383 = vmatpush1.msra.mxu0 0.0
    %384 = vmatprep.subr.mxu0 0.0
    %385 = vmatpush1.msra.mxu0 0.0
    %386 = vmatprep.subr.mxu0 0.0
    %387 = vmatpush1.msra.mxu0 0.0
    %388 = vmatprep.subr.mxu0 0.0
    %389 = vmatpush1.msra.mxu0 0.0
    %390 = vmatprep.subr.mxu0 0.0
    %391 = vmatpush1.msra.mxu0 0.0
    %392 = vmatprep.subr.mxu0 0.0
    %393 = vmatpush1.msra.mxu0 0.0
    %394 = vmatprep.subr.mxu0 0.0
    %395 = vmatpush1.msra.mxu0 0.0
    %396 = vmatprep.subr.mxu0 0.0
    %397 = vmatpush1.msra.mxu0 0.0
    %398 = vmatprep.subr.mxu0 0.0
    %399 = vmatpush1.msra.mxu0 0.0
    %400 = vmatprep.subr.mxu0 0.0
    %401 = vmatpush1.msra.mxu0 0.0
    %402 = vmatprep.subr.mxu0 0.0
    %403 = vmatpush1.msra.mxu0 0.0
    %404 = vmatprep.subr.mxu0 0.0
    %405 = vmatpush1.msra.mxu0 %v126
    %406 = vmatprep.subr.mxu0 0.0
    %407 = vmatpush1.msra.mxu0 %v125
    %408 = vmatprep.subr.mxu0 0.0
    %409 = vmatpush1.msra.mxu0 %v124
    %410 = vmatprep.subr.mxu0 0.0
    %411 = vmatpush1.msra.mxu0 %v123
    %412 = vmatprep.subr.mxu0 0.0
    %413 = vmatpush2.msra.mxu0 0.0
    %414 = vmatprep.subr.mxu0 0.0
    %415 = vmatpush2.msra.mxu0 0.0
    %416 = vmatprep.subr.mxu0 0.0
    %417 = vmatpush2.msra.mxu0 0.0
    %418 = vmatprep.subr.mxu0 0.0
    %419 = vmatpush2.msra.mxu0 0.0
    %420 = vmatprep.subr.mxu0 0.0
    %421 = vmatpush2.msra.mxu0 0.0
    %422 = vmatprep.subr.mxu0 0.0
    %423 = vmatpush2.msra.mxu0 0.0
    %424 = vmatprep.subr.mxu0 0.0
    %425 = vmatpush2.msra.mxu0 0.0
    %426 = vmatprep.subr.mxu0 0.0
    %427 = vmatpush2.msra.mxu0 0.0
    %428 = vmatprep.subr.mxu0 0.0
    %429 = vmatpush2.msra.mxu0 0.0
    %430 = vmatprep.subr.mxu0 0.0
    %431 = vmatpush2.msra.mxu0 0.0
    %432 = vmatprep.subr.mxu0 0.0
    %433 = vmatpush2.msra.mxu0 0.0
    %434 = vmatprep.subr.mxu0 0.0
    %435 = vmatpush2.msra.mxu0 0.0
    %436 = vmatprep.subr.mxu0 0.0
    %437 = vmatpush2.msra.mxu0 0.0
    %438 = vmatprep.subr.mxu0 0.0
    %439 = vmatpush2.msra.mxu0 0.0
    %440 = vmatprep.subr.mxu0 0.0
    %441 = vmatpush2.msra.mxu0 0.0
    %442 = vmatprep.subr.mxu0 0.0
    %443 = vmatpush2.msra.mxu0 0.0
    %444 = vmatprep.mubr.f32.mxu0 0.0
    %445 = vmatmul.mubr.f32.gmra.mxu0 %v279
    %v446 = vpop.f32.mrf.mxu0
    %v447 = vadd.f32 0.0, %v446
    %v448 = vpop.f32.mrf.mxu0
    %449 = vmatprep.mubr.f32.mxu0 0.0
    %450 = vmatmul.mubr.f32.gmra.mxu0 %v281
    %v451 = vpop.f32.mrf.mxu0
    %v452 = vadd.f32 0.0, %v451
    %v453 = vpop.f32.mrf.mxu0
    %454 = vmatprep.mubr.f32.mxu0 0.0
    %455 = vmatmul.mubr.f32.gmra.mxu0 %v283
    %v456 = vpop.f32.mrf.mxu0
    %v457 = vadd.f32 0.0, %v456
    %v458 = vpop.f32.mrf.mxu0
    %459 = vmatprep.mubr.f32.mxu0 0.0
    %460 = vmatmul.mubr.f32.gmra.mxu0 %v285
    %v461 = vpop.f32.mrf.mxu0
    %v462 = vadd.f32 0.0, %v461
    %v463 = vpop.f32.mrf.mxu0
    %464 = vmatprep.mubr.f32.mxu0 0.0
    %465 = vmatmul.mubr.f32.gmra.mxu0 %v287
    %v466 = vpop.f32.mrf.mxu0
    %v467 = vadd.f32 0.0, %v466
    %v468 = vpop.f32.mrf.mxu0
    %469 = vmatprep.mubr.f32.mxu0 0.0
    %470 = vmatmul.mubr.f32.gmra.mxu0 %v289
    %v471 = vpop.f32.mrf.mxu0
    %v472 = vadd.f32 0.0, %v471
    %v473 = vpop.f32.mrf.mxu0
    %474 = vmatprep.mubr.f32.mxu0 0.0
    %475 = vmatmul.mubr.f32.gmra.mxu0 %v291
    %v476 = vpop.f32.mrf.mxu0
    %v477 = vadd.f32 0.0, %v476
    %v478 = vpop.f32.mrf.mxu0
    %479 = vmatprep.mubr.f32.mxu0 0.0
    %480 = vmatmul.mubr.f32.gmra.mxu0 %v293
    %v481 = vpop.f32.mrf.mxu0
    %v482 = vadd.f32 0.0, %v481
    %v483 = vpop.f32.mrf.mxu0
    %484 = vdwg.mxu0
    %v485 = vlaneseq
    %v486 = vand.u32 %v485, 127
    %v487 = vlaneseq
    %v488 = vshrl.u32 %v487, 7
    %v489 = vmul.u32 %v488, 8
    %vm490 = vcmp.ge.s32.totalorder %v486, %v489
    %v491 = vadd.s32 %v489, 8
    %vm492 = vcmp.lt.s32.totalorder %v486, %v491
    %vm493 = vmand %vm490, %vm492
    %v494 = vsel %vm493, 1, 0
    %v495 = vcvt.s32.f32 %v494
    %v496 = vadd.s32 %v488, 8
    %v497 = vadd.s32 %v488, 16
    %v498 = vadd.s32 %v488, 24
    %v499 = vadd.s32 %v488, 32
    %v500 = vadd.s32 %v488, 40
    %v501 = vadd.s32 %v488, 48
    %v502 = vadd.s32 %v488, 56
    %v503 = vand.u32 %v488, 7
    %v504 = vand.u32 %v496, 7
    %v505 = vand.u32 %v497, 7
    %v506 = vand.u32 %v498, 7
    %v507 = vand.u32 %v499, 7
    %v508 = vand.u32 %v500, 7
    %v509 = vand.u32 %v501, 7
    %v510 = vand.u32 %v502, 7
    %vm511 = vcmp.eq.s32.totalorder %v503, %v486
    %vm512 = vcmp.eq.s32.totalorder %v504, %v486
    %vm513 = vcmp.eq.s32.totalorder %v505, %v486
    %vm514 = vcmp.eq.s32.totalorder %v506, %v486
    %vm515 = vcmp.eq.s32.totalorder %v507, %v486
    %vm516 = vcmp.eq.s32.totalorder %v508, %v486
    %vm517 = vcmp.eq.s32.totalorder %v509, %v486
    %vm518 = vcmp.eq.s32.totalorder %v510, %v486
    %v519 = vsel %vm511, 1, 0
    %v520 = vsel %vm512, 1, 0
    %v521 = vsel %vm513, 1, 0
    %v522 = vsel %vm514, 1, 0
    %v523 = vsel %vm515, 1, 0
    %v524 = vsel %vm516, 1, 0
    %v525 = vsel %vm517, 1, 0
    %v526 = vsel %vm518, 1, 0
    %v527 = vcvt.s32.f32 %v519
    %v528 = vcvt.s32.f32 %v520
    %v529 = vcvt.s32.f32 %v521
    %v530 = vcvt.s32.f32 %v522
    %v531 = vcvt.s32.f32 %v523
    %v532 = vcvt.s32.f32 %v524
    %v533 = vcvt.s32.f32 %v525
    %v534 = vcvt.s32.f32 %v526
    %v535 = vld [vmem:[%s0] sm:$0xff]
    %v536 = vld [vmem:[%s0 + $0x8] sm:$0xff]
    %v537 = vld [vmem:[%s0 + $0x10] sm:$0xff]
    %v538 = vld [vmem:[%s0 + $0x18] sm:$0xff]
    %v539 = vld [vmem:[%s0 + $0x20] sm:$0xff]
    %v540 = vld [vmem:[%s0 + $0x28] sm:$0xff]
    %541 = vset.pattern.permute.xlu0 0
    %542 = vperm.xlu0 %541, %v535
    %v543 = vpop.permute.xlu0 %542
    %544 = vset.pattern.permute.xlu0 0
    %545 = vperm.xlu0 %544, %v536
    %v546 = vpop.permute.xlu0 %545
    %547 = vset.pattern.permute.xlu0 0
    %548 = vperm.xlu0 %547, %v537
    %v549 = vpop.permute.xlu0 %548
    %550 = vset.pattern.permute.xlu0 0
    %551 = vperm.xlu0 %550, %v538
    %v552 = vpop.permute.xlu0 %551
    %553 = vset.pattern.permute.xlu0 0
    %554 = vperm.xlu0 %553, %v539
    %v555 = vpop.permute.xlu0 %554
    %556 = vset.pattern.permute.xlu0 0
    %557 = vperm.xlu0 %556, %v540
    %v558 = vpop.permute.xlu0 %557
    %vm559 = vcmp.eq.s32.totalorder %v486, %v543
    %vm560 = vcmp.eq.s32.totalorder %v486, %v546
    %vm561 = vcmp.eq.s32.totalorder %v486, %v549
    %vm562 = vcmp.eq.s32.totalorder %v486, %v552
    %vm563 = vcmp.eq.s32.totalorder %v486, %v555
    %vm564 = vcmp.eq.s32.totalorder %v486, %v558
    %v565 = vsel %vm559, 1, 0
    %v566 = vsel %vm560, 1, 0
    %v567 = vsel %vm561, 1, 0
    %v568 = vsel %vm562, 1, 0
    %v569 = vsel %vm563, 1, 0
    %v570 = vsel %vm564, 1, 0
    %v571 = vcvt.s32.f32 %v565
    %v572 = vcvt.s32.f32 %v566
    %v573 = vcvt.s32.f32 %v567
    %v574 = vcvt.s32.f32 %v568
    %v575 = vcvt.s32.f32 %v569
    %v576 = vcvt.s32.f32 %v570
    %v577 = vld [vmem:[#allocation8] sm:$0xff]
    %v578 = vld [vmem:[#allocation8 + $0x8] sm:$0xff]
    %vm579 = vcmask 130048
    %v581 = vsel %vm579, %v571, 0
    %v584 = vsel %vm579, %v572, 0
    %v587 = vsel %vm579, %v573, 0
    %v590 = vsel %vm579, %v574, 0
    %v593 = vsel %vm579, %v575, 0
    %v596 = vsel %vm579, %v576, 0
    %598 = vmatprep.subr.mxu0 0.0
    %599 = vmatpush1.msra.mxu0 0.0
    %600 = vmatprep.subr.mxu0 0.0
    %601 = vmatpush1.msra.mxu0 0.0
    %602 = vmatprep.subr.mxu0 0.0
    %603 = vmatpush1.msra.mxu0 0.0
    %604 = vmatprep.subr.mxu0 0.0
    %605 = vmatpush1.msra.mxu0 0.0
    %606 = vmatprep.subr.mxu0 0.0
    %607 = vmatpush1.msra.mxu0 0.0
    %608 = vmatprep.subr.mxu0 0.0
    %609 = vmatpush1.msra.mxu0 0.0
    %610 = vmatprep.subr.mxu0 0.0
    %611 = vmatpush1.msra.mxu0 0.0
    %612 = vmatprep.subr.mxu0 0.0
    %613 = vmatpush1.msra.mxu0 0.0
    %614 = vmatprep.subr.mxu0 0.0
    %615 = vmatpush1.msra.mxu0 0.0
    %616 = vmatprep.subr.mxu0 0.0
    %617 = vmatpush1.msra.mxu0 0.0
    %618 = vmatprep.subr.mxu0 0.0
    %619 = vmatpush1.msra.mxu0 0.0
    %620 = vmatprep.subr.mxu0 0.0
    %621 = vmatpush1.msra.mxu0 0.0
    %622 = vmatprep.subr.mxu0 0.0
    %623 = vmatpush1.msra.mxu0 0.0
    %624 = vmatprep.subr.mxu0 0.0
    %625 = vmatpush1.msra.mxu0 0.0
    %626 = vmatprep.subr.mxu0 0.0
    %627 = vmatpush1.msra.mxu0 %v578
    %628 = vmatprep.subr.mxu0 0.0
    %629 = vmatpush1.msra.mxu0 %v577
    %630 = vmatprep.subr.mxu0 0.0
    %631 = vmatpush2.msra.mxu0 0.0
    %632 = vmatprep.subr.mxu0 0.0
    %633 = vmatpush2.msra.mxu0 0.0
    %634 = vmatprep.subr.mxu0 0.0
    %635 = vmatpush2.msra.mxu0 0.0
    %636 = vmatprep.subr.mxu0 0.0
    %637 = vmatpush2.msra.mxu0 0.0
    %638 = vmatprep.subr.mxu0 0.0
    %639 = vmatpush2.msra.mxu0 0.0
    %640 = vmatprep.subr.mxu0 0.0
    %641 = vmatpush2.msra.mxu0 0.0
    %642 = vmatprep.subr.mxu0 0.0
    %643 = vmatpush2.msra.mxu0 0.0
    %644 = vmatprep.subr.mxu0 0.0
    %645 = vmatpush2.msra.mxu0 0.0
    %646 = vmatprep.subr.mxu0 0.0
    %647 = vmatpush2.msra.mxu0 0.0
    %648 = vmatprep.subr.mxu0 0.0
    %649 = vmatpush2.msra.mxu0 0.0
    %650 = vmatprep.subr.mxu0 0.0
    %651 = vmatpush2.msra.mxu0 0.0
    %652 = vmatprep.subr.mxu0 0.0
    %653 = vmatpush2.msra.mxu0 0.0
    %654 = vmatprep.subr.mxu0 0.0
    %655 = vmatpush2.msra.mxu0 0.0
    %656 = vmatprep.subr.mxu0 0.0
    %657 = vmatpush2.msra.mxu0 0.0
    %658 = vmatprep.subr.mxu0 0.0
    %659 = vmatpush2.msra.mxu0 0.0
    %660 = vmatprep.subr.mxu0 0.0
    %661 = vmatpush2.msra.mxu0 0.0
    %662 = vmatprep.mubr.f32.mxu0 0.0
    %663 = vmatmul.mubr.f32.gmra.mxu0 %v581
    %v664 = vpop.f32.mrf.mxu0
    %v665 = vadd.f32 0.0, %v664
    %v666 = vpop.f32.mrf.mxu0
    %667 = vmatprep.mubr.f32.mxu0 0.0
    %668 = vmatmul.mubr.f32.gmra.mxu0 %v584
    %v669 = vpop.f32.mrf.mxu0
    %v670 = vadd.f32 0.0, %v669
    %v671 = vpop.f32.mrf.mxu0
    %672 = vmatprep.mubr.f32.mxu0 0.0
    %673 = vmatmul.mubr.f32.gmra.mxu0 %v587
    %v674 = vpop.f32.mrf.mxu0
    %v675 = vadd.f32 0.0, %v674
    %v676 = vpop.f32.mrf.mxu0
    %677 = vmatprep.mubr.f32.mxu0 0.0
    %678 = vmatmul.mubr.f32.gmra.mxu0 %v590
    %v679 = vpop.f32.mrf.mxu0
    %v680 = vadd.f32 0.0, %v679
    %v681 = vpop.f32.mrf.mxu0
    %682 = vmatprep.mubr.f32.mxu0 0.0
    %683 = vmatmul.mubr.f32.gmra.mxu0 %v593
    %v684 = vpop.f32.mrf.mxu0
    %v685 = vadd.f32 0.0, %v684
    %v686 = vpop.f32.mrf.mxu0
    %687 = vmatprep.mubr.f32.mxu0 0.0
    %688 = vmatmul.mubr.f32.gmra.mxu0 %v596
    %v689 = vpop.f32.mrf.mxu0
    %v690 = vadd.f32 0.0, %v689
    %v691 = vpop.f32.mrf.mxu0
    %692 = vdwg.mxu0
    %v693 = vld [vmem:[%s1] sm:$0xff]
    %s694 = scalar_lea.vmem %s1, 8
    %v695 = vld [vmem:[%s694] sm:$0xff]
    %v696 = vld [vmem:[#allocation2] sm:$0xff]
    %s697 = scalar_lea.vmem [#allocation2], 8
    %v698 = vld [vmem:[%s697] sm:$0xff]
    %v699 = vld [vmem:[#allocation5] sm:$0xff]
    %v701 = vsel %vm266, %v699, 0
    %703 = vmatprep.subr.mxu0 0.0
    %704 = vmatpush1.msra.mxu0 0.0
    %705 = vmatprep.subr.mxu0 0.0
    %706 = vmatpush1.msra.mxu0 0.0
    %707 = vmatprep.subr.mxu0 0.0
    %708 = vmatpush1.msra.mxu0 0.0
    %709 = vmatprep.subr.mxu0 0.0
    %710 = vmatpush1.msra.mxu0 0.0
    %711 = vmatprep.subr.mxu0 0.0
    %712 = vmatpush1.msra.mxu0 0.0
    %713 = vmatprep.subr.mxu0 0.0
    %714 = vmatpush1.msra.mxu0 0.0
    %715 = vmatprep.subr.mxu0 0.0
    %716 = vmatpush1.msra.mxu0 0.0
    %717 = vmatprep.subr.mxu0 0.0
    %718 = vmatpush1.msra.mxu0 0.0
    %719 = vmatprep.subr.mxu0 0.0
    %720 = vmatpush1.msra.mxu0 0.0
    %721 = vmatprep.subr.mxu0 0.0
    %722 = vmatpush1.msra.mxu0 0.0
    %723 = vmatprep.subr.mxu0 0.0
    %724 = vmatpush1.msra.mxu0 0.0
    %725 = vmatprep.subr.mxu0 0.0
    %726 = vmatpush1.msra.mxu0 0.0
    %727 = vmatprep.subr.mxu0 0.0
    %728 = vmatpush1.msra.mxu0 %v96
    %729 = vmatprep.subr.mxu0 0.0
    %730 = vmatpush1.msra.mxu0 %v95
    %731 = vmatprep.subr.mxu0 0.0
    %732 = vmatpush1.msra.mxu0 %v94
    %733 = vmatprep.subr.mxu0 0.0
    %734 = vmatpush1.msra.mxu0 %v93
    %735 = vmatprep.subr.mxu0 0.0
    %736 = vmatpush2.msra.mxu0 0.0
    %737 = vmatprep.subr.mxu0 0.0
    %738 = vmatpush2.msra.mxu0 0.0
    %739 = vmatprep.subr.mxu0 0.0
    %740 = vmatpush2.msra.mxu0 0.0
    %741 = vmatprep.subr.mxu0 0.0
    %742 = vmatpush2.msra.mxu0 0.0
    %743 = vmatprep.subr.mxu0 0.0
    %744 = vmatpush2.msra.mxu0 0.0
    %745 = vmatprep.subr.mxu0 0.0
    %746 = vmatpush2.msra.mxu0 0.0
    %747 = vmatprep.subr.mxu0 0.0
    %748 = vmatpush2.msra.mxu0 0.0
    %749 = vmatprep.subr.mxu0 0.0
    %750 = vmatpush2.msra.mxu0 0.0
    %751 = vmatprep.subr.mxu0 0.0
    %752 = vmatpush2.msra.mxu0 0.0
    %753 = vmatprep.subr.mxu0 0.0
    %754 = vmatpush2.msra.mxu0 0.0
    %755 = vmatprep.subr.mxu0 0.0
    %756 = vmatpush2.msra.mxu0 0.0
    %757 = vmatprep.subr.mxu0 0.0
    %758 = vmatpush2.msra.mxu0 0.0
    %759 = vmatprep.subr.mxu0 0.0
    %760 = vmatpush2.msra.mxu0 0.0
    %761 = vmatprep.subr.mxu0 0.0
    %762 = vmatpush2.msra.mxu0 0.0
    %763 = vmatprep.subr.mxu0 0.0
    %764 = vmatpush2.msra.mxu0 0.0
    %765 = vmatprep.subr.mxu0 0.0
    %766 = vmatpush2.msra.mxu0 0.0
    %767 = vmatprep.mubr.f32.mxu0 0.0
    %768 = vmatmul.mubr.f32.gmra.mxu0 %v701
    %v769 = vpop.f32.mrf.mxu0
    %v770 = vadd.f32 0.0, %v769
    %v771 = vpop.f32.mrf.mxu0
    %772 = vdwg.mxu0
    %v774 = vsel %vm266, %v665, 0
    %776 = vmatprep.subr.mxu0 0.0
    %777 = vmatpush1.msra.mxu0 0.0
    %778 = vmatprep.subr.mxu0 0.0
    %779 = vmatpush1.msra.mxu0 0.0
    %780 = vmatprep.subr.mxu0 0.0
    %781 = vmatpush1.msra.mxu0 0.0
    %782 = vmatprep.subr.mxu0 0.0
    %783 = vmatpush1.msra.mxu0 0.0
    %784 = vmatprep.subr.mxu0 0.0
    %785 = vmatpush1.msra.mxu0 0.0
    %786 = vmatprep.subr.mxu0 0.0
    %787 = vmatpush1.msra.mxu0 0.0
    %788 = vmatprep.subr.mxu0 0.0
    %789 = vmatpush1.msra.mxu0 0.0
    %790 = vmatprep.subr.mxu0 0.0
    %791 = vmatpush1.msra.mxu0 0.0
    %792 = vmatprep.subr.mxu0 0.0
    %793 = vmatpush1.msra.mxu0 0.0
    %794 = vmatprep.subr.mxu0 0.0
    %795 = vmatpush1.msra.mxu0 0.0
    %796 = vmatprep.subr.mxu0 0.0
    %797 = vmatpush1.msra.mxu0 0.0
    %798 = vmatprep.subr.mxu0 0.0
    %799 = vmatpush1.msra.mxu0 0.0
    %800 = vmatprep.subr.mxu0 0.0
    %801 = vmatpush1.msra.mxu0 %v92
    %802 = vmatprep.subr.mxu0 0.0
    %803 = vmatpush1.msra.mxu0 %v91
    %804 = vmatprep.subr.mxu0 0.0
    %805 = vmatpush1.msra.mxu0 %v90
    %806 = vmatprep.subr.mxu0 0.0
    %807 = vmatpush1.msra.mxu0 %v89
    %808 = vmatprep.subr.mxu0 0.0
    %809 = vmatpush2.msra.mxu0 0.0
    %810 = vmatprep.subr.mxu0 0.0
    %811 = vmatpush2.msra.mxu0 0.0
    %812 = vmatprep.subr.mxu0 0.0
    %813 = vmatpush2.msra.mxu0 0.0
    %814 = vmatprep.subr.mxu0 0.0
    %815 = vmatpush2.msra.mxu0 0.0
    %816 = vmatprep.subr.mxu0 0.0
    %817 = vmatpush2.msra.mxu0 0.0
    %818 = vmatprep.subr.mxu0 0.0
    %819 = vmatpush2.msra.mxu0 0.0
    %820 = vmatprep.subr.mxu0 0.0
    %821 = vmatpush2.msra.mxu0 0.0
    %822 = vmatprep.subr.mxu0 0.0
    %823 = vmatpush2.msra.mxu0 0.0
    %824 = vmatprep.subr.mxu0 0.0
    %825 = vmatpush2.msra.mxu0 0.0
    %826 = vmatprep.subr.mxu0 0.0
    %827 = vmatpush2.msra.mxu0 0.0
    %828 = vmatprep.subr.mxu0 0.0
    %829 = vmatpush2.msra.mxu0 0.0
    %830 = vmatprep.subr.mxu0 0.0
    %831 = vmatpush2.msra.mxu0 0.0
    %832 = vmatprep.subr.mxu0 0.0
    %833 = vmatpush2.msra.mxu0 0.0
    %834 = vmatprep.subr.mxu0 0.0
    %835 = vmatpush2.msra.mxu0 0.0
    %836 = vmatprep.subr.mxu0 0.0
    %837 = vmatpush2.msra.mxu0 0.0
    %838 = vmatprep.subr.mxu0 0.0
    %839 = vmatpush2.msra.mxu0 0.0
    %840 = vmatprep.mubr.f32.mxu0 0.0
    %841 = vmatmul.mubr.f32.gmra.mxu0 %v774
    %v842 = vpop.f32.mrf.mxu0
    %v843 = vadd.f32 %v770, %v842
    %v844 = vpop.f32.mrf.mxu0
    %845 = vdwg.mxu0
    %v847 = vsel %vm266, %v693, 0
    %849 = vmatprep.subr.mxu0 0.0
    %850 = vmatpush1.msra.mxu0 0.0
    %851 = vmatprep.subr.mxu0 0.0
    %852 = vmatpush1.msra.mxu0 0.0
    %853 = vmatprep.subr.mxu0 0.0
    %854 = vmatpush1.msra.mxu0 0.0
    %855 = vmatprep.subr.mxu0 0.0
    %856 = vmatpush1.msra.mxu0 0.0
    %857 = vmatprep.subr.mxu0 0.0
    %858 = vmatpush1.msra.mxu0 0.0
    %859 = vmatprep.subr.mxu0 0.0
    %860 = vmatpush1.msra.mxu0 0.0
    %861 = vmatprep.subr.mxu0 0.0
    %862 = vmatpush1.msra.mxu0 0.0
    %863 = vmatprep.subr.mxu0 0.0
    %864 = vmatpush1.msra.mxu0 0.0
    %865 = vmatprep.subr.mxu0 0.0
    %866 = vmatpush1.msra.mxu0 0.0
    %867 = vmatprep.subr.mxu0 0.0
    %868 = vmatpush1.msra.mxu0 0.0
    %869 = vmatprep.subr.mxu0 0.0
    %870 = vmatpush1.msra.mxu0 0.0
    %871 = vmatprep.subr.mxu0 0.0
    %872 = vmatpush1.msra.mxu0 0.0
    %873 = vmatprep.subr.mxu0 0.0
    %874 = vmatpush1.msra.mxu0 %v100
    %875 = vmatprep.subr.mxu0 0.0
    %876 = vmatpush1.msra.mxu0 %v99
    %877 = vmatprep.subr.mxu0 0.0
    %878 = vmatpush1.msra.mxu0 %v98
    %879 = vmatprep.subr.mxu0 0.0
    %880 = vmatpush1.msra.mxu0 %v97
    %881 = vmatprep.subr.mxu0 0.0
    %882 = vmatpush2.msra.mxu0 0.0
    %883 = vmatprep.subr.mxu0 0.0
    %884 = vmatpush2.msra.mxu0 0.0
    %885 = vmatprep.subr.mxu0 0.0
    %886 = vmatpush2.msra.mxu0 0.0
    %887 = vmatprep.subr.mxu0 0.0
    %888 = vmatpush2.msra.mxu0 0.0
    %889 = vmatprep.subr.mxu0 0.0
    %890 = vmatpush2.msra.mxu0 0.0
    %891 = vmatprep.subr.mxu0 0.0
    %892 = vmatpush2.msra.mxu0 0.0
    %893 = vmatprep.subr.mxu0 0.0
    %894 = vmatpush2.msra.mxu0 0.0
    %895 = vmatprep.subr.mxu0 0.0
    %896 = vmatpush2.msra.mxu0 0.0
    %897 = vmatprep.subr.mxu0 0.0
    %898 = vmatpush2.msra.mxu0 0.0
    %899 = vmatprep.subr.mxu0 0.0
    %900 = vmatpush2.msra.mxu0 0.0
    %901 = vmatprep.subr.mxu0 0.0
    %902 = vmatpush2.msra.mxu0 0.0
    %903 = vmatprep.subr.mxu0 0.0
    %904 = vmatpush2.msra.mxu0 0.0
    %905 = vmatprep.subr.mxu0 0.0
    %906 = vmatpush2.msra.mxu0 0.0
    %907 = vmatprep.subr.mxu0 0.0
    %908 = vmatpush2.msra.mxu0 0.0
    %909 = vmatprep.subr.mxu0 0.0
    %910 = vmatpush2.msra.mxu0 0.0
    %911 = vmatprep.subr.mxu0 0.0
    %912 = vmatpush2.msra.mxu0 0.0
    %913 = vmatprep.mubr.f32.mxu0 0.0
    %914 = vmatmul.mubr.f32.gmra.mxu0 %v847
    %v915 = vpop.f32.mrf.mxu0
    %v916 = vadd.f32 0.0, %v915
    %v917 = vpop.f32.mrf.mxu0
    %918 = vdwg.mxu0
    %v919 = vadd.f32 %v843, %v916
    %v920 = vadd.f32 %v919, %v113
    %v921 = vxor.u32 %v920, 2147483648
    %v922 = vmul.f32 %v921, 1.442695
    %v923 = vpow.pop %v922
    %v924 = vadd.f32 %v923, 1.0
    %v925 = vrcp.pop %v924
    %v926 = vmul.f32 1.0, %v925
    %v927 = vtanh.pop %v920
    %929 = vrot.lane.b32.xlu0 %v696, 32
    %v930 = vpop.permute.xlu0 %929
    %v932 = vmul.f32 %v926, %v930
    %934 = vrot.lane.b32.xlu0 %v927, 64
    %v935 = vpop.permute.xlu0 %934
    %v937 = vmul.f32 %v926, %v935
    %939 = vrot.lane.b32.xlu0 %v937, 32
    %v940 = vpop.permute.xlu0 %939
    %v942 = vadd.f32 %v932, %v940
    %v943 = vtanh.pop %v942
    %945 = vrot.lane.b32.xlu0 %v943, 64
    %v946 = vpop.permute.xlu0 %945
    %v948 = vmul.f32 %v926, %v946
    %v950 = vsel %vm266, %v695, 0
    %952 = vmatprep.subr.mxu0 0.0
    %953 = vmatpush1.msra.mxu0 0.0
    %954 = vmatprep.subr.mxu0 0.0
    %955 = vmatpush1.msra.mxu0 0.0
    %956 = vmatprep.subr.mxu0 0.0
    %957 = vmatpush1.msra.mxu0 0.0
    %958 = vmatprep.subr.mxu0 0.0
    %959 = vmatpush1.msra.mxu0 0.0
    %960 = vmatprep.subr.mxu0 0.0
    %961 = vmatpush1.msra.mxu0 0.0
    %962 = vmatprep.subr.mxu0 0.0
    %963 = vmatpush1.msra.mxu0 0.0
    %964 = vmatprep.subr.mxu0 0.0
    %965 = vmatpush1.msra.mxu0 0.0
    %966 = vmatprep.subr.mxu0 0.0
    %967 = vmatpush1.msra.mxu0 0.0
    %968 = vmatprep.subr.mxu0 0.0
    %969 = vmatpush1.msra.mxu0 0.0
    %970 = vmatprep.subr.mxu0 0.0
    %971 = vmatpush1.msra.mxu0 0.0
    %972 = vmatprep.subr.mxu0 0.0
    %973 = vmatpush1.msra.mxu0 0.0
    %974 = vmatprep.subr.mxu0 0.0
    %975 = vmatpush1.msra.mxu0 0.0
    %976 = vmatprep.subr.mxu0 0.0
    %977 = vmatpush1.msra.mxu0 %v108
    %978 = vmatprep.subr.mxu0 0.0
    %979 = vmatpush1.msra.mxu0 %v107
    %980 = vmatprep.subr.mxu0 0.0
    %981 = vmatpush1.msra.mxu0 %v106
    %982 = vmatprep.subr.mxu0 0.0
    %983 = vmatpush1.msra.mxu0 %v105
    %984 = vmatprep.subr.mxu0 0.0
    %985 = vmatpush2.msra.mxu0 0.0
    %986 = vmatprep.subr.mxu0 0.0
    %987 = vmatpush2.msra.mxu0 0.0
    %988 = vmatprep.subr.mxu0 0.0
    %989 = vmatpush2.msra.mxu0 0.0
    %990 = vmatprep.subr.mxu0 0.0
    %991 = vmatpush2.msra.mxu0 0.0
    %992 = vmatprep.subr.mxu0 0.0
    %993 = vmatpush2.msra.mxu0 0.0
    %994 = vmatprep.subr.mxu0 0.0
    %995 = vmatpush2.msra.mxu0 0.0
    %996 = vmatprep.subr.mxu0 0.0
    %997 = vmatpush2.msra.mxu0 0.0
    %998 = vmatprep.subr.mxu0 0.0
    %999 = vmatpush2.msra.mxu0 0.0
    %1000 = vmatprep.subr.mxu0 0.0
    %1001 = vmatpush2.msra.mxu0 0.0
    %1002 = vmatprep.subr.mxu0 0.0
    %1003 = vmatpush2.msra.mxu0 0.0
    %1004 = vmatprep.subr.mxu0 0.0
    %1005 = vmatpush2.msra.mxu0 0.0
    %1006 = vmatprep.subr.mxu0 0.0
    %1007 = vmatpush2.msra.mxu0 0.0
    %1008 = vmatprep.subr.mxu0 0.0
    %1009 = vmatpush2.msra.mxu0 0.0
    %1010 = vmatprep.subr.mxu0 0.0
    %1011 = vmatpush2.msra.mxu0 0.0
    %1012 = vmatprep.subr.mxu0 0.0
    %1013 = vmatpush2.msra.mxu0 0.0
    %1014 = vmatprep.subr.mxu0 0.0
    %1015 = vmatpush2.msra.mxu0 0.0
    %1016 = vmatprep.mubr.f32.mxu0 0.0
    %1017 = vmatmul.mubr.f32.gmra.mxu0 %v950
    %v1018 = vpop.f32.mrf.mxu0
    %v1019 = vadd.f32 0.0, %v1018
    %v1020 = vpop.f32.mrf.mxu0
    %1021 = vdwg.mxu0
    %1023 = vrot.lane.b32.xlu0 %v948, 32
    %v1024 = vpop.permute.xlu0 %1023
    %v1025 = vsel %vm266, %v1024, 0
    %1027 = vmatprep.subr.mxu0 0.0
    %1028 = vmatpush1.msra.mxu0 0.0
    %1029 = vmatprep.subr.mxu0 0.0
    %1030 = vmatpush1.msra.mxu0 0.0
    %1031 = vmatprep.subr.mxu0 0.0
    %1032 = vmatpush1.msra.mxu0 0.0
    %1033 = vmatprep.subr.mxu0 0.0
    %1034 = vmatpush1.msra.mxu0 0.0
    %1035 = vmatprep.subr.mxu0 0.0
    %1036 = vmatpush1.msra.mxu0 0.0
    %1037 = vmatprep.subr.mxu0 0.0
    %1038 = vmatpush1.msra.mxu0 0.0
    %1039 = vmatprep.subr.mxu0 0.0
    %1040 = vmatpush1.msra.mxu0 0.0
    %1041 = vmatprep.subr.mxu0 0.0
    %1042 = vmatpush1.msra.mxu0 0.0
    %1043 = vmatprep.subr.mxu0 0.0
    %1044 = vmatpush1.msra.mxu0 0.0
    %1045 = vmatprep.subr.mxu0 0.0
    %1046 = vmatpush1.msra.mxu0 0.0
    %1047 = vmatprep.subr.mxu0 0.0
    %1048 = vmatpush1.msra.mxu0 0.0
    %1049 = vmatprep.subr.mxu0 0.0
    %1050 = vmatpush1.msra.mxu0 0.0
    %1051 = vmatprep.subr.mxu0 0.0
    %1052 = vmatpush1.msra.mxu0 %v104
    %1053 = vmatprep.subr.mxu0 0.0
    %1054 = vmatpush1.msra.mxu0 %v103
    %1055 = vmatprep.subr.mxu0 0.0
    %1056 = vmatpush1.msra.mxu0 %v102
    %1057 = vmatprep.subr.mxu0 0.0
    %1058 = vmatpush1.msra.mxu0 %v101
    %1059 = vmatprep.subr.mxu0 0.0
    %1060 = vmatpush2.msra.mxu0 0.0
    %1061 = vmatprep.subr.mxu0 0.0
    %1062 = vmatpush2.msra.mxu0 0.0
    %1063 = vmatprep.subr.mxu0 0.0
    %1064 = vmatpush2.msra.mxu0 0.0
    %1065 = vmatprep.subr.mxu0 0.0
    %1066 = vmatpush2.msra.mxu0 0.0
    %1067 = vmatprep.subr.mxu0 0.0
    %1068 = vmatpush2.msra.mxu0 0.0
    %1069 = vmatprep.subr.mxu0 0.0
    %1070 = vmatpush2.msra.mxu0 0.0
    %1071 = vmatprep.subr.mxu0 0.0
    %1072 = vmatpush2.msra.mxu0 0.0
    %1073 = vmatprep.subr.mxu0 0.0
    %1074 = vmatpush2.msra.mxu0 0.0
    %1075 = vmatprep.subr.mxu0 0.0
    %1076 = vmatpush2.msra.mxu0 0.0
    %1077 = vmatprep.subr.mxu0 0.0
    %1078 = vmatpush2.msra.mxu0 0.0
    %1079 = vmatprep.subr.mxu0 0.0
    %1080 = vmatpush2.msra.mxu0 0.0
    %1081 = vmatprep.subr.mxu0 0.0
    %1082 = vmatpush2.msra.mxu0 0.0
    %1083 = vmatprep.subr.mxu0 0.0
    %1084 = vmatpush2.msra.mxu0 0.0
    %1085 = vmatprep.subr.mxu0 0.0
    %1086 = vmatpush2.msra.mxu0 0.0
    %1087 = vmatprep.subr.mxu0 0.0
    %1088 = vmatpush2.msra.mxu0 0.0
    %1089 = vmatprep.subr.mxu0 0.0
    %1090 = vmatpush2.msra.mxu0 0.0
    %1091 = vmatprep.mubr.f32.mxu0 0.0
    %1092 = vmatmul.mubr.f32.gmra.mxu0 %v1025
    %v1093 = vpop.f32.mrf.mxu0
    %v1094 = vadd.f32 %v1019, %v1093
    %v1095 = vpop.f32.mrf.mxu0
    %1096 = vdwg.mxu0
    %v1097 = vadd.f32 %v1094, %v118
    %v1098 = vxor.u32 %v1097, 2147483648
    %v1099 = vmul.f32 %v1098, 1.442695
    %v1100 = vpow.pop %v1099
    %v1101 = vadd.f32 %v1100, 1.0
    %v1102 = vrcp.pop %v1101
    %v1103 = vmul.f32 1.0, %v1102
    %v1104 = vtanh.pop %v1097
    %1106 = vrot.lane.b32.xlu0 %v698, 32
    %v1107 = vpop.permute.xlu0 %1106
    %v1109 = vmul.f32 %v1103, %v1107
    %1111 = vrot.lane.b32.xlu0 %v1104, 64
    %v1112 = vpop.permute.xlu0 %1111
    %v1114 = vmul.f32 %v1103, %v1112
    %1116 = vrot.lane.b32.xlu0 %v1114, 32
    %v1117 = vpop.permute.xlu0 %1116
    %v1119 = vadd.f32 %v1109, %v1117
    %v1120 = vtanh.pop %v1119
    %1122 = vrot.lane.b32.xlu0 %v1120, 64
    %v1123 = vpop.permute.xlu0 %1122
    %v1125 = vmul.f32 %v1103, %v1123
    %1127 = vrot.lane.b32.xlu0 %v1125, 32
    %v1128 = vpop.permute.xlu0 %1127
    %v1129 = vsel %vm266, %v1128, 0
    %1131 = vmatprep.subr.mxu0 0.0
    %1132 = vmatpush1.msra.mxu0 0.0
    %1133 = vmatprep.subr.mxu0 0.0
    %1134 = vmatpush1.msra.mxu0 0.0
    %1135 = vmatprep.subr.mxu0 0.0
    %1136 = vmatpush1.msra.mxu0 0.0
    %1137 = vmatprep.subr.mxu0 0.0
    %1138 = vmatpush1.msra.mxu0 0.0
    %1139 = vmatprep.subr.mxu0 0.0
    %1140 = vmatpush1.msra.mxu0 0.0
    %1141 = vmatprep.subr.mxu0 0.0
    %1142 = vmatpush1.msra.mxu0 0.0
    %1143 = vmatprep.subr.mxu0 0.0
    %1144 = vmatpush1.msra.mxu0 0.0
    %1145 = vmatprep.subr.mxu0 0.0
    %1146 = vmatpush1.msra.mxu0 0.0
    %1147 = vmatprep.subr.mxu0 0.0
    %1148 = vmatpush1.msra.mxu0 0.0
    %1149 = vmatprep.subr.mxu0 0.0
    %1150 = vmatpush1.msra.mxu0 0.0
    %1151 = vmatprep.subr.mxu0 0.0
    %1152 = vmatpush1.msra.mxu0 0.0
    %1153 = vmatprep.subr.mxu0 0.0
    %1154 = vmatpush1.msra.mxu0 0.0
    %1155 = vmatprep.subr.mxu0 0.0
    %1156 = vmatpush1.msra.mxu0 %v377
    %1157 = vmatprep.subr.mxu0 0.0
    %1158 = vmatpush1.msra.mxu0 %v372
    %1159 = vmatprep.subr.mxu0 0.0
    %1160 = vmatpush1.msra.mxu0 %v367
    %1161 = vmatprep.subr.mxu0 0.0
    %1162 = vmatpush1.msra.mxu0 %v362
    %1163 = vmatprep.subr.mxu0 0.0
    %1164 = vmatpush2.msra.mxu0 0.0
    %1165 = vmatprep.subr.mxu0 0.0
    %1166 = vmatpush2.msra.mxu0 0.0
    %1167 = vmatprep.subr.mxu0 0.0
    %1168 = vmatpush2.msra.mxu0 0.0
    %1169 = vmatprep.subr.mxu0 0.0
    %1170 = vmatpush2.msra.mxu0 0.0
    %1171 = vmatprep.subr.mxu0 0.0
    %1172 = vmatpush2.msra.mxu0 0.0
    %1173 = vmatprep.subr.mxu0 0.0
    %1174 = vmatpush2.msra.mxu0 0.0
    %1175 = vmatprep.subr.mxu0 0.0
    %1176 = vmatpush2.msra.mxu0 0.0
    %1177 = vmatprep.subr.mxu0 0.0
    %1178 = vmatpush2.msra.mxu0 0.0
    %1179 = vmatprep.subr.mxu0 0.0
    %1180 = vmatpush2.msra.mxu0 0.0
    %1181 = vmatprep.subr.mxu0 0.0
    %1182 = vmatpush2.msra.mxu0 0.0
    %1183 = vmatprep.subr.mxu0 0.0
    %1184 = vmatpush2.msra.mxu0 0.0
    %1185 = vmatprep.subr.mxu0 0.0
    %1186 = vmatpush2.msra.mxu0 0.0
    %1187 = vmatprep.subr.mxu0 0.0
    %1188 = vmatpush2.msra.mxu0 0.0
    %1189 = vmatprep.subr.mxu0 0.0
    %1190 = vmatpush2.msra.mxu0 0.0
    %1191 = vmatprep.subr.mxu0 0.0
    %1192 = vmatpush2.msra.mxu0 0.0
    %1193 = vmatprep.subr.mxu0 0.0
    %1194 = vmatpush2.msra.mxu0 0.0
    %1195 = vmatprep.mubr.f32.mxu0 0.0
    %1196 = vmatmul.mubr.f32.gmra.mxu0 %v1129
    %v1197 = vpop.f32.mrf.mxu0
    %v1198 = vadd.f32 0.0, %v1197
    %v1199 = vpop.f32.mrf.mxu0
    %1200 = vdwg.mxu0
    %v1201 = vmul.f32 %v1198, %v495
    %vm1202 = vcmask 523264
    %v1204 = vsel %vm1202, %v1201, 0
    %1206 = vmatprep.subr.mxu0 0.0
    %1207 = vmatpush1.msra.mxu0 0.0
    %1208 = vmatprep.subr.mxu0 0.0
    %1209 = vmatpush1.msra.mxu0 0.0
    %1210 = vmatprep.subr.mxu0 0.0
    %1211 = vmatpush1.msra.mxu0 0.0
    %1212 = vmatprep.subr.mxu0 0.0
    %1213 = vmatpush1.msra.mxu0 0.0
    %1214 = vmatprep.subr.mxu0 0.0
    %1215 = vmatpush1.msra.mxu0 0.0
    %1216 = vmatprep.subr.mxu0 0.0
    %1217 = vmatpush1.msra.mxu0 0.0
    %1218 = vmatprep.subr.mxu0 0.0
    %1219 = vmatpush1.msra.mxu0 0.0
    %1220 = vmatprep.subr.mxu0 0.0
    %1221 = vmatpush1.msra.mxu0 0.0
    %1222 = vmatprep.subr.mxu0 0.0
    %1223 = vmatpush1.msra.mxu0 %v534
    %1224 = vmatprep.subr.mxu0 0.0
    %1225 = vmatpush1.msra.mxu0 %v533
    %1226 = vmatprep.subr.mxu0 0.0
    %1227 = vmatpush1.msra.mxu0 %v532
    %1228 = vmatprep.subr.mxu0 0.0
    %1229 = vmatpush1.msra.mxu0 %v531
    %1230 = vmatprep.subr.mxu0 0.0
    %1231 = vmatpush1.msra.mxu0 %v530
    %1232 = vmatprep.subr.mxu0 0.0
    %1233 = vmatpush1.msra.mxu0 %v529
    %1234 = vmatprep.subr.mxu0 0.0
    %1235 = vmatpush1.msra.mxu0 %v528
    %1236 = vmatprep.subr.mxu0 0.0
    %1237 = vmatpush1.msra.mxu0 %v527
    %1238 = vmatprep.subr.mxu0 0.0
    %1239 = vmatpush2.msra.mxu0 0.0
    %1240 = vmatprep.subr.mxu0 0.0
    %1241 = vmatpush2.msra.mxu0 0.0
    %1242 = vmatprep.subr.mxu0 0.0
    %1243 = vmatpush2.msra.mxu0 0.0
    %1244 = vmatprep.subr.mxu0 0.0
    %1245 = vmatpush2.msra.mxu0 0.0
    %1246 = vmatprep.subr.mxu0 0.0
    %1247 = vmatpush2.msra.mxu0 0.0
    %1248 = vmatprep.subr.mxu0 0.0
    %1249 = vmatpush2.msra.mxu0 0.0
    %1250 = vmatprep.subr.mxu0 0.0
    %1251 = vmatpush2.msra.mxu0 0.0
    %1252 = vmatprep.subr.mxu0 0.0
    %1253 = vmatpush2.msra.mxu0 0.0
    %1254 = vmatprep.subr.mxu0 0.0
    %1255 = vmatpush2.msra.mxu0 0.0
    %1256 = vmatprep.subr.mxu0 0.0
    %1257 = vmatpush2.msra.mxu0 0.0
    %1258 = vmatprep.subr.mxu0 0.0
    %1259 = vmatpush2.msra.mxu0 0.0
    %1260 = vmatprep.subr.mxu0 0.0
    %1261 = vmatpush2.msra.mxu0 0.0
    %1262 = vmatprep.subr.mxu0 0.0
    %1263 = vmatpush2.msra.mxu0 0.0
    %1264 = vmatprep.subr.mxu0 0.0
    %1265 = vmatpush2.msra.mxu0 0.0
    %1266 = vmatprep.subr.mxu0 0.0
    %1267 = vmatpush2.msra.mxu0 0.0
    %1268 = vmatprep.subr.mxu0 0.0
    %1269 = vmatpush2.msra.mxu0 0.0
    %1270 = vmatprep.mubr.f32.mxu0 0.0
    %1271 = vmatmul.mubr.f32.gmra.mxu0 %v1204
    %v1272 = vpop.f32.mrf.mxu0
    %v1273 = vadd.f32 0.0, %v1272
    %v1274 = vpop.f32.mrf.mxu0
    %1275 = vdwg.mxu0
    %vm1276 = vcmask 64512
    %v1277 = vsel %vm1276, %v1273, -inf
    %1278 = vmax.xlane.f32.xlu0 %v1277
    %v1279 = vpop.xlane.xlu0 %1278
    %v1280 = vsub.f32 %v1273, %v1279
    %v1281 = vmul.f32 %v1280, 1.442695
    %v1282 = vpow.pop %v1281
    %v1283 = vsel %vm1276, %v1282, 0.0
    %1284 = vadd.xlane.f32.xlu0 %v1283
    %v1285 = vpop.xlane.xlu0 %1284
    %v1286 = vrcp.pop %v1285
    %v1287 = vmul.f32 %v1285, %v1286
    %v1288 = vsub.f32 2.0, %v1287
    %v1289 = vmul.f32 %v1286, %v1288
    %v1290 = vmul.f32 %v1282, %v1289
    %1292 = vrot.lane.b32.xlu0 %v1290, 8
    %v1293 = vpop.permute.xlu0 %1292
    %1295 = vrot.lane.b32.xlu0 %v1290, 16
    %v1296 = vpop.permute.xlu0 %1295
    %1298 = vrot.lane.b32.xlu0 %v1290, 24
    %v1299 = vpop.permute.xlu0 %1298
    %1301 = vrot.lane.b32.xlu0 %v1290, 32
    %v1302 = vpop.permute.xlu0 %1301
    %1304 = vrot.lane.b32.xlu0 %v1290, 40
    %v1305 = vpop.permute.xlu0 %1304
    %1307 = vrot.lane.b32.xlu0 %v1290, 48
    %v1308 = vpop.permute.xlu0 %1307
    %1310 = vrot.lane.b32.xlu0 %v1290, 56
    %v1311 = vpop.permute.xlu0 %1310
    %v1313 = vsel %vm1276, %v1290, %v1293
    %v1314 = vsel %vm579, %v1313, %v1296
    %vm1315 = vcmask 195584
    %v1316 = vsel %vm1315, %v1314, %v1299
    %v1317 = vsel %vm266, %v1316, %v1302
    %vm1318 = vcmask 326656
    %v1319 = vsel %vm1318, %v1317, %v1305
    %vm1320 = vcmask 392192
    %v1321 = vsel %vm1320, %v1319, %v1308
    %vm1322 = vcmask 457728
    %v1323 = vsel %vm1322, %v1321, %v1311
    %v1324 = vmul.f32 %v1323, %v495
    %1325 = vmatprep.subr.mxu0 0.0
    %1326 = vmatpush1.msra.mxu0 0.0
    %1327 = vmatprep.subr.mxu0 0.0
    %1328 = vmatpush1.msra.mxu0 0.0
    %1329 = vmatprep.subr.mxu0 0.0
    %1330 = vmatpush1.msra.mxu0 0.0
    %1331 = vmatprep.subr.mxu0 0.0
    %1332 = vmatpush1.msra.mxu0 0.0
    %1333 = vmatprep.subr.mxu0 0.0
    %1334 = vmatpush1.msra.mxu0 0.0
    %1335 = vmatprep.subr.mxu0 0.0
    %1336 = vmatpush1.msra.mxu0 0.0
    %1337 = vmatprep.subr.mxu0 0.0
    %1338 = vmatpush1.msra.mxu0 0.0
    %1339 = vmatprep.subr.mxu0 0.0
    %1340 = vmatpush1.msra.mxu0 0.0
    %1341 = vmatprep.subr.mxu0 0.0
    %1342 = vmatpush1.msra.mxu0 0.0
    %1343 = vmatprep.subr.mxu0 0.0
    %1344 = vmatpush1.msra.mxu0 0.0
    %1345 = vmatprep.subr.mxu0 0.0
    %1346 = vmatpush1.msra.mxu0 0.0
    %1347 = vmatprep.subr.mxu0 0.0
    %1348 = vmatpush1.msra.mxu0 0.0
    %1349 = vmatprep.subr.mxu0 0.0
    %1350 = vmatpush1.msra.mxu0 %v130
    %1351 = vmatprep.subr.mxu0 0.0
    %1352 = vmatpush1.msra.mxu0 %v129
    %1353 = vmatprep.subr.mxu0 0.0
    %1354 = vmatpush1.msra.mxu0 %v128
    %1355 = vmatprep.subr.mxu0 0.0
    %1356 = vmatpush1.msra.mxu0 %v127
    %1357 = vmatprep.subr.mxu0 0.0
    %1358 = vmatpush2.msra.mxu0 0.0
    %1359 = vmatprep.subr.mxu0 0.0
    %1360 = vmatpush2.msra.mxu0 0.0
    %1361 = vmatprep.subr.mxu0 0.0
    %1362 = vmatpush2.msra.mxu0 0.0
    %1363 = vmatprep.subr.mxu0 0.0
    %1364 = vmatpush2.msra.mxu0 0.0
    %1365 = vmatprep.subr.mxu0 0.0
    %1366 = vmatpush2.msra.mxu0 0.0
    %1367 = vmatprep.subr.mxu0 0.0
    %1368 = vmatpush2.msra.mxu0 0.0
    %1369 = vmatprep.subr.mxu0 0.0
    %1370 = vmatpush2.msra.mxu0 0.0
    %1371 = vmatprep.subr.mxu0 0.0
    %1372 = vmatpush2.msra.mxu0 0.0
    %1373 = vmatprep.subr.mxu0 0.0
    %1374 = vmatpush2.msra.mxu0 0.0
    %1375 = vmatprep.subr.mxu0 0.0
    %1376 = vmatpush2.msra.mxu0 0.0
    %1377 = vmatprep.subr.mxu0 0.0
    %1378 = vmatpush2.msra.mxu0 0.0
    %1379 = vmatprep.subr.mxu0 0.0
    %1380 = vmatpush2.msra.mxu0 0.0
    %1381 = vmatprep.subr.mxu0 0.0
    %1382 = vmatpush2.msra.mxu0 0.0
    %1383 = vmatprep.subr.mxu0 0.0
    %1384 = vmatpush2.msra.mxu0 0.0
    %1385 = vmatprep.subr.mxu0 0.0
    %1386 = vmatpush2.msra.mxu0 0.0
    %1387 = vmatprep.subr.mxu0 0.0
    %1388 = vmatpush2.msra.mxu0 0.0
    %1389 = vmatprep.mubr.f32.mxu0 0.0
    %1390 = vmatmul.mubr.f32.gmra.mxu0 %v1129
    %v1391 = vpop.f32.mrf.mxu0
    %v1392 = vadd.f32 0.0, %v1391
    %v1393 = vpop.f32.mrf.mxu0
    %1394 = vdwg.mxu0
    %v1396 = vsel %vm1202, %v1324, 0
    %1398 = vmatprep.subr.mxu0 0.0
    %1399 = vmatpush1.msra.mxu0 0.0
    %1400 = vmatprep.subr.mxu0 0.0
    %1401 = vmatpush1.msra.mxu0 0.0
    %1402 = vmatprep.subr.mxu0 0.0
    %1403 = vmatpush1.msra.mxu0 0.0
    %1404 = vmatprep.subr.mxu0 0.0
    %1405 = vmatpush1.msra.mxu0 0.0
    %1406 = vmatprep.subr.mxu0 0.0
    %1407 = vmatpush1.msra.mxu0 0.0
    %1408 = vmatprep.subr.mxu0 0.0
    %1409 = vmatpush1.msra.mxu0 0.0
    %1410 = vmatprep.subr.mxu0 0.0
    %1411 = vmatpush1.msra.mxu0 0.0
    %1412 = vmatprep.subr.mxu0 0.0
    %1413 = vmatpush1.msra.mxu0 0.0
    %1414 = vmatprep.subr.mxu0 0.0
    %1415 = vmatpush1.msra.mxu0 %v482
    %1416 = vmatprep.subr.mxu0 0.0
    %1417 = vmatpush1.msra.mxu0 %v477
    %1418 = vmatprep.subr.mxu0 0.0
    %1419 = vmatpush1.msra.mxu0 %v472
    %1420 = vmatprep.subr.mxu0 0.0
    %1421 = vmatpush1.msra.mxu0 %v467
    %1422 = vmatprep.subr.mxu0 0.0
    %1423 = vmatpush1.msra.mxu0 %v462
    %1424 = vmatprep.subr.mxu0 0.0
    %1425 = vmatpush1.msra.mxu0 %v457
    %1426 = vmatprep.subr.mxu0 0.0
    %1427 = vmatpush1.msra.mxu0 %v452
    %1428 = vmatprep.subr.mxu0 0.0
    %1429 = vmatpush1.msra.mxu0 %v447
    %1430 = vmatprep.subr.mxu0 0.0
    %1431 = vmatpush2.msra.mxu0 0.0
    %1432 = vmatprep.subr.mxu0 0.0
    %1433 = vmatpush2.msra.mxu0 0.0
    %1434 = vmatprep.subr.mxu0 0.0
    %1435 = vmatpush2.msra.mxu0 0.0
    %1436 = vmatprep.subr.mxu0 0.0
    %1437 = vmatpush2.msra.mxu0 0.0
    %1438 = vmatprep.subr.mxu0 0.0
    %1439 = vmatpush2.msra.mxu0 0.0
    %1440 = vmatprep.subr.mxu0 0.0
    %1441 = vmatpush2.msra.mxu0 0.0
    %1442 = vmatprep.subr.mxu0 0.0
    %1443 = vmatpush2.msra.mxu0 0.0
    %1444 = vmatprep.subr.mxu0 0.0
    %1445 = vmatpush2.msra.mxu0 0.0
    %1446 = vmatprep.subr.mxu0 0.0
    %1447 = vmatpush2.msra.mxu0 0.0
    %1448 = vmatprep.subr.mxu0 0.0
    %1449 = vmatpush2.msra.mxu0 0.0
    %1450 = vmatprep.subr.mxu0 0.0
    %1451 = vmatpush2.msra.mxu0 0.0
    %1452 = vmatprep.subr.mxu0 0.0
    %1453 = vmatpush2.msra.mxu0 0.0
    %1454 = vmatprep.subr.mxu0 0.0
    %1455 = vmatpush2.msra.mxu0 0.0
    %1456 = vmatprep.subr.mxu0 0.0
    %1457 = vmatpush2.msra.mxu0 0.0
    %1458 = vmatprep.subr.mxu0 0.0
    %1459 = vmatpush2.msra.mxu0 0.0
    %1460 = vmatprep.subr.mxu0 0.0
    %1461 = vmatpush2.msra.mxu0 0.0
    %1462 = vmatprep.mubr.f32.mxu0 0.0
    %1463 = vmatmul.mubr.f32.gmra.mxu0 %v1396
    %v1464 = vpop.f32.mrf.mxu0
    %v1465 = vadd.f32 %v1392, %v1464
    %v1466 = vpop.f32.mrf.mxu0
    %1467 = vdwg.mxu0
    %v1468 = vtanh.pop %v1465
    %1469 = vst.msk [vmem:[#allocation10] sm:$0xff] %vm266, %v1468
    %v1471 = vsel %vm266, %v1468, 0
    %1473 = vmatprep.subr.mxu0 0.0
    %1474 = vmatpush1.msra.mxu0 0.0
    %1475 = vmatprep.subr.mxu0 0.0
    %1476 = vmatpush1.msra.mxu0 0.0
    %1477 = vmatprep.subr.mxu0 0.0
    %1478 = vmatpush1.msra.mxu0 0.0
    %1479 = vmatprep.subr.mxu0 0.0
    %1480 = vmatpush1.msra.mxu0 0.0
    %1481 = vmatprep.subr.mxu0 0.0
    %1482 = vmatpush1.msra.mxu0 0.0
    %1483 = vmatprep.subr.mxu0 0.0
    %1484 = vmatpush1.msra.mxu0 0.0
    %1485 = vmatprep.subr.mxu0 0.0
    %1486 = vmatpush1.msra.mxu0 0.0
    %1487 = vmatprep.subr.mxu0 0.0
    %1488 = vmatpush1.msra.mxu0 0.0
    %1489 = vmatprep.subr.mxu0 0.0
    %1490 = vmatpush1.msra.mxu0 0.0
    %1491 = vmatprep.subr.mxu0 0.0
    %1492 = vmatpush1.msra.mxu0 0.0
    %1493 = vmatprep.subr.mxu0 0.0
    %1494 = vmatpush1.msra.mxu0 0.0
    %1495 = vmatprep.subr.mxu0 0.0
    %1496 = vmatpush1.msra.mxu0 0.0
    %1497 = vmatprep.subr.mxu0 0.0
    %1498 = vmatpush1.msra.mxu0 %v96
    %1499 = vmatprep.subr.mxu0 0.0
    %1500 = vmatpush1.msra.mxu0 %v95
    %1501 = vmatprep.subr.mxu0 0.0
    %1502 = vmatpush1.msra.mxu0 %v94
    %1503 = vmatprep.subr.mxu0 0.0
    %1504 = vmatpush1.msra.mxu0 %v93
    %1505 = vmatprep.subr.mxu0 0.0
    %1506 = vmatpush2.msra.mxu0 0.0
    %1507 = vmatprep.subr.mxu0 0.0
    %1508 = vmatpush2.msra.mxu0 0.0
    %1509 = vmatprep.subr.mxu0 0.0
    %1510 = vmatpush2.msra.mxu0 0.0
    %1511 = vmatprep.subr.mxu0 0.0
    %1512 = vmatpush2.msra.mxu0 0.0
    %1513 = vmatprep.subr.mxu0 0.0
    %1514 = vmatpush2.msra.mxu0 0.0
    %1515 = vmatprep.subr.mxu0 0.0
    %1516 = vmatpush2.msra.mxu0 0.0
    %1517 = vmatprep.subr.mxu0 0.0
    %1518 = vmatpush2.msra.mxu0 0.0
    %1519 = vmatprep.subr.mxu0 0.0
    %1520 = vmatpush2.msra.mxu0 0.0
    %1521 = vmatprep.subr.mxu0 0.0
    %1522 = vmatpush2.msra.mxu0 0.0
    %1523 = vmatprep.subr.mxu0 0.0
    %1524 = vmatpush2.msra.mxu0 0.0
    %1525 = vmatprep.subr.mxu0 0.0
    %1526 = vmatpush2.msra.mxu0 0.0
    %1527 = vmatprep.subr.mxu0 0.0
    %1528 = vmatpush2.msra.mxu0 0.0
    %1529 = vmatprep.subr.mxu0 0.0
    %1530 = vmatpush2.msra.mxu0 0.0
    %1531 = vmatprep.subr.mxu0 0.0
    %1532 = vmatpush2.msra.mxu0 0.0
    %1533 = vmatprep.subr.mxu0 0.0
    %1534 = vmatpush2.msra.mxu0 0.0
    %1535 = vmatprep.subr.mxu0 0.0
    %1536 = vmatpush2.msra.mxu0 0.0
    %1537 = vmatprep.mubr.f32.mxu0 0.0
    %1538 = vmatmul.mubr.f32.gmra.mxu0 %v1471
    %v1539 = vpop.f32.mrf.mxu0
    %v1540 = vadd.f32 0.0, %v1539
    %v1541 = vpop.f32.mrf.mxu0
    %1542 = vdwg.mxu0
    %v1544 = vsel %vm266, %v670, 0
    %1546 = vmatprep.subr.mxu0 0.0
    %1547 = vmatpush1.msra.mxu0 0.0
    %1548 = vmatprep.subr.mxu0 0.0
    %1549 = vmatpush1.msra.mxu0 0.0
    %1550 = vmatprep.subr.mxu0 0.0
    %1551 = vmatpush1.msra.mxu0 0.0
    %1552 = vmatprep.subr.mxu0 0.0
    %1553 = vmatpush1.msra.mxu0 0.0
    %1554 = vmatprep.subr.mxu0 0.0
    %1555 = vmatpush1.msra.mxu0 0.0
    %1556 = vmatprep.subr.mxu0 0.0
    %1557 = vmatpush1.msra.mxu0 0.0
    %1558 = vmatprep.subr.mxu0 0.0
    %1559 = vmatpush1.msra.mxu0 0.0
    %1560 = vmatprep.subr.mxu0 0.0
    %1561 = vmatpush1.msra.mxu0 0.0
    %1562 = vmatprep.subr.mxu0 0.0
    %1563 = vmatpush1.msra.mxu0 0.0
    %1564 = vmatprep.subr.mxu0 0.0
    %1565 = vmatpush1.msra.mxu0 0.0
    %1566 = vmatprep.subr.mxu0 0.0
    %1567 = vmatpush1.msra.mxu0 0.0
    %1568 = vmatprep.subr.mxu0 0.0
    %1569 = vmatpush1.msra.mxu0 0.0
    %1570 = vmatprep.subr.mxu0 0.0
    %1571 = vmatpush1.msra.mxu0 %v92
    %1572 = vmatprep.subr.mxu0 0.0
    %1573 = vmatpush1.msra.mxu0 %v91
    %1574 = vmatprep.subr.mxu0 0.0
    %1575 = vmatpush1.msra.mxu0 %v90
    %1576 = vmatprep.subr.mxu0 0.0
    %1577 = vmatpush1.msra.mxu0 %v89
    %1578 = vmatprep.subr.mxu0 0.0
    %1579 = vmatpush2.msra.mxu0 0.0
    %1580 = vmatprep.subr.mxu0 0.0
    %1581 = vmatpush2.msra.mxu0 0.0
    %1582 = vmatprep.subr.mxu0 0.0
    %1583 = vmatpush2.msra.mxu0 0.0
    %1584 = vmatprep.subr.mxu0 0.0
    %1585 = vmatpush2.msra.mxu0 0.0
    %1586 = vmatprep.subr.mxu0 0.0
    %1587 = vmatpush2.msra.mxu0 0.0
    %1588 = vmatprep.subr.mxu0 0.0
    %1589 = vmatpush2.msra.mxu0 0.0
    %1590 = vmatprep.subr.mxu0 0.0
    %1591 = vmatpush2.msra.mxu0 0.0
    %1592 = vmatprep.subr.mxu0 0.0
    %1593 = vmatpush2.msra.mxu0 0.0
    %1594 = vmatprep.subr.mxu0 0.0
    %1595 = vmatpush2.msra.mxu0 0.0
    %1596 = vmatprep.subr.mxu0 0.0
    %1597 = vmatpush2.msra.mxu0 0.0
    %1598 = vmatprep.subr.mxu0 0.0
    %1599 = vmatpush2.msra.mxu0 0.0
    %1600 = vmatprep.subr.mxu0 0.0
    %1601 = vmatpush2.msra.mxu0 0.0
    %1602 = vmatprep.subr.mxu0 0.0
    %1603 = vmatpush2.msra.mxu0 0.0
    %1604 = vmatprep.subr.mxu0 0.0
    %1605 = vmatpush2.msra.mxu0 0.0
    %1606 = vmatprep.subr.mxu0 0.0
    %1607 = vmatpush2.msra.mxu0 0.0
    %1608 = vmatprep.subr.mxu0 0.0
    %1609 = vmatpush2.msra.mxu0 0.0
    %1610 = vmatprep.mubr.f32.mxu0 0.0
    %1611 = vmatmul.mubr.f32.gmra.mxu0 %v1544
    %v1612 = vpop.f32.mrf.mxu0
    %v1613 = vadd.f32 %v1540, %v1612
    %v1614 = vpop.f32.mrf.mxu0
    %1615 = vdwg.mxu0
    %1616 = vmatprep.subr.mxu0 0.0
    %1617 = vmatpush1.msra.mxu0 0.0
    %1618 = vmatprep.subr.mxu0 0.0
    %1619 = vmatpush1.msra.mxu0 0.0
    %1620 = vmatprep.subr.mxu0 0.0
    %1621 = vmatpush1.msra.mxu0 0.0
    %1622 = vmatprep.subr.mxu0 0.0
    %1623 = vmatpush1.msra.mxu0 0.0
    %1624 = vmatprep.subr.mxu0 0.0
    %1625 = vmatpush1.msra.mxu0 0.0
    %1626 = vmatprep.subr.mxu0 0.0
    %1627 = vmatpush1.msra.mxu0 0.0
    %1628 = vmatprep.subr.mxu0 0.0
    %1629 = vmatpush1.msra.mxu0 0.0
    %1630 = vmatprep.subr.mxu0 0.0
    %1631 = vmatpush1.msra.mxu0 0.0
    %1632 = vmatprep.subr.mxu0 0.0
    %1633 = vmatpush1.msra.mxu0 0.0
    %1634 = vmatprep.subr.mxu0 0.0
    %1635 = vmatpush1.msra.mxu0 0.0
    %1636 = vmatprep.subr.mxu0 0.0
    %1637 = vmatpush1.msra.mxu0 0.0
    %1638 = vmatprep.subr.mxu0 0.0
    %1639 = vmatpush1.msra.mxu0 0.0
    %1640 = vmatprep.subr.mxu0 0.0
    %1641 = vmatpush1.msra.mxu0 %v100
    %1642 = vmatprep.subr.mxu0 0.0
    %1643 = vmatpush1.msra.mxu0 %v99
    %1644 = vmatprep.subr.mxu0 0.0
    %1645 = vmatpush1.msra.mxu0 %v98
    %1646 = vmatprep.subr.mxu0 0.0
    %1647 = vmatpush1.msra.mxu0 %v97
    %1648 = vmatprep.subr.mxu0 0.0
    %1649 = vmatpush2.msra.mxu0 0.0
    %1650 = vmatprep.subr.mxu0 0.0
    %1651 = vmatpush2.msra.mxu0 0.0
    %1652 = vmatprep.subr.mxu0 0.0
    %1653 = vmatpush2.msra.mxu0 0.0
    %1654 = vmatprep.subr.mxu0 0.0
    %1655 = vmatpush2.msra.mxu0 0.0
    %1656 = vmatprep.subr.mxu0 0.0
    %1657 = vmatpush2.msra.mxu0 0.0
    %1658 = vmatprep.subr.mxu0 0.0
    %1659 = vmatpush2.msra.mxu0 0.0
    %1660 = vmatprep.subr.mxu0 0.0
    %1661 = vmatpush2.msra.mxu0 0.0
    %1662 = vmatprep.subr.mxu0 0.0
    %1663 = vmatpush2.msra.mxu0 0.0
    %1664 = vmatprep.subr.mxu0 0.0
    %1665 = vmatpush2.msra.mxu0 0.0
    %1666 = vmatprep.subr.mxu0 0.0
    %1667 = vmatpush2.msra.mxu0 0.0
    %1668 = vmatprep.subr.mxu0 0.0
    %1669 = vmatpush2.msra.mxu0 0.0
    %1670 = vmatprep.subr.mxu0 0.0
    %1671 = vmatpush2.msra.mxu0 0.0
    %1672 = vmatprep.subr.mxu0 0.0
    %1673 = vmatpush2.msra.mxu0 0.0
    %1674 = vmatprep.subr.mxu0 0.0
    %1675 = vmatpush2.msra.mxu0 0.0
    %1676 = vmatprep.subr.mxu0 0.0
    %1677 = vmatpush2.msra.mxu0 0.0
    %1678 = vmatprep.subr.mxu0 0.0
    %1679 = vmatpush2.msra.mxu0 0.0
    %1680 = vmatprep.mubr.f32.mxu0 0.0
    %1681 = vmatmul.mubr.f32.gmra.mxu0 %v1025
    %v1682 = vpop.f32.mrf.mxu0
    %v1683 = vadd.f32 0.0, %v1682
    %v1684 = vpop.f32.mrf.mxu0
    %1685 = vdwg.mxu0
    %v1686 = vadd.f32 %v1613, %v1683
    %v1687 = vadd.f32 %v1686, %v113
    %v1688 = vxor.u32 %v1687, 2147483648
    %v1689 = vmul.f32 %v1688, 1.442695
    %v1690 = vpow.pop %v1689
    %v1691 = vadd.f32 %v1690, 1.0
    %v1692 = vrcp.pop %v1691
    %v1693 = vmul.f32 1.0, %v1692
    %v1694 = vtanh.pop %v1687
    %v1695 = vmul.f32 %v1693, %v942
    %1697 = vrot.lane.b32.xlu0 %v1694, 64
    %v1698 = vpop.permute.xlu0 %1697
    %v1700 = vmul.f32 %v1693, %v1698
    %1702 = vrot.lane.b32.xlu0 %v1700, 32
    %v1703 = vpop.permute.xlu0 %1702
    %v1705 = vadd.f32 %v1695, %v1703
    %v1706 = vtanh.pop %v1705
    %1708 = vrot.lane.b32.xlu0 %v1706, 64
    %v1709 = vpop.permute.xlu0 %1708
    %v1711 = vmul.f32 %v1693, %v1709
    %1712 = vmatprep.subr.mxu0 0.0
    %1713 = vmatpush1.msra.mxu0 0.0
    %1714 = vmatprep.subr.mxu0 0.0
    %1715 = vmatpush1.msra.mxu0 0.0
    %1716 = vmatprep.subr.mxu0 0.0
    %1717 = vmatpush1.msra.mxu0 0.0
    %1718 = vmatprep.subr.mxu0 0.0
    %1719 = vmatpush1.msra.mxu0 0.0
    %1720 = vmatprep.subr.mxu0 0.0
    %1721 = vmatpush1.msra.mxu0 0.0
    %1722 = vmatprep.subr.mxu0 0.0
    %1723 = vmatpush1.msra.mxu0 0.0
    %1724 = vmatprep.subr.mxu0 0.0
    %1725 = vmatpush1.msra.mxu0 0.0
    %1726 = vmatprep.subr.mxu0 0.0
    %1727 = vmatpush1.msra.mxu0 0.0
    %1728 = vmatprep.subr.mxu0 0.0
    %1729 = vmatpush1.msra.mxu0 0.0
    %1730 = vmatprep.subr.mxu0 0.0
    %1731 = vmatpush1.msra.mxu0 0.0
    %1732 = vmatprep.subr.mxu0 0.0
    %1733 = vmatpush1.msra.mxu0 0.0
    %1734 = vmatprep.subr.mxu0 0.0
    %1735 = vmatpush1.msra.mxu0 0.0
    %1736 = vmatprep.subr.mxu0 0.0
    %1737 = vmatpush1.msra.mxu0 %v108
    %1738 = vmatprep.subr.mxu0 0.0
    %1739 = vmatpush1.msra.mxu0 %v107
    %1740 = vmatprep.subr.mxu0 0.0
    %1741 = vmatpush1.msra.mxu0 %v106
    %1742 = vmatprep.subr.mxu0 0.0
    %1743 = vmatpush1.msra.mxu0 %v105
    %1744 = vmatprep.subr.mxu0 0.0
    %1745 = vmatpush2.msra.mxu0 0.0
    %1746 = vmatprep.subr.mxu0 0.0
    %1747 = vmatpush2.msra.mxu0 0.0
    %1748 = vmatprep.subr.mxu0 0.0
    %1749 = vmatpush2.msra.mxu0 0.0
    %1750 = vmatprep.subr.mxu0 0.0
    %1751 = vmatpush2.msra.mxu0 0.0
    %1752 = vmatprep.subr.mxu0 0.0
    %1753 = vmatpush2.msra.mxu0 0.0
    %1754 = vmatprep.subr.mxu0 0.0
    %1755 = vmatpush2.msra.mxu0 0.0
    %1756 = vmatprep.subr.mxu0 0.0
    %1757 = vmatpush2.msra.mxu0 0.0
    %1758 = vmatprep.subr.mxu0 0.0
    %1759 = vmatpush2.msra.mxu0 0.0
    %1760 = vmatprep.subr.mxu0 0.0
    %1761 = vmatpush2.msra.mxu0 0.0
    %1762 = vmatprep.subr.mxu0 0.0
    %1763 = vmatpush2.msra.mxu0 0.0
    %1764 = vmatprep.subr.mxu0 0.0
    %1765 = vmatpush2.msra.mxu0 0.0
    %1766 = vmatprep.subr.mxu0 0.0
    %1767 = vmatpush2.msra.mxu0 0.0
    %1768 = vmatprep.subr.mxu0 0.0
    %1769 = vmatpush2.msra.mxu0 0.0
    %1770 = vmatprep.subr.mxu0 0.0
    %1771 = vmatpush2.msra.mxu0 0.0
    %1772 = vmatprep.subr.mxu0 0.0
    %1773 = vmatpush2.msra.mxu0 0.0
    %1774 = vmatprep.subr.mxu0 0.0
    %1775 = vmatpush2.msra.mxu0 0.0
    %1776 = vmatprep.mubr.f32.mxu0 0.0
    %1777 = vmatmul.mubr.f32.gmra.mxu0 %v1129
    %v1778 = vpop.f32.mrf.mxu0
    %v1779 = vadd.f32 0.0, %v1778
    %v1780 = vpop.f32.mrf.mxu0
    %1781 = vdwg.mxu0
    %1783 = vrot.lane.b32.xlu0 %v1711, 32
    %v1784 = vpop.permute.xlu0 %1783
    %v1785 = vsel %vm266, %v1784, 0
    %1787 = vmatprep.subr.mxu0 0.0
    %1788 = vmatpush1.msra.mxu0 0.0
    %1789 = vmatprep.subr.mxu0 0.0
    %1790 = vmatpush1.msra.mxu0 0.0
    %1791 = vmatprep.subr.mxu0 0.0
    %1792 = vmatpush1.msra.mxu0 0.0
    %1793 = vmatprep.subr.mxu0 0.0
    %1794 = vmatpush1.msra.mxu0 0.0
    %1795 = vmatprep.subr.mxu0 0.0
    %1796 = vmatpush1.msra.mxu0 0.0
    %1797 = vmatprep.subr.mxu0 0.0
    %1798 = vmatpush1.msra.mxu0 0.0
    %1799 = vmatprep.subr.mxu0 0.0
    %1800 = vmatpush1.msra.mxu0 0.0
    %1801 = vmatprep.subr.mxu0 0.0
    %1802 = vmatpush1.msra.mxu0 0.0
    %1803 = vmatprep.subr.mxu0 0.0
    %1804 = vmatpush1.msra.mxu0 0.0
    %1805 = vmatprep.subr.mxu0 0.0
    %1806 = vmatpush1.msra.mxu0 0.0
    %1807 = vmatprep.subr.mxu0 0.0
    %1808 = vmatpush1.msra.mxu0 0.0
    %1809 = vmatprep.subr.mxu0 0.0
    %1810 = vmatpush1.msra.mxu0 0.0
    %1811 = vmatprep.subr.mxu0 0.0
    %1812 = vmatpush1.msra.mxu0 %v104
    %1813 = vmatprep.subr.mxu0 0.0
    %1814 = vmatpush1.msra.mxu0 %v103
    %1815 = vmatprep.subr.mxu0 0.0
    %1816 = vmatpush1.msra.mxu0 %v102
    %1817 = vmatprep.subr.mxu0 0.0
    %1818 = vmatpush1.msra.mxu0 %v101
    %1819 = vmatprep.subr.mxu0 0.0
    %1820 = vmatpush2.msra.mxu0 0.0
    %1821 = vmatprep.subr.mxu0 0.0
    %1822 = vmatpush2.msra.mxu0 0.0
    %1823 = vmatprep.subr.mxu0 0.0
    %1824 = vmatpush2.msra.mxu0 0.0
    %1825 = vmatprep.subr.mxu0 0.0
    %1826 = vmatpush2.msra.mxu0 0.0
    %1827 = vmatprep.subr.mxu0 0.0
    %1828 = vmatpush2.msra.mxu0 0.0
    %1829 = vmatprep.subr.mxu0 0.0
    %1830 = vmatpush2.msra.mxu0 0.0
    %1831 = vmatprep.subr.mxu0 0.0
    %1832 = vmatpush2.msra.mxu0 0.0
    %1833 = vmatprep.subr.mxu0 0.0
    %1834 = vmatpush2.msra.mxu0 0.0
    %1835 = vmatprep.subr.mxu0 0.0
    %1836 = vmatpush2.msra.mxu0 0.0
    %1837 = vmatprep.subr.mxu0 0.0
    %1838 = vmatpush2.msra.mxu0 0.0
    %1839 = vmatprep.subr.mxu0 0.0
    %1840 = vmatpush2.msra.mxu0 0.0
    %1841 = vmatprep.subr.mxu0 0.0
    %1842 = vmatpush2.msra.mxu0 0.0
    %1843 = vmatprep.subr.mxu0 0.0
    %1844 = vmatpush2.msra.mxu0 0.0
    %1845 = vmatprep.subr.mxu0 0.0
    %1846 = vmatpush2.msra.mxu0 0.0
    %1847 = vmatprep.subr.mxu0 0.0
    %1848 = vmatpush2.msra.mxu0 0.0
    %1849 = vmatprep.subr.mxu0 0.0
    %1850 = vmatpush2.msra.mxu0 0.0
    %1851 = vmatprep.mubr.f32.mxu0 0.0
    %1852 = vmatmul.mubr.f32.gmra.mxu0 %v1785
    %v1853 = vpop.f32.mrf.mxu0
    %v1854 = vadd.f32 %v1779, %v1853
    %v1855 = vpop.f32.mrf.mxu0
    %1856 = vdwg.mxu0
    %v1857 = vadd.f32 %v1854, %v118
    %v1858 = vxor.u32 %v1857, 2147483648
    %v1859 = vmul.f32 %v1858, 1.442695
    %v1860 = vpow.pop %v1859
    %v1861 = vadd.f32 %v1860, 1.0
    %v1862 = vrcp.pop %v1861
    %v1863 = vmul.f32 1.0, %v1862
    %v1864 = vtanh.pop %v1857
    %v1865 = vmul.f32 %v1863, %v1119
    %1867 = vrot.lane.b32.xlu0 %v1864, 64
    %v1868 = vpop.permute.xlu0 %1867
    %v1870 = vmul.f32 %v1863, %v1868
    %1872 = vrot.lane.b32.xlu0 %v1870, 32
    %v1873 = vpop.permute.xlu0 %1872
    %v1875 = vadd.f32 %v1865, %v1873
    %v1876 = vtanh.pop %v1875
    %1878 = vrot.lane.b32.xlu0 %v1876, 64
    %v1879 = vpop.permute.xlu0 %1878
    %v1881 = vmul.f32 %v1863, %v1879
    %1883 = vrot.lane.b32.xlu0 %v1881, 32
    %v1884 = vpop.permute.xlu0 %1883
    %v1885 = vsel %vm266, %v1884, 0
    %1887 = vmatprep.subr.mxu0 0.0
    %1888 = vmatpush1.msra.mxu0 0.0
    %1889 = vmatprep.subr.mxu0 0.0
    %1890 = vmatpush1.msra.mxu0 0.0
    %1891 = vmatprep.subr.mxu0 0.0
    %1892 = vmatpush1.msra.mxu0 0.0
    %1893 = vmatprep.subr.mxu0 0.0
    %1894 = vmatpush1.msra.mxu0 0.0
    %1895 = vmatprep.subr.mxu0 0.0
    %1896 = vmatpush1.msra.mxu0 0.0
    %1897 = vmatprep.subr.mxu0 0.0
    %1898 = vmatpush1.msra.mxu0 0.0
    %1899 = vmatprep.subr.mxu0 0.0
    %1900 = vmatpush1.msra.mxu0 0.0
    %1901 = vmatprep.subr.mxu0 0.0
    %1902 = vmatpush1.msra.mxu0 0.0
    %1903 = vmatprep.subr.mxu0 0.0
    %1904 = vmatpush1.msra.mxu0 0.0
    %1905 = vmatprep.subr.mxu0 0.0
    %1906 = vmatpush1.msra.mxu0 0.0
    %1907 = vmatprep.subr.mxu0 0.0
    %1908 = vmatpush1.msra.mxu0 0.0
    %1909 = vmatprep.subr.mxu0 0.0
    %1910 = vmatpush1.msra.mxu0 0.0
    %1911 = vmatprep.subr.mxu0 0.0
    %1912 = vmatpush1.msra.mxu0 %v377
    %1913 = vmatprep.subr.mxu0 0.0
    %1914 = vmatpush1.msra.mxu0 %v372
    %1915 = vmatprep.subr.mxu0 0.0
    %1916 = vmatpush1.msra.mxu0 %v367
    %1917 = vmatprep.subr.mxu0 0.0
    %1918 = vmatpush1.msra.mxu0 %v362
    %1919 = vmatprep.subr.mxu0 0.0
    %1920 = vmatpush2.msra.mxu0 0.0
    %1921 = vmatprep.subr.mxu0 0.0
    %1922 = vmatpush2.msra.mxu0 0.0
    %1923 = vmatprep.subr.mxu0 0.0
    %1924 = vmatpush2.msra.mxu0 0.0
    %1925 = vmatprep.subr.mxu0 0.0
    %1926 = vmatpush2.msra.mxu0 0.0
    %1927 = vmatprep.subr.mxu0 0.0
    %1928 = vmatpush2.msra.mxu0 0.0
    %1929 = vmatprep.subr.mxu0 0.0
    %1930 = vmatpush2.msra.mxu0 0.0
    %1931 = vmatprep.subr.mxu0 0.0
    %1932 = vmatpush2.msra.mxu0 0.0
    %1933 = vmatprep.subr.mxu0 0.0
    %1934 = vmatpush2.msra.mxu0 0.0
    %1935 = vmatprep.subr.mxu0 0.0
    %1936 = vmatpush2.msra.mxu0 0.0
    %1937 = vmatprep.subr.mxu0 0.0
    %1938 = vmatpush2.msra.mxu0 0.0
    %1939 = vmatprep.subr.mxu0 0.0
    %1940 = vmatpush2.msra.mxu0 0.0
    %1941 = vmatprep.subr.mxu0 0.0
    %1942 = vmatpush2.msra.mxu0 0.0
    %1943 = vmatprep.subr.mxu0 0.0
    %1944 = vmatpush2.msra.mxu0 0.0
    %1945 = vmatprep.subr.mxu0 0.0
    %1946 = vmatpush2.msra.mxu0 0.0
    %1947 = vmatprep.subr.mxu0 0.0
    %1948 = vmatpush2.msra.mxu0 0.0
    %1949 = vmatprep.subr.mxu0 0.0
    %1950 = vmatpush2.msra.mxu0 0.0
    %1951 = vmatprep.mubr.f32.mxu0 0.0
    %1952 = vmatmul.mubr.f32.gmra.mxu0 %v1885
    %v1953 = vpop.f32.mrf.mxu0
    %v1954 = vadd.f32 0.0, %v1953
    %v1955 = vpop.f32.mrf.mxu0
    %1956 = vdwg.mxu0
    %v1957 = vmul.f32 %v1954, %v495
    %v1959 = vsel %vm1202, %v1957, 0
    %1961 = vmatprep.subr.mxu0 0.0
    %1962 = vmatpush1.msra.mxu0 0.0
    %1963 = vmatprep.subr.mxu0 0.0
    %1964 = vmatpush1.msra.mxu0 0.0
    %1965 = vmatprep.subr.mxu0 0.0
    %1966 = vmatpush1.msra.mxu0 0.0
    %1967 = vmatprep.subr.mxu0 0.0
    %1968 = vmatpush1.msra.mxu0 0.0
    %1969 = vmatprep.subr.mxu0 0.0
    %1970 = vmatpush1.msra.mxu0 0.0
    %1971 = vmatprep.subr.mxu0 0.0
    %1972 = vmatpush1.msra.mxu0 0.0
    %1973 = vmatprep.subr.mxu0 0.0
    %1974 = vmatpush1.msra.mxu0 0.0
    %1975 = vmatprep.subr.mxu0 0.0
    %1976 = vmatpush1.msra.mxu0 0.0
    %1977 = vmatprep.subr.mxu0 0.0
    %1978 = vmatpush1.msra.mxu0 %v534
    %1979 = vmatprep.subr.mxu0 0.0
    %1980 = vmatpush1.msra.mxu0 %v533
    %1981 = vmatprep.subr.mxu0 0.0
    %1982 = vmatpush1.msra.mxu0 %v532
    %1983 = vmatprep.subr.mxu0 0.0
    %1984 = vmatpush1.msra.mxu0 %v531
    %1985 = vmatprep.subr.mxu0 0.0
    %1986 = vmatpush1.msra.mxu0 %v530
    %1987 = vmatprep.subr.mxu0 0.0
    %1988 = vmatpush1.msra.mxu0 %v529
    %1989 = vmatprep.subr.mxu0 0.0
    %1990 = vmatpush1.msra.mxu0 %v528
    %1991 = vmatprep.subr.mxu0 0.0
    %1992 = vmatpush1.msra.mxu0 %v527
    %1993 = vmatprep.subr.mxu0 0.0
    %1994 = vmatpush2.msra.mxu0 0.0
    %1995 = vmatprep.subr.mxu0 0.0
    %1996 = vmatpush2.msra.mxu0 0.0
    %1997 = vmatprep.subr.mxu0 0.0
    %1998 = vmatpush2.msra.mxu0 0.0
    %1999 = vmatprep.subr.mxu0 0.0
    %2000 = vmatpush2.msra.mxu0 0.0
    %2001 = vmatprep.subr.mxu0 0.0
    %2002 = vmatpush2.msra.mxu0 0.0
    %2003 = vmatprep.subr.mxu0 0.0
    %2004 = vmatpush2.msra.mxu0 0.0
    %2005 = vmatprep.subr.mxu0 0.0
    %2006 = vmatpush2.msra.mxu0 0.0
    %2007 = vmatprep.subr.mxu0 0.0
    %2008 = vmatpush2.msra.mxu0 0.0
    %2009 = vmatprep.subr.mxu0 0.0
    %2010 = vmatpush2.msra.mxu0 0.0
    %2011 = vmatprep.subr.mxu0 0.0
    %2012 = vmatpush2.msra.mxu0 0.0
    %2013 = vmatprep.subr.mxu0 0.0
    %2014 = vmatpush2.msra.mxu0 0.0
    %2015 = vmatprep.subr.mxu0 0.0
    %2016 = vmatpush2.msra.mxu0 0.0
    %2017 = vmatprep.subr.mxu0 0.0
    %2018 = vmatpush2.msra.mxu0 0.0
    %2019 = vmatprep.subr.mxu0 0.0
    %2020 = vmatpush2.msra.mxu0 0.0
    %2021 = vmatprep.subr.mxu0 0.0
    %2022 = vmatpush2.msra.mxu0 0.0
    %2023 = vmatprep.subr.mxu0 0.0
    %2024 = vmatpush2.msra.mxu0 0.0
    %2025 = vmatprep.mubr.f32.mxu0 0.0
    %2026 = vmatmul.mubr.f32.gmra.mxu0 %v1959
    %v2027 = vpop.f32.mrf.mxu0
    %v2028 = vadd.f32 0.0, %v2027
    %v2029 = vpop.f32.mrf.mxu0
    %2030 = vdwg.mxu0
    %v2031 = vsel %vm1276, %v2028, -inf
    %2032 = vmax.xlane.f32.xlu0 %v2031
    %v2033 = vpop.xlane.xlu0 %2032
    %v2034 = vsub.f32 %v2028, %v2033
    %v2035 = vmul.f32 %v2034, 1.442695
    %v2036 = vpow.pop %v2035
    %v2037 = vsel %vm1276, %v2036, 0.0
    %2038 = vadd.xlane.f32.xlu0 %v2037
    %v2039 = vpop.xlane.xlu0 %2038
    %v2040 = vrcp.pop %v2039
    %v2041 = vmul.f32 %v2039, %v2040
    %v2042 = vsub.f32 2.0, %v2041
    %v2043 = vmul.f32 %v2040, %v2042
    %v2044 = vmul.f32 %v2036, %v2043
    %2046 = vrot.lane.b32.xlu0 %v2044, 8
    %v2047 = vpop.permute.xlu0 %2046
    %2049 = vrot.lane.b32.xlu0 %v2044, 16
    %v2050 = vpop.permute.xlu0 %2049
    %2052 = vrot.lane.b32.xlu0 %v2044, 24
    %v2053 = vpop.permute.xlu0 %2052
    %2055 = vrot.lane.b32.xlu0 %v2044, 32
    %v2056 = vpop.permute.xlu0 %2055
    %2058 = vrot.lane.b32.xlu0 %v2044, 40
    %v2059 = vpop.permute.xlu0 %2058
    %2061 = vrot.lane.b32.xlu0 %v2044, 48
    %v2062 = vpop.permute.xlu0 %2061
    %2064 = vrot.lane.b32.xlu0 %v2044, 56
    %v2065 = vpop.permute.xlu0 %2064
    %v2067 = vsel %vm1276, %v2044, %v2047
    %v2068 = vsel %vm579, %v2067, %v2050
    %v2069 = vsel %vm1315, %v2068, %v2053
    %v2070 = vsel %vm266, %v2069, %v2056
    %v2071 = vsel %vm1318, %v2070, %v2059
    %v2072 = vsel %vm1320, %v2071, %v2062
    %v2073 = vsel %vm1322, %v2072, %v2065
    %v2074 = vmul.f32 %v2073, %v495
    %2075 = vmatprep.subr.mxu0 0.0
    %2076 = vmatpush1.msra.mxu0 0.0
    %2077 = vmatprep.subr.mxu0 0.0
    %2078 = vmatpush1.msra.mxu0 0.0
    %2079 = vmatprep.subr.mxu0 0.0
    %2080 = vmatpush1.msra.mxu0 0.0
    %2081 = vmatprep.subr.mxu0 0.0
    %2082 = vmatpush1.msra.mxu0 0.0
    %2083 = vmatprep.subr.mxu0 0.0
    %2084 = vmatpush1.msra.mxu0 0.0
    %2085 = vmatprep.subr.mxu0 0.0
    %2086 = vmatpush1.msra.mxu0 0.0
    %2087 = vmatprep.subr.mxu0 0.0
    %2088 = vmatpush1.msra.mxu0 0.0
    %2089 = vmatprep.subr.mxu0 0.0
    %2090 = vmatpush1.msra.mxu0 0.0
    %2091 = vmatprep.subr.mxu0 0.0
    %2092 = vmatpush1.msra.mxu0 0.0
    %2093 = vmatprep.subr.mxu0 0.0
    %2094 = vmatpush1.msra.mxu0 0.0
    %2095 = vmatprep.subr.mxu0 0.0
    %2096 = vmatpush1.msra.mxu0 0.0
    %2097 = vmatprep.subr.mxu0 0.0
    %2098 = vmatpush1.msra.mxu0 0.0
    %2099 = vmatprep.subr.mxu0 0.0
    %2100 = vmatpush1.msra.mxu0 %v130
    %2101 = vmatprep.subr.mxu0 0.0
    %2102 = vmatpush1.msra.mxu0 %v129
    %2103 = vmatprep.subr.mxu0 0.0
    %2104 = vmatpush1.msra.mxu0 %v128
    %2105 = vmatprep.subr.mxu0 0.0
    %2106 = vmatpush1.msra.mxu0 %v127
    %2107 = vmatprep.subr.mxu0 0.0
    %2108 = vmatpush2.msra.mxu0 0.0
    %2109 = vmatprep.subr.mxu0 0.0
    %2110 = vmatpush2.msra.mxu0 0.0
    %2111 = vmatprep.subr.mxu0 0.0
    %2112 = vmatpush2.msra.mxu0 0.0
    %2113 = vmatprep.subr.mxu0 0.0
    %2114 = vmatpush2.msra.mxu0 0.0
    %2115 = vmatprep.subr.mxu0 0.0
    %2116 = vmatpush2.msra.mxu0 0.0
    %2117 = vmatprep.subr.mxu0 0.0
    %2118 = vmatpush2.msra.mxu0 0.0
    %2119 = vmatprep.subr.mxu0 0.0
    %2120 = vmatpush2.msra.mxu0 0.0
    %2121 = vmatprep.subr.mxu0 0.0
    %2122 = vmatpush2.msra.mxu0 0.0
    %2123 = vmatprep.subr.mxu0 0.0
    %2124 = vmatpush2.msra.mxu0 0.0
    %2125 = vmatprep.subr.mxu0 0.0
    %2126 = vmatpush2.msra.mxu0 0.0
    %2127 = vmatprep.subr.mxu0 0.0
    %2128 = vmatpush2.msra.mxu0 0.0
    %2129 = vmatprep.subr.mxu0 0.0
    %2130 = vmatpush2.msra.mxu0 0.0
    %2131 = vmatprep.subr.mxu0 0.0
    %2132 = vmatpush2.msra.mxu0 0.0
    %2133 = vmatprep.subr.mxu0 0.0
    %2134 = vmatpush2.msra.mxu0 0.0
    %2135 = vmatprep.subr.mxu0 0.0
    %2136 = vmatpush2.msra.mxu0 0.0
    %2137 = vmatprep.subr.mxu0 0.0
    %2138 = vmatpush2.msra.mxu0 0.0
    %2139 = vmatprep.mubr.f32.mxu0 0.0
    %2140 = vmatmul.mubr.f32.gmra.mxu0 %v1885
    %v2141 = vpop.f32.mrf.mxu0
    %v2142 = vadd.f32 0.0, %v2141
    %v2143 = vpop.f32.mrf.mxu0
    %2144 = vdwg.mxu0
    %v2146 = vsel %vm1202, %v2074, 0
    %2148 = vmatprep.subr.mxu0 0.0
    %2149 = vmatpush1.msra.mxu0 0.0
    %2150 = vmatprep.subr.mxu0 0.0
    %2151 = vmatpush1.msra.mxu0 0.0
    %2152 = vmatprep.subr.mxu0 0.0
    %2153 = vmatpush1.msra.mxu0 0.0
    %2154 = vmatprep.subr.mxu0 0.0
    %2155 = vmatpush1.msra.mxu0 0.0
    %2156 = vmatprep.subr.mxu0 0.0
    %2157 = vmatpush1.msra.mxu0 0.0
    %2158 = vmatprep.subr.mxu0 0.0
    %2159 = vmatpush1.msra.mxu0 0.0
    %2160 = vmatprep.subr.mxu0 0.0
    %2161 = vmatpush1.msra.mxu0 0.0
    %2162 = vmatprep.subr.mxu0 0.0
    %2163 = vmatpush1.msra.mxu0 0.0
    %2164 = vmatprep.subr.mxu0 0.0
    %2165 = vmatpush1.msra.mxu0 %v482
    %2166 = vmatprep.subr.mxu0 0.0
    %2167 = vmatpush1.msra.mxu0 %v477
    %2168 = vmatprep.subr.mxu0 0.0
    %2169 = vmatpush1.msra.mxu0 %v472
    %2170 = vmatprep.subr.mxu0 0.0
    %2171 = vmatpush1.msra.mxu0 %v467
    %2172 = vmatprep.subr.mxu0 0.0
    %2173 = vmatpush1.msra.mxu0 %v462
    %2174 = vmatprep.subr.mxu0 0.0
    %2175 = vmatpush1.msra.mxu0 %v457
    %2176 = vmatprep.subr.mxu0 0.0
    %2177 = vmatpush1.msra.mxu0 %v452
    %2178 = vmatprep.subr.mxu0 0.0
    %2179 = vmatpush1.msra.mxu0 %v447
    %2180 = vmatprep.subr.mxu0 0.0
    %2181 = vmatpush2.msra.mxu0 0.0
    %2182 = vmatprep.subr.mxu0 0.0
    %2183 = vmatpush2.msra.mxu0 0.0
    %2184 = vmatprep.subr.mxu0 0.0
    %2185 = vmatpush2.msra.mxu0 0.0
    %2186 = vmatprep.subr.mxu0 0.0
    %2187 = vmatpush2.msra.mxu0 0.0
    %2188 = vmatprep.subr.mxu0 0.0
    %2189 = vmatpush2.msra.mxu0 0.0
    %2190 = vmatprep.subr.mxu0 0.0
    %2191 = vmatpush2.msra.mxu0 0.0
    %2192 = vmatprep.subr.mxu0 0.0
    %2193 = vmatpush2.msra.mxu0 0.0
    %2194 = vmatprep.subr.mxu0 0.0
    %2195 = vmatpush2.msra.mxu0 0.0
    %2196 = vmatprep.subr.mxu0 0.0
    %2197 = vmatpush2.msra.mxu0 0.0
    %2198 = vmatprep.subr.mxu0 0.0
    %2199 = vmatpush2.msra.mxu0 0.0
    %2200 = vmatprep.subr.mxu0 0.0
    %2201 = vmatpush2.msra.mxu0 0.0
    %2202 = vmatprep.subr.mxu0 0.0
    %2203 = vmatpush2.msra.mxu0 0.0
    %2204 = vmatprep.subr.mxu0 0.0
    %2205 = vmatpush2.msra.mxu0 0.0
    %2206 = vmatprep.subr.mxu0 0.0
    %2207 = vmatpush2.msra.mxu0 0.0
    %2208 = vmatprep.subr.mxu0 0.0
    %2209 = vmatpush2.msra.mxu0 0.0
    %2210 = vmatprep.subr.mxu0 0.0
    %2211 = vmatpush2.msra.mxu0 0.0
    %2212 = vmatprep.mubr.f32.mxu0 0.0
    %2213 = vmatmul.mubr.f32.gmra.mxu0 %v2146
    %v2214 = vpop.f32.mrf.mxu0
    %v2215 = vadd.f32 %v2142, %v2214
    %v2216 = vpop.f32.mrf.mxu0
    %2217 = vdwg.mxu0
    %v2218 = vtanh.pop %v2215
    %s2219 = scalar_lea.vmem [#allocation10], 8
    %2220 = vst.msk [vmem:[%s2219] sm:$0xff] %vm266, %v2218
    %v2222 = vsel %vm266, %v2218, 0
    %2224 = vmatprep.subr.mxu0 0.0
    %2225 = vmatpush1.msra.mxu0 0.0
    %2226 = vmatprep.subr.mxu0 0.0
    %2227 = vmatpush1.msra.mxu0 0.0
    %2228 = vmatprep.subr.mxu0 0.0
    %2229 = vmatpush1.msra.mxu0 0.0
    %2230 = vmatprep.subr.mxu0 0.0
    %2231 = vmatpush1.msra.mxu0 0.0
    %2232 = vmatprep.subr.mxu0 0.0
    %2233 = vmatpush1.msra.mxu0 0.0
    %2234 = vmatprep.subr.mxu0 0.0
    %2235 = vmatpush1.msra.mxu0 0.0
    %2236 = vmatprep.subr.mxu0 0.0
    %2237 = vmatpush1.msra.mxu0 0.0
    %2238 = vmatprep.subr.mxu0 0.0
    %2239 = vmatpush1.msra.mxu0 0.0
    %2240 = vmatprep.subr.mxu0 0.0
    %2241 = vmatpush1.msra.mxu0 0.0
    %2242 = vmatprep.subr.mxu0 0.0
    %2243 = vmatpush1.msra.mxu0 0.0
    %2244 = vmatprep.subr.mxu0 0.0
    %2245 = vmatpush1.msra.mxu0 0.0
    %2246 = vmatprep.subr.mxu0 0.0
    %2247 = vmatpush1.msra.mxu0 0.0
    %2248 = vmatprep.subr.mxu0 0.0
    %2249 = vmatpush1.msra.mxu0 %v96
    %2250 = vmatprep.subr.mxu0 0.0
    %2251 = vmatpush1.msra.mxu0 %v95
    %2252 = vmatprep.subr.mxu0 0.0
    %2253 = vmatpush1.msra.mxu0 %v94
    %2254 = vmatprep.subr.mxu0 0.0
    %2255 = vmatpush1.msra.mxu0 %v93
    %2256 = vmatprep.subr.mxu0 0.0
    %2257 = vmatpush2.msra.mxu0 0.0
    %2258 = vmatprep.subr.mxu0 0.0
    %2259 = vmatpush2.msra.mxu0 0.0
    %2260 = vmatprep.subr.mxu0 0.0
    %2261 = vmatpush2.msra.mxu0 0.0
    %2262 = vmatprep.subr.mxu0 0.0
    %2263 = vmatpush2.msra.mxu0 0.0
    %2264 = vmatprep.subr.mxu0 0.0
    %2265 = vmatpush2.msra.mxu0 0.0
    %2266 = vmatprep.subr.mxu0 0.0
    %2267 = vmatpush2.msra.mxu0 0.0
    %2268 = vmatprep.subr.mxu0 0.0
    %2269 = vmatpush2.msra.mxu0 0.0
    %2270 = vmatprep.subr.mxu0 0.0
    %2271 = vmatpush2.msra.mxu0 0.0
    %2272 = vmatprep.subr.mxu0 0.0
    %2273 = vmatpush2.msra.mxu0 0.0
    %2274 = vmatprep.subr.mxu0 0.0
    %2275 = vmatpush2.msra.mxu0 0.0
    %2276 = vmatprep.subr.mxu0 0.0
    %2277 = vmatpush2.msra.mxu0 0.0
    %2278 = vmatprep.subr.mxu0 0.0
    %2279 = vmatpush2.msra.mxu0 0.0
    %2280 = vmatprep.subr.mxu0 0.0
    %2281 = vmatpush2.msra.mxu0 0.0
    %2282 = vmatprep.subr.mxu0 0.0
    %2283 = vmatpush2.msra.mxu0 0.0
    %2284 = vmatprep.subr.mxu0 0.0
    %2285 = vmatpush2.msra.mxu0 0.0
    %2286 = vmatprep.subr.mxu0 0.0
    %2287 = vmatpush2.msra.mxu0 0.0
    %2288 = vmatprep.mubr.f32.mxu0 0.0
    %2289 = vmatmul.mubr.f32.gmra.mxu0 %v2222
    %v2290 = vpop.f32.mrf.mxu0
    %v2291 = vadd.f32 0.0, %v2290
    %v2292 = vpop.f32.mrf.mxu0
    %2293 = vdwg.mxu0
    %v2295 = vsel %vm266, %v675, 0
    %2297 = vmatprep.subr.mxu0 0.0
    %2298 = vmatpush1.msra.mxu0 0.0
    %2299 = vmatprep.subr.mxu0 0.0
    %2300 = vmatpush1.msra.mxu0 0.0
    %2301 = vmatprep.subr.mxu0 0.0
    %2302 = vmatpush1.msra.mxu0 0.0
    %2303 = vmatprep.subr.mxu0 0.0
    %2304 = vmatpush1.msra.mxu0 0.0
    %2305 = vmatprep.subr.mxu0 0.0
    %2306 = vmatpush1.msra.mxu0 0.0
    %2307 = vmatprep.subr.mxu0 0.0
    %2308 = vmatpush1.msra.mxu0 0.0
    %2309 = vmatprep.subr.mxu0 0.0
    %2310 = vmatpush1.msra.mxu0 0.0
    %2311 = vmatprep.subr.mxu0 0.0
    %2312 = vmatpush1.msra.mxu0 0.0
    %2313 = vmatprep.subr.mxu0 0.0
    %2314 = vmatpush1.msra.mxu0 0.0
    %2315 = vmatprep.subr.mxu0 0.0
    %2316 = vmatpush1.msra.mxu0 0.0
    %2317 = vmatprep.subr.mxu0 0.0
    %2318 = vmatpush1.msra.mxu0 0.0
    %2319 = vmatprep.subr.mxu0 0.0
    %2320 = vmatpush1.msra.mxu0 0.0
    %2321 = vmatprep.subr.mxu0 0.0
    %2322 = vmatpush1.msra.mxu0 %v92
    %2323 = vmatprep.subr.mxu0 0.0
    %2324 = vmatpush1.msra.mxu0 %v91
    %2325 = vmatprep.subr.mxu0 0.0
    %2326 = vmatpush1.msra.mxu0 %v90
    %2327 = vmatprep.subr.mxu0 0.0
    %2328 = vmatpush1.msra.mxu0 %v89
    %2329 = vmatprep.subr.mxu0 0.0
    %2330 = vmatpush2.msra.mxu0 0.0
    %2331 = vmatprep.subr.mxu0 0.0
    %2332 = vmatpush2.msra.mxu0 0.0
    %2333 = vmatprep.subr.mxu0 0.0
    %2334 = vmatpush2.msra.mxu0 0.0
    %2335 = vmatprep.subr.mxu0 0.0
    %2336 = vmatpush2.msra.mxu0 0.0
    %2337 = vmatprep.subr.mxu0 0.0
    %2338 = vmatpush2.msra.mxu0 0.0
    %2339 = vmatprep.subr.mxu0 0.0
    %2340 = vmatpush2.msra.mxu0 0.0
    %2341 = vmatprep.subr.mxu0 0.0
    %2342 = vmatpush2.msra.mxu0 0.0
    %2343 = vmatprep.subr.mxu0 0.0
    %2344 = vmatpush2.msra.mxu0 0.0
    %2345 = vmatprep.subr.mxu0 0.0
    %2346 = vmatpush2.msra.mxu0 0.0
    %2347 = vmatprep.subr.mxu0 0.0
    %2348 = vmatpush2.msra.mxu0 0.0
    %2349 = vmatprep.subr.mxu0 0.0
    %2350 = vmatpush2.msra.mxu0 0.0
    %2351 = vmatprep.subr.mxu0 0.0
    %2352 = vmatpush2.msra.mxu0 0.0
    %2353 = vmatprep.subr.mxu0 0.0
    %2354 = vmatpush2.msra.mxu0 0.0
    %2355 = vmatprep.subr.mxu0 0.0
    %2356 = vmatpush2.msra.mxu0 0.0
    %2357 = vmatprep.subr.mxu0 0.0
    %2358 = vmatpush2.msra.mxu0 0.0
    %2359 = vmatprep.subr.mxu0 0.0
    %2360 = vmatpush2.msra.mxu0 0.0
    %2361 = vmatprep.mubr.f32.mxu0 0.0
    %2362 = vmatmul.mubr.f32.gmra.mxu0 %v2295
    %v2363 = vpop.f32.mrf.mxu0
    %v2364 = vadd.f32 %v2291, %v2363
    %v2365 = vpop.f32.mrf.mxu0
    %2366 = vdwg.mxu0
    %2367 = vmatprep.subr.mxu0 0.0
    %2368 = vmatpush1.msra.mxu0 0.0
    %2369 = vmatprep.subr.mxu0 0.0
    %2370 = vmatpush1.msra.mxu0 0.0
    %2371 = vmatprep.subr.mxu0 0.0
    %2372 = vmatpush1.msra.mxu0 0.0
    %2373 = vmatprep.subr.mxu0 0.0
    %2374 = vmatpush1.msra.mxu0 0.0
    %2375 = vmatprep.subr.mxu0 0.0
    %2376 = vmatpush1.msra.mxu0 0.0
    %2377 = vmatprep.subr.mxu0 0.0
    %2378 = vmatpush1.msra.mxu0 0.0
    %2379 = vmatprep.subr.mxu0 0.0
    %2380 = vmatpush1.msra.mxu0 0.0
    %2381 = vmatprep.subr.mxu0 0.0
    %2382 = vmatpush1.msra.mxu0 0.0
    %2383 = vmatprep.subr.mxu0 0.0
    %2384 = vmatpush1.msra.mxu0 0.0
    %2385 = vmatprep.subr.mxu0 0.0
    %2386 = vmatpush1.msra.mxu0 0.0
    %2387 = vmatprep.subr.mxu0 0.0
    %2388 = vmatpush1.msra.mxu0 0.0
    %2389 = vmatprep.subr.mxu0 0.0
    %2390 = vmatpush1.msra.mxu0 0.0
    %2391 = vmatprep.subr.mxu0 0.0
    %2392 = vmatpush1.msra.mxu0 %v100
    %2393 = vmatprep.subr.mxu0 0.0
    %2394 = vmatpush1.msra.mxu0 %v99
    %2395 = vmatprep.subr.mxu0 0.0
    %2396 = vmatpush1.msra.mxu0 %v98
    %2397 = vmatprep.subr.mxu0 0.0
    %2398 = vmatpush1.msra.mxu0 %v97
    %2399 = vmatprep.subr.mxu0 0.0
    %2400 = vmatpush2.msra.mxu0 0.0
    %2401 = vmatprep.subr.mxu0 0.0
    %2402 = vmatpush2.msra.mxu0 0.0
    %2403 = vmatprep.subr.mxu0 0.0
    %2404 = vmatpush2.msra.mxu0 0.0
    %2405 = vmatprep.subr.mxu0 0.0
    %2406 = vmatpush2.msra.mxu0 0.0
    %2407 = vmatprep.subr.mxu0 0.0
    %2408 = vmatpush2.msra.mxu0 0.0
    %2409 = vmatprep.subr.mxu0 0.0
    %2410 = vmatpush2.msra.mxu0 0.0
    %2411 = vmatprep.subr.mxu0 0.0
    %2412 = vmatpush2.msra.mxu0 0.0
    %2413 = vmatprep.subr.mxu0 0.0
    %2414 = vmatpush2.msra.mxu0 0.0
    %2415 = vmatprep.subr.mxu0 0.0
    %2416 = vmatpush2.msra.mxu0 0.0
    %2417 = vmatprep.subr.mxu0 0.0
    %2418 = vmatpush2.msra.mxu0 0.0
    %2419 = vmatprep.subr.mxu0 0.0
    %2420 = vmatpush2.msra.mxu0 0.0
    %2421 = vmatprep.subr.mxu0 0.0
    %2422 = vmatpush2.msra.mxu0 0.0
    %2423 = vmatprep.subr.mxu0 0.0
    %2424 = vmatpush2.msra.mxu0 0.0
    %2425 = vmatprep.subr.mxu0 0.0
    %2426 = vmatpush2.msra.mxu0 0.0
    %2427 = vmatprep.subr.mxu0 0.0
    %2428 = vmatpush2.msra.mxu0 0.0
    %2429 = vmatprep.subr.mxu0 0.0
    %2430 = vmatpush2.msra.mxu0 0.0
    %2431 = vmatprep.mubr.f32.mxu0 0.0
    %2432 = vmatmul.mubr.f32.gmra.mxu0 %v1785
    %v2433 = vpop.f32.mrf.mxu0
    %v2434 = vadd.f32 0.0, %v2433
    %v2435 = vpop.f32.mrf.mxu0
    %2436 = vdwg.mxu0
    %v2437 = vadd.f32 %v2364, %v2434
    %v2438 = vadd.f32 %v2437, %v113
    %v2439 = vxor.u32 %v2438, 2147483648
    %v2440 = vmul.f32 %v2439, 1.442695
    %v2441 = vpow.pop %v2440
    %v2442 = vadd.f32 %v2441, 1.0
    %v2443 = vrcp.pop %v2442
    %v2444 = vmul.f32 1.0, %v2443
    %v2445 = vtanh.pop %v2438
    %v2446 = vmul.f32 %v2444, %v1705
    %2448 = vrot.lane.b32.xlu0 %v2445, 64
    %v2449 = vpop.permute.xlu0 %2448
    %v2451 = vmul.f32 %v2444, %v2449
    %2453 = vrot.lane.b32.xlu0 %v2451, 32
    %v2454 = vpop.permute.xlu0 %2453
    %v2456 = vadd.f32 %v2446, %v2454
    %v2457 = vtanh.pop %v2456
    %2459 = vrot.lane.b32.xlu0 %v2457, 64
    %v2460 = vpop.permute.xlu0 %2459
    %v2462 = vmul.f32 %v2444, %v2460
    %2463 = vmatprep.subr.mxu0 0.0
    %2464 = vmatpush1.msra.mxu0 0.0
    %2465 = vmatprep.subr.mxu0 0.0
    %2466 = vmatpush1.msra.mxu0 0.0
    %2467 = vmatprep.subr.mxu0 0.0
    %2468 = vmatpush1.msra.mxu0 0.0
    %2469 = vmatprep.subr.mxu0 0.0
    %2470 = vmatpush1.msra.mxu0 0.0
    %2471 = vmatprep.subr.mxu0 0.0
    %2472 = vmatpush1.msra.mxu0 0.0
    %2473 = vmatprep.subr.mxu0 0.0
    %2474 = vmatpush1.msra.mxu0 0.0
    %2475 = vmatprep.subr.mxu0 0.0
    %2476 = vmatpush1.msra.mxu0 0.0
    %2477 = vmatprep.subr.mxu0 0.0
    %2478 = vmatpush1.msra.mxu0 0.0
    %2479 = vmatprep.subr.mxu0 0.0
    %2480 = vmatpush1.msra.mxu0 0.0
    %2481 = vmatprep.subr.mxu0 0.0
    %2482 = vmatpush1.msra.mxu0 0.0
    %2483 = vmatprep.subr.mxu0 0.0
    %2484 = vmatpush1.msra.mxu0 0.0
    %2485 = vmatprep.subr.mxu0 0.0
    %2486 = vmatpush1.msra.mxu0 0.0
    %2487 = vmatprep.subr.mxu0 0.0
    %2488 = vmatpush1.msra.mxu0 %v108
    %2489 = vmatprep.subr.mxu0 0.0
    %2490 = vmatpush1.msra.mxu0 %v107
    %2491 = vmatprep.subr.mxu0 0.0
    %2492 = vmatpush1.msra.mxu0 %v106
    %2493 = vmatprep.subr.mxu0 0.0
    %2494 = vmatpush1.msra.mxu0 %v105
    %2495 = vmatprep.subr.mxu0 0.0
    %2496 = vmatpush2.msra.mxu0 0.0
    %2497 = vmatprep.subr.mxu0 0.0
    %2498 = vmatpush2.msra.mxu0 0.0
    %2499 = vmatprep.subr.mxu0 0.0
    %2500 = vmatpush2.msra.mxu0 0.0
    %2501 = vmatprep.subr.mxu0 0.0
    %2502 = vmatpush2.msra.mxu0 0.0
    %2503 = vmatprep.subr.mxu0 0.0
    %2504 = vmatpush2.msra.mxu0 0.0
    %2505 = vmatprep.subr.mxu0 0.0
    %2506 = vmatpush2.msra.mxu0 0.0
    %2507 = vmatprep.subr.mxu0 0.0
    %2508 = vmatpush2.msra.mxu0 0.0
    %2509 = vmatprep.subr.mxu0 0.0
    %2510 = vmatpush2.msra.mxu0 0.0
    %2511 = vmatprep.subr.mxu0 0.0
    %2512 = vmatpush2.msra.mxu0 0.0
    %2513 = vmatprep.subr.mxu0 0.0
    %2514 = vmatpush2.msra.mxu0 0.0
    %2515 = vmatprep.subr.mxu0 0.0
    %2516 = vmatpush2.msra.mxu0 0.0
    %2517 = vmatprep.subr.mxu0 0.0
    %2518 = vmatpush2.msra.mxu0 0.0
    %2519 = vmatprep.subr.mxu0 0.0
    %2520 = vmatpush2.msra.mxu0 0.0
    %2521 = vmatprep.subr.mxu0 0.0
    %2522 = vmatpush2.msra.mxu0 0.0
    %2523 = vmatprep.subr.mxu0 0.0
    %2524 = vmatpush2.msra.mxu0 0.0
    %2525 = vmatprep.subr.mxu0 0.0
    %2526 = vmatpush2.msra.mxu0 0.0
    %2527 = vmatprep.mubr.f32.mxu0 0.0
    %2528 = vmatmul.mubr.f32.gmra.mxu0 %v1885
    %v2529 = vpop.f32.mrf.mxu0
    %v2530 = vadd.f32 0.0, %v2529
    %v2531 = vpop.f32.mrf.mxu0
    %2532 = vdwg.mxu0
    %2534 = vrot.lane.b32.xlu0 %v2462, 32
    %v2535 = vpop.permute.xlu0 %2534
    %v2536 = vsel %vm266, %v2535, 0
    %2538 = vmatprep.subr.mxu0 0.0
    %2539 = vmatpush1.msra.mxu0 0.0
    %2540 = vmatprep.subr.mxu0 0.0
    %2541 = vmatpush1.msra.mxu0 0.0
    %2542 = vmatprep.subr.mxu0 0.0
    %2543 = vmatpush1.msra.mxu0 0.0
    %2544 = vmatprep.subr.mxu0 0.0
    %2545 = vmatpush1.msra.mxu0 0.0
    %2546 = vmatprep.subr.mxu0 0.0
    %2547 = vmatpush1.msra.mxu0 0.0
    %2548 = vmatprep.subr.mxu0 0.0
    %2549 = vmatpush1.msra.mxu0 0.0
    %2550 = vmatprep.subr.mxu0 0.0
    %2551 = vmatpush1.msra.mxu0 0.0
    %2552 = vmatprep.subr.mxu0 0.0
    %2553 = vmatpush1.msra.mxu0 0.0
    %2554 = vmatprep.subr.mxu0 0.0
    %2555 = vmatpush1.msra.mxu0 0.0
    %2556 = vmatprep.subr.mxu0 0.0
    %2557 = vmatpush1.msra.mxu0 0.0
    %2558 = vmatprep.subr.mxu0 0.0
    %2559 = vmatpush1.msra.mxu0 0.0
    %2560 = vmatprep.subr.mxu0 0.0
    %2561 = vmatpush1.msra.mxu0 0.0
    %2562 = vmatprep.subr.mxu0 0.0
    %2563 = vmatpush1.msra.mxu0 %v104
    %2564 = vmatprep.subr.mxu0 0.0
    %2565 = vmatpush1.msra.mxu0 %v103
    %2566 = vmatprep.subr.mxu0 0.0
    %2567 = vmatpush1.msra.mxu0 %v102
    %2568 = vmatprep.subr.mxu0 0.0
    %2569 = vmatpush1.msra.mxu0 %v101
    %2570 = vmatprep.subr.mxu0 0.0
    %2571 = vmatpush2.msra.mxu0 0.0
    %2572 = vmatprep.subr.mxu0 0.0
    %2573 = vmatpush2.msra.mxu0 0.0
    %2574 = vmatprep.subr.mxu0 0.0
    %2575 = vmatpush2.msra.mxu0 0.0
    %2576 = vmatprep.subr.mxu0 0.0
    %2577 = vmatpush2.msra.mxu0 0.0
    %2578 = vmatprep.subr.mxu0 0.0
    %2579 = vmatpush2.msra.mxu0 0.0
    %2580 = vmatprep.subr.mxu0 0.0
    %2581 = vmatpush2.msra.mxu0 0.0
    %2582 = vmatprep.subr.mxu0 0.0
    %2583 = vmatpush2.msra.mxu0 0.0
    %2584 = vmatprep.subr.mxu0 0.0
    %2585 = vmatpush2.msra.mxu0 0.0
    %2586 = vmatprep.subr.mxu0 0.0
    %2587 = vmatpush2.msra.mxu0 0.0
    %2588 = vmatprep.subr.mxu0 0.0
    %2589 = vmatpush2.msra.mxu0 0.0
    %2590 = vmatprep.subr.mxu0 0.0
    %2591 = vmatpush2.msra.mxu0 0.0
    %2592 = vmatprep.subr.mxu0 0.0
    %2593 = vmatpush2.msra.mxu0 0.0
    %2594 = vmatprep.subr.mxu0 0.0
    %2595 = vmatpush2.msra.mxu0 0.0
    %2596 = vmatprep.subr.mxu0 0.0
    %2597 = vmatpush2.msra.mxu0 0.0
    %2598 = vmatprep.subr.mxu0 0.0
    %2599 = vmatpush2.msra.mxu0 0.0
    %2600 = vmatprep.subr.mxu0 0.0
    %2601 = vmatpush2.msra.mxu0 0.0
    %2602 = vmatprep.mubr.f32.mxu0 0.0
    %2603 = vmatmul.mubr.f32.gmra.mxu0 %v2536
    %v2604 = vpop.f32.mrf.mxu0
    %v2605 = vadd.f32 %v2530, %v2604
    %v2606 = vpop.f32.mrf.mxu0
    %2607 = vdwg.mxu0
    %v2608 = vadd.f32 %v2605, %v118
    %v2609 = vxor.u32 %v2608, 2147483648
    %v2610 = vmul.f32 %v2609, 1.442695
    %v2611 = vpow.pop %v2610
    %v2612 = vadd.f32 %v2611, 1.0
    %v2613 = vrcp.pop %v2612
    %v2614 = vmul.f32 1.0, %v2613
    %v2615 = vtanh.pop %v2608
    %v2616 = vmul.f32 %v2614, %v1875
    %2618 = vrot.lane.b32.xlu0 %v2615, 64
    %v2619 = vpop.permute.xlu0 %2618
    %v2621 = vmul.f32 %v2614, %v2619
    %2623 = vrot.lane.b32.xlu0 %v2621, 32
    %v2624 = vpop.permute.xlu0 %2623
    %v2626 = vadd.f32 %v2616, %v2624
    %v2627 = vtanh.pop %v2626
    %2629 = vrot.lane.b32.xlu0 %v2627, 64
    %v2630 = vpop.permute.xlu0 %2629
    %v2632 = vmul.f32 %v2614, %v2630
    %2634 = vrot.lane.b32.xlu0 %v2632, 32
    %v2635 = vpop.permute.xlu0 %2634
    %v2636 = vsel %vm266, %v2635, 0
    %2638 = vmatprep.subr.mxu0 0.0
    %2639 = vmatpush1.msra.mxu0 0.0
    %2640 = vmatprep.subr.mxu0 0.0
    %2641 = vmatpush1.msra.mxu0 0.0
    %2642 = vmatprep.subr.mxu0 0.0
    %2643 = vmatpush1.msra.mxu0 0.0
    %2644 = vmatprep.subr.mxu0 0.0
    %2645 = vmatpush1.msra.mxu0 0.0
    %2646 = vmatprep.subr.mxu0 0.0
    %2647 = vmatpush1.msra.mxu0 0.0
    %2648 = vmatprep.subr.mxu0 0.0
    %2649 = vmatpush1.msra.mxu0 0.0
    %2650 = vmatprep.subr.mxu0 0.0
    %2651 = vmatpush1.msra.mxu0 0.0
    %2652 = vmatprep.subr.mxu0 0.0
    %2653 = vmatpush1.msra.mxu0 0.0
    %2654 = vmatprep.subr.mxu0 0.0
    %2655 = vmatpush1.msra.mxu0 0.0
    %2656 = vmatprep.subr.mxu0 0.0
    %2657 = vmatpush1.msra.mxu0 0.0
    %2658 = vmatprep.subr.mxu0 0.0
    %2659 = vmatpush1.msra.mxu0 0.0
    %2660 = vmatprep.subr.mxu0 0.0
    %2661 = vmatpush1.msra.mxu0 0.0
    %2662 = vmatprep.subr.mxu0 0.0
    %2663 = vmatpush1.msra.mxu0 %v377
    %2664 = vmatprep.subr.mxu0 0.0
    %2665 = vmatpush1.msra.mxu0 %v372
    %2666 = vmatprep.subr.mxu0 0.0
    %2667 = vmatpush1.msra.mxu0 %v367
    %2668 = vmatprep.subr.mxu0 0.0
    %2669 = vmatpush1.msra.mxu0 %v362
    %2670 = vmatprep.subr.mxu0 0.0
    %2671 = vmatpush2.msra.mxu0 0.0
    %2672 = vmatprep.subr.mxu0 0.0
    %2673 = vmatpush2.msra.mxu0 0.0
    %2674 = vmatprep.subr.mxu0 0.0
    %2675 = vmatpush2.msra.mxu0 0.0
    %2676 = vmatprep.subr.mxu0 0.0
    %2677 = vmatpush2.msra.mxu0 0.0
    %2678 = vmatprep.subr.mxu0 0.0
    %2679 = vmatpush2.msra.mxu0 0.0
    %2680 = vmatprep.subr.mxu0 0.0
    %2681 = vmatpush2.msra.mxu0 0.0
    %2682 = vmatprep.subr.mxu0 0.0
    %2683 = vmatpush2.msra.mxu0 0.0
    %2684 = vmatprep.subr.mxu0 0.0
    %2685 = vmatpush2.msra.mxu0 0.0
    %2686 = vmatprep.subr.mxu0 0.0
    %2687 = vmatpush2.msra.mxu0 0.0
    %2688 = vmatprep.subr.mxu0 0.0
    %2689 = vmatpush2.msra.mxu0 0.0
    %2690 = vmatprep.subr.mxu0 0.0
    %2691 = vmatpush2.msra.mxu0 0.0
    %2692 = vmatprep.subr.mxu0 0.0
    %2693 = vmatpush2.msra.mxu0 0.0
    %2694 = vmatprep.subr.mxu0 0.0
    %2695 = vmatpush2.msra.mxu0 0.0
    %2696 = vmatprep.subr.mxu0 0.0
    %2697 = vmatpush2.msra.mxu0 0.0
    %2698 = vmatprep.subr.mxu0 0.0
    %2699 = vmatpush2.msra.mxu0 0.0
    %2700 = vmatprep.subr.mxu0 0.0
    %2701 = vmatpush2.msra.mxu0 0.0
    %2702 = vmatprep.mubr.f32.mxu0 0.0
    %2703 = vmatmul.mubr.f32.gmra.mxu0 %v2636
    %v2704 = vpop.f32.mrf.mxu0
    %v2705 = vadd.f32 0.0, %v2704
    %v2706 = vpop.f32.mrf.mxu0
    %2707 = vdwg.mxu0
    %v2708 = vmul.f32 %v2705, %v495
    %v2710 = vsel %vm1202, %v2708, 0
    %2712 = vmatprep.subr.mxu0 0.0
    %2713 = vmatpush1.msra.mxu0 0.0
    %2714 = vmatprep.subr.mxu0 0.0
    %2715 = vmatpush1.msra.mxu0 0.0
    %2716 = vmatprep.subr.mxu0 0.0
    %2717 = vmatpush1.msra.mxu0 0.0
    %2718 = vmatprep.subr.mxu0 0.0
    %2719 = vmatpush1.msra.mxu0 0.0
    %2720 = vmatprep.subr.mxu0 0.0
    %2721 = vmatpush1.msra.mxu0 0.0
    %2722 = vmatprep.subr.mxu0 0.0
    %2723 = vmatpush1.msra.mxu0 0.0
    %2724 = vmatprep.subr.mxu0 0.0
    %2725 = vmatpush1.msra.mxu0 0.0
    %2726 = vmatprep.subr.mxu0 0.0
    %2727 = vmatpush1.msra.mxu0 0.0
    %2728 = vmatprep.subr.mxu0 0.0
    %2729 = vmatpush1.msra.mxu0 %v534
    %2730 = vmatprep.subr.mxu0 0.0
    %2731 = vmatpush1.msra.mxu0 %v533
    %2732 = vmatprep.subr.mxu0 0.0
    %2733 = vmatpush1.msra.mxu0 %v532
    %2734 = vmatprep.subr.mxu0 0.0
    %2735 = vmatpush1.msra.mxu0 %v531
    %2736 = vmatprep.subr.mxu0 0.0
    %2737 = vmatpush1.msra.mxu0 %v530
    %2738 = vmatprep.subr.mxu0 0.0
    %2739 = vmatpush1.msra.mxu0 %v529
    %2740 = vmatprep.subr.mxu0 0.0
    %2741 = vmatpush1.msra.mxu0 %v528
    %2742 = vmatprep.subr.mxu0 0.0
    %2743 = vmatpush1.msra.mxu0 %v527
    %2744 = vmatprep.subr.mxu0 0.0
    %2745 = vmatpush2.msra.mxu0 0.0
    %2746 = vmatprep.subr.mxu0 0.0
    %2747 = vmatpush2.msra.mxu0 0.0
    %2748 = vmatprep.subr.mxu0 0.0
    %2749 = vmatpush2.msra.mxu0 0.0
    %2750 = vmatprep.subr.mxu0 0.0
    %2751 = vmatpush2.msra.mxu0 0.0
    %2752 = vmatprep.subr.mxu0 0.0
    %2753 = vmatpush2.msra.mxu0 0.0
    %2754 = vmatprep.subr.mxu0 0.0
    %2755 = vmatpush2.msra.mxu0 0.0
    %2756 = vmatprep.subr.mxu0 0.0
    %2757 = vmatpush2.msra.mxu0 0.0
    %2758 = vmatprep.subr.mxu0 0.0
    %2759 = vmatpush2.msra.mxu0 0.0
    %2760 = vmatprep.subr.mxu0 0.0
    %2761 = vmatpush2.msra.mxu0 0.0
    %2762 = vmatprep.subr.mxu0 0.0
    %2763 = vmatpush2.msra.mxu0 0.0
    %2764 = vmatprep.subr.mxu0 0.0
    %2765 = vmatpush2.msra.mxu0 0.0
    %2766 = vmatprep.subr.mxu0 0.0
    %2767 = vmatpush2.msra.mxu0 0.0
    %2768 = vmatprep.subr.mxu0 0.0
    %2769 = vmatpush2.msra.mxu0 0.0
    %2770 = vmatprep.subr.mxu0 0.0
    %2771 = vmatpush2.msra.mxu0 0.0
    %2772 = vmatprep.subr.mxu0 0.0
    %2773 = vmatpush2.msra.mxu0 0.0
    %2774 = vmatprep.subr.mxu0 0.0
    %2775 = vmatpush2.msra.mxu0 0.0
    %2776 = vmatprep.mubr.f32.mxu0 0.0
    %2777 = vmatmul.mubr.f32.gmra.mxu0 %v2710
    %v2778 = vpop.f32.mrf.mxu0
    %v2779 = vadd.f32 0.0, %v2778
    %v2780 = vpop.f32.mrf.mxu0
    %2781 = vdwg.mxu0
    %v2782 = vsel %vm1276, %v2779, -inf
    %2783 = vmax.xlane.f32.xlu0 %v2782
    %v2784 = vpop.xlane.xlu0 %2783
    %v2785 = vsub.f32 %v2779, %v2784
    %v2786 = vmul.f32 %v2785, 1.442695
    %v2787 = vpow.pop %v2786
    %v2788 = vsel %vm1276, %v2787, 0.0
    %2789 = vadd.xlane.f32.xlu0 %v2788
    %v2790 = vpop.xlane.xlu0 %2789
    %v2791 = vrcp.pop %v2790
    %v2792 = vmul.f32 %v2790, %v2791
    %v2793 = vsub.f32 2.0, %v2792
    %v2794 = vmul.f32 %v2791, %v2793
    %v2795 = vmul.f32 %v2787, %v2794
    %2797 = vrot.lane.b32.xlu0 %v2795, 8
    %v2798 = vpop.permute.xlu0 %2797
    %2800 = vrot.lane.b32.xlu0 %v2795, 16
    %v2801 = vpop.permute.xlu0 %2800
    %2803 = vrot.lane.b32.xlu0 %v2795, 24
    %v2804 = vpop.permute.xlu0 %2803
    %2806 = vrot.lane.b32.xlu0 %v2795, 32
    %v2807 = vpop.permute.xlu0 %2806
    %2809 = vrot.lane.b32.xlu0 %v2795, 40
    %v2810 = vpop.permute.xlu0 %2809
    %2812 = vrot.lane.b32.xlu0 %v2795, 48
    %v2813 = vpop.permute.xlu0 %2812
    %2815 = vrot.lane.b32.xlu0 %v2795, 56
    %v2816 = vpop.permute.xlu0 %2815
    %v2818 = vsel %vm1276, %v2795, %v2798
    %v2819 = vsel %vm579, %v2818, %v2801
    %v2820 = vsel %vm1315, %v2819, %v2804
    %v2821 = vsel %vm266, %v2820, %v2807
    %v2822 = vsel %vm1318, %v2821, %v2810
    %v2823 = vsel %vm1320, %v2822, %v2813
    %v2824 = vsel %vm1322, %v2823, %v2816
    %v2825 = vmul.f32 %v2824, %v495
    %2826 = vmatprep.subr.mxu0 0.0
    %2827 = vmatpush1.msra.mxu0 0.0
    %2828 = vmatprep.subr.mxu0 0.0
    %2829 = vmatpush1.msra.mxu0 0.0
    %2830 = vmatprep.subr.mxu0 0.0
    %2831 = vmatpush1.msra.mxu0 0.0
    %2832 = vmatprep.subr.mxu0 0.0
    %2833 = vmatpush1.msra.mxu0 0.0
    %2834 = vmatprep.subr.mxu0 0.0
    %2835 = vmatpush1.msra.mxu0 0.0
    %2836 = vmatprep.subr.mxu0 0.0
    %2837 = vmatpush1.msra.mxu0 0.0
    %2838 = vmatprep.subr.mxu0 0.0
    %2839 = vmatpush1.msra.mxu0 0.0
    %2840 = vmatprep.subr.mxu0 0.0
    %2841 = vmatpush1.msra.mxu0 0.0
    %2842 = vmatprep.subr.mxu0 0.0
    %2843 = vmatpush1.msra.mxu0 0.0
    %2844 = vmatprep.subr.mxu0 0.0
    %2845 = vmatpush1.msra.mxu0 0.0
    %2846 = vmatprep.subr.mxu0 0.0
    %2847 = vmatpush1.msra.mxu0 0.0
    %2848 = vmatprep.subr.mxu0 0.0
    %2849 = vmatpush1.msra.mxu0 0.0
    %2850 = vmatprep.subr.mxu0 0.0
    %2851 = vmatpush1.msra.mxu0 %v130
    %2852 = vmatprep.subr.mxu0 0.0
    %2853 = vmatpush1.msra.mxu0 %v129
    %2854 = vmatprep.subr.mxu0 0.0
    %2855 = vmatpush1.msra.mxu0 %v128
    %2856 = vmatprep.subr.mxu0 0.0
    %2857 = vmatpush1.msra.mxu0 %v127
    %2858 = vmatprep.subr.mxu0 0.0
    %2859 = vmatpush2.msra.mxu0 0.0
    %2860 = vmatprep.subr.mxu0 0.0
    %2861 = vmatpush2.msra.mxu0 0.0
    %2862 = vmatprep.subr.mxu0 0.0
    %2863 = vmatpush2.msra.mxu0 0.0
    %2864 = vmatprep.subr.mxu0 0.0
    %2865 = vmatpush2.msra.mxu0 0.0
    %2866 = vmatprep.subr.mxu0 0.0
    %2867 = vmatpush2.msra.mxu0 0.0
    %2868 = vmatprep.subr.mxu0 0.0
    %2869 = vmatpush2.msra.mxu0 0.0
    %2870 = vmatprep.subr.mxu0 0.0
    %2871 = vmatpush2.msra.mxu0 0.0
    %2872 = vmatprep.subr.mxu0 0.0
    %2873 = vmatpush2.msra.mxu0 0.0
    %2874 = vmatprep.subr.mxu0 0.0
    %2875 = vmatpush2.msra.mxu0 0.0
    %2876 = vmatprep.subr.mxu0 0.0
    %2877 = vmatpush2.msra.mxu0 0.0
    %2878 = vmatprep.subr.mxu0 0.0
    %2879 = vmatpush2.msra.mxu0 0.0
    %2880 = vmatprep.subr.mxu0 0.0
    %2881 = vmatpush2.msra.mxu0 0.0
    %2882 = vmatprep.subr.mxu0 0.0
    %2883 = vmatpush2.msra.mxu0 0.0
    %2884 = vmatprep.subr.mxu0 0.0
    %2885 = vmatpush2.msra.mxu0 0.0
    %2886 = vmatprep.subr.mxu0 0.0
    %2887 = vmatpush2.msra.mxu0 0.0
    %2888 = vmatprep.subr.mxu0 0.0
    %2889 = vmatpush2.msra.mxu0 0.0
    %2890 = vmatprep.mubr.f32.mxu0 0.0
    %2891 = vmatmul.mubr.f32.gmra.mxu0 %v2636
    %v2892 = vpop.f32.mrf.mxu0
    %v2893 = vadd.f32 0.0, %v2892
    %v2894 = vpop.f32.mrf.mxu0
    %2895 = vdwg.mxu0
    %v2897 = vsel %vm1202, %v2825, 0
    %2899 = vmatprep.subr.mxu0 0.0
    %2900 = vmatpush1.msra.mxu0 0.0
    %2901 = vmatprep.subr.mxu0 0.0
    %2902 = vmatpush1.msra.mxu0 0.0
    %2903 = vmatprep.subr.mxu0 0.0
    %2904 = vmatpush1.msra.mxu0 0.0
    %2905 = vmatprep.subr.mxu0 0.0
    %2906 = vmatpush1.msra.mxu0 0.0
    %2907 = vmatprep.subr.mxu0 0.0
    %2908 = vmatpush1.msra.mxu0 0.0
    %2909 = vmatprep.subr.mxu0 0.0
    %2910 = vmatpush1.msra.mxu0 0.0
    %2911 = vmatprep.subr.mxu0 0.0
    %2912 = vmatpush1.msra.mxu0 0.0
    %2913 = vmatprep.subr.mxu0 0.0
    %2914 = vmatpush1.msra.mxu0 0.0
    %2915 = vmatprep.subr.mxu0 0.0
    %2916 = vmatpush1.msra.mxu0 %v482
    %2917 = vmatprep.subr.mxu0 0.0
    %2918 = vmatpush1.msra.mxu0 %v477
    %2919 = vmatprep.subr.mxu0 0.0
    %2920 = vmatpush1.msra.mxu0 %v472
    %2921 = vmatprep.subr.mxu0 0.0
    %2922 = vmatpush1.msra.mxu0 %v467
    %2923 = vmatprep.subr.mxu0 0.0
    %2924 = vmatpush1.msra.mxu0 %v462
    %2925 = vmatprep.subr.mxu0 0.0
    %2926 = vmatpush1.msra.mxu0 %v457
    %2927 = vmatprep.subr.mxu0 0.0
    %2928 = vmatpush1.msra.mxu0 %v452
    %2929 = vmatprep.subr.mxu0 0.0
    %2930 = vmatpush1.msra.mxu0 %v447
    %2931 = vmatprep.subr.mxu0 0.0
    %2932 = vmatpush2.msra.mxu0 0.0
    %2933 = vmatprep.subr.mxu0 0.0
    %2934 = vmatpush2.msra.mxu0 0.0
    %2935 = vmatprep.subr.mxu0 0.0
    %2936 = vmatpush2.msra.mxu0 0.0
    %2937 = vmatprep.subr.mxu0 0.0
    %2938 = vmatpush2.msra.mxu0 0.0
    %2939 = vmatprep.subr.mxu0 0.0
    %2940 = vmatpush2.msra.mxu0 0.0
    %2941 = vmatprep.subr.mxu0 0.0
    %2942 = vmatpush2.msra.mxu0 0.0
    %2943 = vmatprep.subr.mxu0 0.0
    %2944 = vmatpush2.msra.mxu0 0.0
    %2945 = vmatprep.subr.mxu0 0.0
    %2946 = vmatpush2.msra.mxu0 0.0
    %2947 = vmatprep.subr.mxu0 0.0
    %2948 = vmatpush2.msra.mxu0 0.0
    %2949 = vmatprep.subr.mxu0 0.0
    %2950 = vmatpush2.msra.mxu0 0.0
    %2951 = vmatprep.subr.mxu0 0.0
    %2952 = vmatpush2.msra.mxu0 0.0
    %2953 = vmatprep.subr.mxu0 0.0
    %2954 = vmatpush2.msra.mxu0 0.0
    %2955 = vmatprep.subr.mxu0 0.0
    %2956 = vmatpush2.msra.mxu0 0.0
    %2957 = vmatprep.subr.mxu0 0.0
    %2958 = vmatpush2.msra.mxu0 0.0
    %2959 = vmatprep.subr.mxu0 0.0
    %2960 = vmatpush2.msra.mxu0 0.0
    %2961 = vmatprep.subr.mxu0 0.0
    %2962 = vmatpush2.msra.mxu0 0.0
    %2963 = vmatprep.mubr.f32.mxu0 0.0
    %2964 = vmatmul.mubr.f32.gmra.mxu0 %v2897
    %v2965 = vpop.f32.mrf.mxu0
    %v2966 = vadd.f32 %v2893, %v2965
    %v2967 = vpop.f32.mrf.mxu0
    %2968 = vdwg.mxu0
    %v2969 = vtanh.pop %v2966
    %s2970 = scalar_lea.vmem [#allocation10], 16
    %2971 = vst.msk [vmem:[%s2970] sm:$0xff] %vm266, %v2969
    %v2973 = vsel %vm266, %v2969, 0
    %2975 = vmatprep.subr.mxu0 0.0
    %2976 = vmatpush1.msra.mxu0 0.0
    %2977 = vmatprep.subr.mxu0 0.0
    %2978 = vmatpush1.msra.mxu0 0.0
    %2979 = vmatprep.subr.mxu0 0.0
    %2980 = vmatpush1.msra.mxu0 0.0
    %2981 = vmatprep.subr.mxu0 0.0
    %2982 = vmatpush1.msra.mxu0 0.0
    %2983 = vmatprep.subr.mxu0 0.0
    %2984 = vmatpush1.msra.mxu0 0.0
    %2985 = vmatprep.subr.mxu0 0.0
    %2986 = vmatpush1.msra.mxu0 0.0
    %2987 = vmatprep.subr.mxu0 0.0
    %2988 = vmatpush1.msra.mxu0 0.0
    %2989 = vmatprep.subr.mxu0 0.0
    %2990 = vmatpush1.msra.mxu0 0.0
    %2991 = vmatprep.subr.mxu0 0.0
    %2992 = vmatpush1.msra.mxu0 0.0
    %2993 = vmatprep.subr.mxu0 0.0
    %2994 = vmatpush1.msra.mxu0 0.0
    %2995 = vmatprep.subr.mxu0 0.0
    %2996 = vmatpush1.msra.mxu0 0.0
    %2997 = vmatprep.subr.mxu0 0.0
    %2998 = vmatpush1.msra.mxu0 0.0
    %2999 = vmatprep.subr.mxu0 0.0
    %3000 = vmatpush1.msra.mxu0 %v96
    %3001 = vmatprep.subr.mxu0 0.0
    %3002 = vmatpush1.msra.mxu0 %v95
    %3003 = vmatprep.subr.mxu0 0.0
    %3004 = vmatpush1.msra.mxu0 %v94
    %3005 = vmatprep.subr.mxu0 0.0
    %3006 = vmatpush1.msra.mxu0 %v93
    %3007 = vmatprep.subr.mxu0 0.0
    %3008 = vmatpush2.msra.mxu0 0.0
    %3009 = vmatprep.subr.mxu0 0.0
    %3010 = vmatpush2.msra.mxu0 0.0
    %3011 = vmatprep.subr.mxu0 0.0
    %3012 = vmatpush2.msra.mxu0 0.0
    %3013 = vmatprep.subr.mxu0 0.0
    %3014 = vmatpush2.msra.mxu0 0.0
    %3015 = vmatprep.subr.mxu0 0.0
    %3016 = vmatpush2.msra.mxu0 0.0
    %3017 = vmatprep.subr.mxu0 0.0
    %3018 = vmatpush2.msra.mxu0 0.0
    %3019 = vmatprep.subr.mxu0 0.0
    %3020 = vmatpush2.msra.mxu0 0.0
    %3021 = vmatprep.subr.mxu0 0.0
    %3022 = vmatpush2.msra.mxu0 0.0
    %3023 = vmatprep.subr.mxu0 0.0
    %3024 = vmatpush2.msra.mxu0 0.0
    %3025 = vmatprep.subr.mxu0 0.0
    %3026 = vmatpush2.msra.mxu0 0.0
    %3027 = vmatprep.subr.mxu0 0.0
    %3028 = vmatpush2.msra.mxu0 0.0
    %3029 = vmatprep.subr.mxu0 0.0
    %3030 = vmatpush2.msra.mxu0 0.0
    %3031 = vmatprep.subr.mxu0 0.0
    %3032 = vmatpush2.msra.mxu0 0.0
    %3033 = vmatprep.subr.mxu0 0.0
    %3034 = vmatpush2.msra.mxu0 0.0
    %3035 = vmatprep.subr.mxu0 0.0
    %3036 = vmatpush2.msra.mxu0 0.0
    %3037 = vmatprep.subr.mxu0 0.0
    %3038 = vmatpush2.msra.mxu0 0.0
    %3039 = vmatprep.mubr.f32.mxu0 0.0
    %3040 = vmatmul.mubr.f32.gmra.mxu0 %v2973
    %v3041 = vpop.f32.mrf.mxu0
    %v3042 = vadd.f32 0.0, %v3041
    %v3043 = vpop.f32.mrf.mxu0
    %3044 = vdwg.mxu0
    %v3046 = vsel %vm266, %v680, 0
    %3048 = vmatprep.subr.mxu0 0.0
    %3049 = vmatpush1.msra.mxu0 0.0
    %3050 = vmatprep.subr.mxu0 0.0
    %3051 = vmatpush1.msra.mxu0 0.0
    %3052 = vmatprep.subr.mxu0 0.0
    %3053 = vmatpush1.msra.mxu0 0.0
    %3054 = vmatprep.subr.mxu0 0.0
    %3055 = vmatpush1.msra.mxu0 0.0
    %3056 = vmatprep.subr.mxu0 0.0
    %3057 = vmatpush1.msra.mxu0 0.0
    %3058 = vmatprep.subr.mxu0 0.0
    %3059 = vmatpush1.msra.mxu0 0.0
    %3060 = vmatprep.subr.mxu0 0.0
    %3061 = vmatpush1.msra.mxu0 0.0
    %3062 = vmatprep.subr.mxu0 0.0
    %3063 = vmatpush1.msra.mxu0 0.0
    %3064 = vmatprep.subr.mxu0 0.0
    %3065 = vmatpush1.msra.mxu0 0.0
    %3066 = vmatprep.subr.mxu0 0.0
    %3067 = vmatpush1.msra.mxu0 0.0
    %3068 = vmatprep.subr.mxu0 0.0
    %3069 = vmatpush1.msra.mxu0 0.0
    %3070 = vmatprep.subr.mxu0 0.0
    %3071 = vmatpush1.msra.mxu0 0.0
    %3072 = vmatprep.subr.mxu0 0.0
    %3073 = vmatpush1.msra.mxu0 %v92
    %3074 = vmatprep.subr.mxu0 0.0
    %3075 = vmatpush1.msra.mxu0 %v91
    %3076 = vmatprep.subr.mxu0 0.0
    %3077 = vmatpush1.msra.mxu0 %v90
    %3078 = vmatprep.subr.mxu0 0.0
    %3079 = vmatpush1.msra.mxu0 %v89
    %3080 = vmatprep.subr.mxu0 0.0
    %3081 = vmatpush2.msra.mxu0 0.0
    %3082 = vmatprep.subr.mxu0 0.0
    %3083 = vmatpush2.msra.mxu0 0.0
    %3084 = vmatprep.subr.mxu0 0.0
    %3085 = vmatpush2.msra.mxu0 0.0
    %3086 = vmatprep.subr.mxu0 0.0
    %3087 = vmatpush2.msra.mxu0 0.0
    %3088 = vmatprep.subr.mxu0 0.0
    %3089 = vmatpush2.msra.mxu0 0.0
    %3090 = vmatprep.subr.mxu0 0.0
    %3091 = vmatpush2.msra.mxu0 0.0
    %3092 = vmatprep.subr.mxu0 0.0
    %3093 = vmatpush2.msra.mxu0 0.0
    %3094 = vmatprep.subr.mxu0 0.0
    %3095 = vmatpush2.msra.mxu0 0.0
    %3096 = vmatprep.subr.mxu0 0.0
    %3097 = vmatpush2.msra.mxu0 0.0
    %3098 = vmatprep.subr.mxu0 0.0
    %3099 = vmatpush2.msra.mxu0 0.0
    %3100 = vmatprep.subr.mxu0 0.0
    %3101 = vmatpush2.msra.mxu0 0.0
    %3102 = vmatprep.subr.mxu0 0.0
    %3103 = vmatpush2.msra.mxu0 0.0
    %3104 = vmatprep.subr.mxu0 0.0
    %3105 = vmatpush2.msra.mxu0 0.0
    %3106 = vmatprep.subr.mxu0 0.0
    %3107 = vmatpush2.msra.mxu0 0.0
    %3108 = vmatprep.subr.mxu0 0.0
    %3109 = vmatpush2.msra.mxu0 0.0
    %3110 = vmatprep.subr.mxu0 0.0
    %3111 = vmatpush2.msra.mxu0 0.0
    %3112 = vmatprep.mubr.f32.mxu0 0.0
    %3113 = vmatmul.mubr.f32.gmra.mxu0 %v3046
    %v3114 = vpop.f32.mrf.mxu0
    %v3115 = vadd.f32 %v3042, %v3114
    %v3116 = vpop.f32.mrf.mxu0
    %3117 = vdwg.mxu0
    %3118 = vmatprep.subr.mxu0 0.0
    %3119 = vmatpush1.msra.mxu0 0.0
    %3120 = vmatprep.subr.mxu0 0.0
    %3121 = vmatpush1.msra.mxu0 0.0
    %3122 = vmatprep.subr.mxu0 0.0
    %3123 = vmatpush1.msra.mxu0 0.0
    %3124 = vmatprep.subr.mxu0 0.0
    %3125 = vmatpush1.msra.mxu0 0.0
    %3126 = vmatprep.subr.mxu0 0.0
    %3127 = vmatpush1.msra.mxu0 0.0
    %3128 = vmatprep.subr.mxu0 0.0
    %3129 = vmatpush1.msra.mxu0 0.0
    %3130 = vmatprep.subr.mxu0 0.0
    %3131 = vmatpush1.msra.mxu0 0.0
    %3132 = vmatprep.subr.mxu0 0.0
    %3133 = vmatpush1.msra.mxu0 0.0
    %3134 = vmatprep.subr.mxu0 0.0
    %3135 = vmatpush1.msra.mxu0 0.0
    %3136 = vmatprep.subr.mxu0 0.0
    %3137 = vmatpush1.msra.mxu0 0.0
    %3138 = vmatprep.subr.mxu0 0.0
    %3139 = vmatpush1.msra.mxu0 0.0
    %3140 = vmatprep.subr.mxu0 0.0
    %3141 = vmatpush1.msra.mxu0 0.0
    %3142 = vmatprep.subr.mxu0 0.0
    %3143 = vmatpush1.msra.mxu0 %v100
    %3144 = vmatprep.subr.mxu0 0.0
    %3145 = vmatpush1.msra.mxu0 %v99
    %3146 = vmatprep.subr.mxu0 0.0
    %3147 = vmatpush1.msra.mxu0 %v98
    %3148 = vmatprep.subr.mxu0 0.0
    %3149 = vmatpush1.msra.mxu0 %v97
    %3150 = vmatprep.subr.mxu0 0.0
    %3151 = vmatpush2.msra.mxu0 0.0
    %3152 = vmatprep.subr.mxu0 0.0
    %3153 = vmatpush2.msra.mxu0 0.0
    %3154 = vmatprep.subr.mxu0 0.0
    %3155 = vmatpush2.msra.mxu0 0.0
    %3156 = vmatprep.subr.mxu0 0.0
    %3157 = vmatpush2.msra.mxu0 0.0
    %3158 = vmatprep.subr.mxu0 0.0
    %3159 = vmatpush2.msra.mxu0 0.0
    %3160 = vmatprep.subr.mxu0 0.0
    %3161 = vmatpush2.msra.mxu0 0.0
    %3162 = vmatprep.subr.mxu0 0.0
    %3163 = vmatpush2.msra.mxu0 0.0
    %3164 = vmatprep.subr.mxu0 0.0
    %3165 = vmatpush2.msra.mxu0 0.0
    %3166 = vmatprep.subr.mxu0 0.0
    %3167 = vmatpush2.msra.mxu0 0.0
    %3168 = vmatprep.subr.mxu0 0.0
    %3169 = vmatpush2.msra.mxu0 0.0
    %3170 = vmatprep.subr.mxu0 0.0
    %3171 = vmatpush2.msra.mxu0 0.0
    %3172 = vmatprep.subr.mxu0 0.0
    %3173 = vmatpush2.msra.mxu0 0.0
    %3174 = vmatprep.subr.mxu0 0.0
    %3175 = vmatpush2.msra.mxu0 0.0
    %3176 = vmatprep.subr.mxu0 0.0
    %3177 = vmatpush2.msra.mxu0 0.0
    %3178 = vmatprep.subr.mxu0 0.0
    %3179 = vmatpush2.msra.mxu0 0.0
    %3180 = vmatprep.subr.mxu0 0.0
    %3181 = vmatpush2.msra.mxu0 0.0
    %3182 = vmatprep.mubr.f32.mxu0 0.0
    %3183 = vmatmul.mubr.f32.gmra.mxu0 %v2536
    %v3184 = vpop.f32.mrf.mxu0
    %v3185 = vadd.f32 0.0, %v3184
    %v3186 = vpop.f32.mrf.mxu0
    %3187 = vdwg.mxu0
    %v3188 = vadd.f32 %v3115, %v3185
    %v3189 = vadd.f32 %v3188, %v113
    %v3190 = vxor.u32 %v3189, 2147483648
    %v3191 = vmul.f32 %v3190, 1.442695
    %v3192 = vpow.pop %v3191
    %v3193 = vadd.f32 %v3192, 1.0
    %v3194 = vrcp.pop %v3193
    %v3195 = vmul.f32 1.0, %v3194
    %v3196 = vtanh.pop %v3189
    %v3197 = vmul.f32 %v3195, %v2456
    %3199 = vrot.lane.b32.xlu0 %v3196, 64
    %v3200 = vpop.permute.xlu0 %3199
    %v3202 = vmul.f32 %v3195, %v3200
    %3204 = vrot.lane.b32.xlu0 %v3202, 32
    %v3205 = vpop.permute.xlu0 %3204
    %v3207 = vadd.f32 %v3197, %v3205
    %v3208 = vtanh.pop %v3207
    %3210 = vrot.lane.b32.xlu0 %v3208, 64
    %v3211 = vpop.permute.xlu0 %3210
    %v3213 = vmul.f32 %v3195, %v3211
    %3214 = vmatprep.subr.mxu0 0.0
    %3215 = vmatpush1.msra.mxu0 0.0
    %3216 = vmatprep.subr.mxu0 0.0
    %3217 = vmatpush1.msra.mxu0 0.0
    %3218 = vmatprep.subr.mxu0 0.0
    %3219 = vmatpush1.msra.mxu0 0.0
    %3220 = vmatprep.subr.mxu0 0.0
    %3221 = vmatpush1.msra.mxu0 0.0
    %3222 = vmatprep.subr.mxu0 0.0
    %3223 = vmatpush1.msra.mxu0 0.0
    %3224 = vmatprep.subr.mxu0 0.0
    %3225 = vmatpush1.msra.mxu0 0.0
    %3226 = vmatprep.subr.mxu0 0.0
    %3227 = vmatpush1.msra.mxu0 0.0
    %3228 = vmatprep.subr.mxu0 0.0
    %3229 = vmatpush1.msra.mxu0 0.0
    %3230 = vmatprep.subr.mxu0 0.0
    %3231 = vmatpush1.msra.mxu0 0.0
    %3232 = vmatprep.subr.mxu0 0.0
    %3233 = vmatpush1.msra.mxu0 0.0
    %3234 = vmatprep.subr.mxu0 0.0
    %3235 = vmatpush1.msra.mxu0 0.0
    %3236 = vmatprep.subr.mxu0 0.0
    %3237 = vmatpush1.msra.mxu0 0.0
    %3238 = vmatprep.subr.mxu0 0.0
    %3239 = vmatpush1.msra.mxu0 %v108
    %3240 = vmatprep.subr.mxu0 0.0
    %3241 = vmatpush1.msra.mxu0 %v107
    %3242 = vmatprep.subr.mxu0 0.0
    %3243 = vmatpush1.msra.mxu0 %v106
    %3244 = vmatprep.subr.mxu0 0.0
    %3245 = vmatpush1.msra.mxu0 %v105
    %3246 = vmatprep.subr.mxu0 0.0
    %3247 = vmatpush2.msra.mxu0 0.0
    %3248 = vmatprep.subr.mxu0 0.0
    %3249 = vmatpush2.msra.mxu0 0.0
    %3250 = vmatprep.subr.mxu0 0.0
    %3251 = vmatpush2.msra.mxu0 0.0
    %3252 = vmatprep.subr.mxu0 0.0
    %3253 = vmatpush2.msra.mxu0 0.0
    %3254 = vmatprep.subr.mxu0 0.0
    %3255 = vmatpush2.msra.mxu0 0.0
    %3256 = vmatprep.subr.mxu0 0.0
    %3257 = vmatpush2.msra.mxu0 0.0
    %3258 = vmatprep.subr.mxu0 0.0
    %3259 = vmatpush2.msra.mxu0 0.0
    %3260 = vmatprep.subr.mxu0 0.0
    %3261 = vmatpush2.msra.mxu0 0.0
    %3262 = vmatprep.subr.mxu0 0.0
    %3263 = vmatpush2.msra.mxu0 0.0
    %3264 = vmatprep.subr.mxu0 0.0
    %3265 = vmatpush2.msra.mxu0 0.0
    %3266 = vmatprep.subr.mxu0 0.0
    %3267 = vmatpush2.msra.mxu0 0.0
    %3268 = vmatprep.subr.mxu0 0.0
    %3269 = vmatpush2.msra.mxu0 0.0
    %3270 = vmatprep.subr.mxu0 0.0
    %3271 = vmatpush2.msra.mxu0 0.0
    %3272 = vmatprep.subr.mxu0 0.0
    %3273 = vmatpush2.msra.mxu0 0.0
    %3274 = vmatprep.subr.mxu0 0.0
    %3275 = vmatpush2.msra.mxu0 0.0
    %3276 = vmatprep.subr.mxu0 0.0
    %3277 = vmatpush2.msra.mxu0 0.0
    %3278 = vmatprep.mubr.f32.mxu0 0.0
    %3279 = vmatmul.mubr.f32.gmra.mxu0 %v2636
    %v3280 = vpop.f32.mrf.mxu0
    %v3281 = vadd.f32 0.0, %v3280
    %v3282 = vpop.f32.mrf.mxu0
    %3283 = vdwg.mxu0
    %3285 = vrot.lane.b32.xlu0 %v3213, 32
    %v3286 = vpop.permute.xlu0 %3285
    %v3287 = vsel %vm266, %v3286, 0
    %3289 = vmatprep.subr.mxu0 0.0
    %3290 = vmatpush1.msra.mxu0 0.0
    %3291 = vmatprep.subr.mxu0 0.0
    %3292 = vmatpush1.msra.mxu0 0.0
    %3293 = vmatprep.subr.mxu0 0.0
    %3294 = vmatpush1.msra.mxu0 0.0
    %3295 = vmatprep.subr.mxu0 0.0
    %3296 = vmatpush1.msra.mxu0 0.0
    %3297 = vmatprep.subr.mxu0 0.0
    %3298 = vmatpush1.msra.mxu0 0.0
    %3299 = vmatprep.subr.mxu0 0.0
    %3300 = vmatpush1.msra.mxu0 0.0
    %3301 = vmatprep.subr.mxu0 0.0
    %3302 = vmatpush1.msra.mxu0 0.0
    %3303 = vmatprep.subr.mxu0 0.0
    %3304 = vmatpush1.msra.mxu0 0.0
    %3305 = vmatprep.subr.mxu0 0.0
    %3306 = vmatpush1.msra.mxu0 0.0
    %3307 = vmatprep.subr.mxu0 0.0
    %3308 = vmatpush1.msra.mxu0 0.0
    %3309 = vmatprep.subr.mxu0 0.0
    %3310 = vmatpush1.msra.mxu0 0.0
    %3311 = vmatprep.subr.mxu0 0.0
    %3312 = vmatpush1.msra.mxu0 0.0
    %3313 = vmatprep.subr.mxu0 0.0
    %3314 = vmatpush1.msra.mxu0 %v104
    %3315 = vmatprep.subr.mxu0 0.0
    %3316 = vmatpush1.msra.mxu0 %v103
    %3317 = vmatprep.subr.mxu0 0.0
    %3318 = vmatpush1.msra.mxu0 %v102
    %3319 = vmatprep.subr.mxu0 0.0
    %3320 = vmatpush1.msra.mxu0 %v101
    %3321 = vmatprep.subr.mxu0 0.0
    %3322 = vmatpush2.msra.mxu0 0.0
    %3323 = vmatprep.subr.mxu0 0.0
    %3324 = vmatpush2.msra.mxu0 0.0
    %3325 = vmatprep.subr.mxu0 0.0
    %3326 = vmatpush2.msra.mxu0 0.0
    %3327 = vmatprep.subr.mxu0 0.0
    %3328 = vmatpush2.msra.mxu0 0.0
    %3329 = vmatprep.subr.mxu0 0.0
    %3330 = vmatpush2.msra.mxu0 0.0
    %3331 = vmatprep.subr.mxu0 0.0
    %3332 = vmatpush2.msra.mxu0 0.0
    %3333 = vmatprep.subr.mxu0 0.0
    %3334 = vmatpush2.msra.mxu0 0.0
    %3335 = vmatprep.subr.mxu0 0.0
    %3336 = vmatpush2.msra.mxu0 0.0
    %3337 = vmatprep.subr.mxu0 0.0
    %3338 = vmatpush2.msra.mxu0 0.0
    %3339 = vmatprep.subr.mxu0 0.0
    %3340 = vmatpush2.msra.mxu0 0.0
    %3341 = vmatprep.subr.mxu0 0.0
    %3342 = vmatpush2.msra.mxu0 0.0
    %3343 = vmatprep.subr.mxu0 0.0
    %3344 = vmatpush2.msra.mxu0 0.0
    %3345 = vmatprep.subr.mxu0 0.0
    %3346 = vmatpush2.msra.mxu0 0.0
    %3347 = vmatprep.subr.mxu0 0.0
    %3348 = vmatpush2.msra.mxu0 0.0
    %3349 = vmatprep.subr.mxu0 0.0
    %3350 = vmatpush2.msra.mxu0 0.0
    %3351 = vmatprep.subr.mxu0 0.0
    %3352 = vmatpush2.msra.mxu0 0.0
    %3353 = vmatprep.mubr.f32.mxu0 0.0
    %3354 = vmatmul.mubr.f32.gmra.mxu0 %v3287
    %v3355 = vpop.f32.mrf.mxu0
    %v3356 = vadd.f32 %v3281, %v3355
    %v3357 = vpop.f32.mrf.mxu0
    %3358 = vdwg.mxu0
    %v3359 = vadd.f32 %v3356, %v118
    %v3360 = vxor.u32 %v3359, 2147483648
    %v3361 = vmul.f32 %v3360, 1.442695
    %v3362 = vpow.pop %v3361
    %v3363 = vadd.f32 %v3362, 1.0
    %v3364 = vrcp.pop %v3363
    %v3365 = vmul.f32 1.0, %v3364
    %v3366 = vtanh.pop %v3359
    %v3367 = vmul.f32 %v3365, %v2626
    %3369 = vrot.lane.b32.xlu0 %v3366, 64
    %v3370 = vpop.permute.xlu0 %3369
    %v3372 = vmul.f32 %v3365, %v3370
    %3374 = vrot.lane.b32.xlu0 %v3372, 32
    %v3375 = vpop.permute.xlu0 %3374
    %v3377 = vadd.f32 %v3367, %v3375
    %v3378 = vtanh.pop %v3377
    %3380 = vrot.lane.b32.xlu0 %v3378, 64
    %v3381 = vpop.permute.xlu0 %3380
    %v3383 = vmul.f32 %v3365, %v3381
    %3385 = vrot.lane.b32.xlu0 %v3383, 32
    %v3386 = vpop.permute.xlu0 %3385
    %v3387 = vsel %vm266, %v3386, 0
    %3389 = vmatprep.subr.mxu0 0.0
    %3390 = vmatpush1.msra.mxu0 0.0
    %3391 = vmatprep.subr.mxu0 0.0
    %3392 = vmatpush1.msra.mxu0 0.0
    %3393 = vmatprep.subr.mxu0 0.0
    %3394 = vmatpush1.msra.mxu0 0.0
    %3395 = vmatprep.subr.mxu0 0.0
    %3396 = vmatpush1.msra.mxu0 0.0
    %3397 = vmatprep.subr.mxu0 0.0
    %3398 = vmatpush1.msra.mxu0 0.0
    %3399 = vmatprep.subr.mxu0 0.0
    %3400 = vmatpush1.msra.mxu0 0.0
    %3401 = vmatprep.subr.mxu0 0.0
    %3402 = vmatpush1.msra.mxu0 0.0
    %3403 = vmatprep.subr.mxu0 0.0
    %3404 = vmatpush1.msra.mxu0 0.0
    %3405 = vmatprep.subr.mxu0 0.0
    %3406 = vmatpush1.msra.mxu0 0.0
    %3407 = vmatprep.subr.mxu0 0.0
    %3408 = vmatpush1.msra.mxu0 0.0
    %3409 = vmatprep.subr.mxu0 0.0
    %3410 = vmatpush1.msra.mxu0 0.0
    %3411 = vmatprep.subr.mxu0 0.0
    %3412 = vmatpush1.msra.mxu0 0.0
    %3413 = vmatprep.subr.mxu0 0.0
    %3414 = vmatpush1.msra.mxu0 %v377
    %3415 = vmatprep.subr.mxu0 0.0
    %3416 = vmatpush1.msra.mxu0 %v372
    %3417 = vmatprep.subr.mxu0 0.0
    %3418 = vmatpush1.msra.mxu0 %v367
    %3419 = vmatprep.subr.mxu0 0.0
    %3420 = vmatpush1.msra.mxu0 %v362
    %3421 = vmatprep.subr.mxu0 0.0
    %3422 = vmatpush2.msra.mxu0 0.0
    %3423 = vmatprep.subr.mxu0 0.0
    %3424 = vmatpush2.msra.mxu0 0.0
    %3425 = vmatprep.subr.mxu0 0.0
    %3426 = vmatpush2.msra.mxu0 0.0
    %3427 = vmatprep.subr.mxu0 0.0
    %3428 = vmatpush2.msra.mxu0 0.0
    %3429 = vmatprep.subr.mxu0 0.0
    %3430 = vmatpush2.msra.mxu0 0.0
    %3431 = vmatprep.subr.mxu0 0.0
    %3432 = vmatpush2.msra.mxu0 0.0
    %3433 = vmatprep.subr.mxu0 0.0
    %3434 = vmatpush2.msra.mxu0 0.0
    %3435 = vmatprep.subr.mxu0 0.0
    %3436 = vmatpush2.msra.mxu0 0.0
    %3437 = vmatprep.subr.mxu0 0.0
    %3438 = vmatpush2.msra.mxu0 0.0
    %3439 = vmatprep.subr.mxu0 0.0
    %3440 = vmatpush2.msra.mxu0 0.0
    %3441 = vmatprep.subr.mxu0 0.0
    %3442 = vmatpush2.msra.mxu0 0.0
    %3443 = vmatprep.subr.mxu0 0.0
    %3444 = vmatpush2.msra.mxu0 0.0
    %3445 = vmatprep.subr.mxu0 0.0
    %3446 = vmatpush2.msra.mxu0 0.0
    %3447 = vmatprep.subr.mxu0 0.0
    %3448 = vmatpush2.msra.mxu0 0.0
    %3449 = vmatprep.subr.mxu0 0.0
    %3450 = vmatpush2.msra.mxu0 0.0
    %3451 = vmatprep.subr.mxu0 0.0
    %3452 = vmatpush2.msra.mxu0 0.0
    %3453 = vmatprep.mubr.f32.mxu0 0.0
    %3454 = vmatmul.mubr.f32.gmra.mxu0 %v3387
    %v3455 = vpop.f32.mrf.mxu0
    %v3456 = vadd.f32 0.0, %v3455
    %v3457 = vpop.f32.mrf.mxu0
    %3458 = vdwg.mxu0
    %v3459 = vmul.f32 %v3456, %v495
    %v3461 = vsel %vm1202, %v3459, 0
    %3463 = vmatprep.subr.mxu0 0.0
    %3464 = vmatpush1.msra.mxu0 0.0
    %3465 = vmatprep.subr.mxu0 0.0
    %3466 = vmatpush1.msra.mxu0 0.0
    %3467 = vmatprep.subr.mxu0 0.0
    %3468 = vmatpush1.msra.mxu0 0.0
    %3469 = vmatprep.subr.mxu0 0.0
    %3470 = vmatpush1.msra.mxu0 0.0
    %3471 = vmatprep.subr.mxu0 0.0
    %3472 = vmatpush1.msra.mxu0 0.0
    %3473 = vmatprep.subr.mxu0 0.0
    %3474 = vmatpush1.msra.mxu0 0.0
    %3475 = vmatprep.subr.mxu0 0.0
    %3476 = vmatpush1.msra.mxu0 0.0
    %3477 = vmatprep.subr.mxu0 0.0
    %3478 = vmatpush1.msra.mxu0 0.0
    %3479 = vmatprep.subr.mxu0 0.0
    %3480 = vmatpush1.msra.mxu0 %v534
    %3481 = vmatprep.subr.mxu0 0.0
    %3482 = vmatpush1.msra.mxu0 %v533
    %3483 = vmatprep.subr.mxu0 0.0
    %3484 = vmatpush1.msra.mxu0 %v532
    %3485 = vmatprep.subr.mxu0 0.0
    %3486 = vmatpush1.msra.mxu0 %v531
    %3487 = vmatprep.subr.mxu0 0.0
    %3488 = vmatpush1.msra.mxu0 %v530
    %3489 = vmatprep.subr.mxu0 0.0
    %3490 = vmatpush1.msra.mxu0 %v529
    %3491 = vmatprep.subr.mxu0 0.0
    %3492 = vmatpush1.msra.mxu0 %v528
    %3493 = vmatprep.subr.mxu0 0.0
    %3494 = vmatpush1.msra.mxu0 %v527
    %3495 = vmatprep.subr.mxu0 0.0
    %3496 = vmatpush2.msra.mxu0 0.0
    %3497 = vmatprep.subr.mxu0 0.0
    %3498 = vmatpush2.msra.mxu0 0.0
    %3499 = vmatprep.subr.mxu0 0.0
    %3500 = vmatpush2.msra.mxu0 0.0
    %3501 = vmatprep.subr.mxu0 0.0
    %3502 = vmatpush2.msra.mxu0 0.0
    %3503 = vmatprep.subr.mxu0 0.0
    %3504 = vmatpush2.msra.mxu0 0.0
    %3505 = vmatprep.subr.mxu0 0.0
    %3506 = vmatpush2.msra.mxu0 0.0
    %3507 = vmatprep.subr.mxu0 0.0
    %3508 = vmatpush2.msra.mxu0 0.0
    %3509 = vmatprep.subr.mxu0 0.0
    %3510 = vmatpush2.msra.mxu0 0.0
    %3511 = vmatprep.subr.mxu0 0.0
    %3512 = vmatpush2.msra.mxu0 0.0
    %3513 = vmatprep.subr.mxu0 0.0
    %3514 = vmatpush2.msra.mxu0 0.0
    %3515 = vmatprep.subr.mxu0 0.0
    %3516 = vmatpush2.msra.mxu0 0.0
    %3517 = vmatprep.subr.mxu0 0.0
    %3518 = vmatpush2.msra.mxu0 0.0
    %3519 = vmatprep.subr.mxu0 0.0
    %3520 = vmatpush2.msra.mxu0 0.0
    %3521 = vmatprep.subr.mxu0 0.0
    %3522 = vmatpush2.msra.mxu0 0.0
    %3523 = vmatprep.subr.mxu0 0.0
    %3524 = vmatpush2.msra.mxu0 0.0
    %3525 = vmatprep.subr.mxu0 0.0
    %3526 = vmatpush2.msra.mxu0 0.0
    %3527 = vmatprep.mubr.f32.mxu0 0.0
    %3528 = vmatmul.mubr.f32.gmra.mxu0 %v3461
    %v3529 = vpop.f32.mrf.mxu0
    %v3530 = vadd.f32 0.0, %v3529
    %v3531 = vpop.f32.mrf.mxu0
    %3532 = vdwg.mxu0
    %v3533 = vsel %vm1276, %v3530, -inf
    %3534 = vmax.xlane.f32.xlu0 %v3533
    %v3535 = vpop.xlane.xlu0 %3534
    %v3536 = vsub.f32 %v3530, %v3535
    %v3537 = vmul.f32 %v3536, 1.442695
    %v3538 = vpow.pop %v3537
    %v3539 = vsel %vm1276, %v3538, 0.0
    %3540 = vadd.xlane.f32.xlu0 %v3539
    %v3541 = vpop.xlane.xlu0 %3540
    %v3542 = vrcp.pop %v3541
    %v3543 = vmul.f32 %v3541, %v3542
    %v3544 = vsub.f32 2.0, %v3543
    %v3545 = vmul.f32 %v3542, %v3544
    %v3546 = vmul.f32 %v3538, %v3545
    %3548 = vrot.lane.b32.xlu0 %v3546, 8
    %v3549 = vpop.permute.xlu0 %3548
    %3551 = vrot.lane.b32.xlu0 %v3546, 16
    %v3552 = vpop.permute.xlu0 %3551
    %3554 = vrot.lane.b32.xlu0 %v3546, 24
    %v3555 = vpop.permute.xlu0 %3554
    %3557 = vrot.lane.b32.xlu0 %v3546, 32
    %v3558 = vpop.permute.xlu0 %3557
    %3560 = vrot.lane.b32.xlu0 %v3546, 40
    %v3561 = vpop.permute.xlu0 %3560
    %3563 = vrot.lane.b32.xlu0 %v3546, 48
    %v3564 = vpop.permute.xlu0 %3563
    %3566 = vrot.lane.b32.xlu0 %v3546, 56
    %v3567 = vpop.permute.xlu0 %3566
    %v3569 = vsel %vm1276, %v3546, %v3549
    %v3570 = vsel %vm579, %v3569, %v3552
    %v3571 = vsel %vm1315, %v3570, %v3555
    %v3572 = vsel %vm266, %v3571, %v3558
    %v3573 = vsel %vm1318, %v3572, %v3561
    %v3574 = vsel %vm1320, %v3573, %v3564
    %v3575 = vsel %vm1322, %v3574, %v3567
    %v3576 = vmul.f32 %v3575, %v495
    %3577 = vmatprep.subr.mxu0 0.0
    %3578 = vmatpush1.msra.mxu0 0.0
    %3579 = vmatprep.subr.mxu0 0.0
    %3580 = vmatpush1.msra.mxu0 0.0
    %3581 = vmatprep.subr.mxu0 0.0
    %3582 = vmatpush1.msra.mxu0 0.0
    %3583 = vmatprep.subr.mxu0 0.0
    %3584 = vmatpush1.msra.mxu0 0.0
    %3585 = vmatprep.subr.mxu0 0.0
    %3586 = vmatpush1.msra.mxu0 0.0
    %3587 = vmatprep.subr.mxu0 0.0
    %3588 = vmatpush1.msra.mxu0 0.0
    %3589 = vmatprep.subr.mxu0 0.0
    %3590 = vmatpush1.msra.mxu0 0.0
    %3591 = vmatprep.subr.mxu0 0.0
    %3592 = vmatpush1.msra.mxu0 0.0
    %3593 = vmatprep.subr.mxu0 0.0
    %3594 = vmatpush1.msra.mxu0 0.0
    %3595 = vmatprep.subr.mxu0 0.0
    %3596 = vmatpush1.msra.mxu0 0.0
    %3597 = vmatprep.subr.mxu0 0.0
    %3598 = vmatpush1.msra.mxu0 0.0
    %3599 = vmatprep.subr.mxu0 0.0
    %3600 = vmatpush1.msra.mxu0 0.0
    %3601 = vmatprep.subr.mxu0 0.0
    %3602 = vmatpush1.msra.mxu0 %v130
    %3603 = vmatprep.subr.mxu0 0.0
    %3604 = vmatpush1.msra.mxu0 %v129
    %3605 = vmatprep.subr.mxu0 0.0
    %3606 = vmatpush1.msra.mxu0 %v128
    %3607 = vmatprep.subr.mxu0 0.0
    %3608 = vmatpush1.msra.mxu0 %v127
    %3609 = vmatprep.subr.mxu0 0.0
    %3610 = vmatpush2.msra.mxu0 0.0
    %3611 = vmatprep.subr.mxu0 0.0
    %3612 = vmatpush2.msra.mxu0 0.0
    %3613 = vmatprep.subr.mxu0 0.0
    %3614 = vmatpush2.msra.mxu0 0.0
    %3615 = vmatprep.subr.mxu0 0.0
    %3616 = vmatpush2.msra.mxu0 0.0
    %3617 = vmatprep.subr.mxu0 0.0
    %3618 = vmatpush2.msra.mxu0 0.0
    %3619 = vmatprep.subr.mxu0 0.0
    %3620 = vmatpush2.msra.mxu0 0.0
    %3621 = vmatprep.subr.mxu0 0.0
    %3622 = vmatpush2.msra.mxu0 0.0
    %3623 = vmatprep.subr.mxu0 0.0
    %3624 = vmatpush2.msra.mxu0 0.0
    %3625 = vmatprep.subr.mxu0 0.0
    %3626 = vmatpush2.msra.mxu0 0.0
    %3627 = vmatprep.subr.mxu0 0.0
    %3628 = vmatpush2.msra.mxu0 0.0
    %3629 = vmatprep.subr.mxu0 0.0
    %3630 = vmatpush2.msra.mxu0 0.0
    %3631 = vmatprep.subr.mxu0 0.0
    %3632 = vmatpush2.msra.mxu0 0.0
    %3633 = vmatprep.subr.mxu0 0.0
    %3634 = vmatpush2.msra.mxu0 0.0
    %3635 = vmatprep.subr.mxu0 0.0
    %3636 = vmatpush2.msra.mxu0 0.0
    %3637 = vmatprep.subr.mxu0 0.0
    %3638 = vmatpush2.msra.mxu0 0.0
    %3639 = vmatprep.subr.mxu0 0.0
    %3640 = vmatpush2.msra.mxu0 0.0
    %3641 = vmatprep.mubr.f32.mxu0 0.0
    %3642 = vmatmul.mubr.f32.gmra.mxu0 %v3387
    %v3643 = vpop.f32.mrf.mxu0
    %v3644 = vadd.f32 0.0, %v3643
    %v3645 = vpop.f32.mrf.mxu0
    %3646 = vdwg.mxu0
    %v3648 = vsel %vm1202, %v3576, 0
    %3650 = vmatprep.subr.mxu0 0.0
    %3651 = vmatpush1.msra.mxu0 0.0
    %3652 = vmatprep.subr.mxu0 0.0
    %3653 = vmatpush1.msra.mxu0 0.0
    %3654 = vmatprep.subr.mxu0 0.0
    %3655 = vmatpush1.msra.mxu0 0.0
    %3656 = vmatprep.subr.mxu0 0.0
    %3657 = vmatpush1.msra.mxu0 0.0
    %3658 = vmatprep.subr.mxu0 0.0
    %3659 = vmatpush1.msra.mxu0 0.0
    %3660 = vmatprep.subr.mxu0 0.0
    %3661 = vmatpush1.msra.mxu0 0.0
    %3662 = vmatprep.subr.mxu0 0.0
    %3663 = vmatpush1.msra.mxu0 0.0
    %3664 = vmatprep.subr.mxu0 0.0
    %3665 = vmatpush1.msra.mxu0 0.0
    %3666 = vmatprep.subr.mxu0 0.0
    %3667 = vmatpush1.msra.mxu0 %v482
    %3668 = vmatprep.subr.mxu0 0.0
    %3669 = vmatpush1.msra.mxu0 %v477
    %3670 = vmatprep.subr.mxu0 0.0
    %3671 = vmatpush1.msra.mxu0 %v472
    %3672 = vmatprep.subr.mxu0 0.0
    %3673 = vmatpush1.msra.mxu0 %v467
    %3674 = vmatprep.subr.mxu0 0.0
    %3675 = vmatpush1.msra.mxu0 %v462
    %3676 = vmatprep.subr.mxu0 0.0
    %3677 = vmatpush1.msra.mxu0 %v457
    %3678 = vmatprep.subr.mxu0 0.0
    %3679 = vmatpush1.msra.mxu0 %v452
    %3680 = vmatprep.subr.mxu0 0.0
    %3681 = vmatpush1.msra.mxu0 %v447
    %3682 = vmatprep.subr.mxu0 0.0
    %3683 = vmatpush2.msra.mxu0 0.0
    %3684 = vmatprep.subr.mxu0 0.0
    %3685 = vmatpush2.msra.mxu0 0.0
    %3686 = vmatprep.subr.mxu0 0.0
    %3687 = vmatpush2.msra.mxu0 0.0
    %3688 = vmatprep.subr.mxu0 0.0
    %3689 = vmatpush2.msra.mxu0 0.0
    %3690 = vmatprep.subr.mxu0 0.0
    %3691 = vmatpush2.msra.mxu0 0.0
    %3692 = vmatprep.subr.mxu0 0.0
    %3693 = vmatpush2.msra.mxu0 0.0
    %3694 = vmatprep.subr.mxu0 0.0
    %3695 = vmatpush2.msra.mxu0 0.0
    %3696 = vmatprep.subr.mxu0 0.0
    %3697 = vmatpush2.msra.mxu0 0.0
    %3698 = vmatprep.subr.mxu0 0.0
    %3699 = vmatpush2.msra.mxu0 0.0
    %3700 = vmatprep.subr.mxu0 0.0
    %3701 = vmatpush2.msra.mxu0 0.0
    %3702 = vmatprep.subr.mxu0 0.0
    %3703 = vmatpush2.msra.mxu0 0.0
    %3704 = vmatprep.subr.mxu0 0.0
    %3705 = vmatpush2.msra.mxu0 0.0
    %3706 = vmatprep.subr.mxu0 0.0
    %3707 = vmatpush2.msra.mxu0 0.0
    %3708 = vmatprep.subr.mxu0 0.0
    %3709 = vmatpush2.msra.mxu0 0.0
    %3710 = vmatprep.subr.mxu0 0.0
    %3711 = vmatpush2.msra.mxu0 0.0
    %3712 = vmatprep.subr.mxu0 0.0
    %3713 = vmatpush2.msra.mxu0 0.0
    %3714 = vmatprep.mubr.f32.mxu0 0.0
    %3715 = vmatmul.mubr.f32.gmra.mxu0 %v3648
    %v3716 = vpop.f32.mrf.mxu0
    %v3717 = vadd.f32 %v3644, %v3716
    %v3718 = vpop.f32.mrf.mxu0
    %3719 = vdwg.mxu0
    %v3720 = vtanh.pop %v3717
    %s3721 = scalar_lea.vmem [#allocation10], 24
    %3722 = vst.msk [vmem:[%s3721] sm:$0xff] %vm266, %v3720
    %v3724 = vsel %vm266, %v3720, 0
    %3726 = vmatprep.subr.mxu0 0.0
    %3727 = vmatpush1.msra.mxu0 0.0
    %3728 = vmatprep.subr.mxu0 0.0
    %3729 = vmatpush1.msra.mxu0 0.0
    %3730 = vmatprep.subr.mxu0 0.0
    %3731 = vmatpush1.msra.mxu0 0.0
    %3732 = vmatprep.subr.mxu0 0.0
    %3733 = vmatpush1.msra.mxu0 0.0
    %3734 = vmatprep.subr.mxu0 0.0
    %3735 = vmatpush1.msra.mxu0 0.0
    %3736 = vmatprep.subr.mxu0 0.0
    %3737 = vmatpush1.msra.mxu0 0.0
    %3738 = vmatprep.subr.mxu0 0.0
    %3739 = vmatpush1.msra.mxu0 0.0
    %3740 = vmatprep.subr.mxu0 0.0
    %3741 = vmatpush1.msra.mxu0 0.0
    %3742 = vmatprep.subr.mxu0 0.0
    %3743 = vmatpush1.msra.mxu0 0.0
    %3744 = vmatprep.subr.mxu0 0.0
    %3745 = vmatpush1.msra.mxu0 0.0
    %3746 = vmatprep.subr.mxu0 0.0
    %3747 = vmatpush1.msra.mxu0 0.0
    %3748 = vmatprep.subr.mxu0 0.0
    %3749 = vmatpush1.msra.mxu0 0.0
    %3750 = vmatprep.subr.mxu0 0.0
    %3751 = vmatpush1.msra.mxu0 %v96
    %3752 = vmatprep.subr.mxu0 0.0
    %3753 = vmatpush1.msra.mxu0 %v95
    %3754 = vmatprep.subr.mxu0 0.0
    %3755 = vmatpush1.msra.mxu0 %v94
    %3756 = vmatprep.subr.mxu0 0.0
    %3757 = vmatpush1.msra.mxu0 %v93
    %3758 = vmatprep.subr.mxu0 0.0
    %3759 = vmatpush2.msra.mxu0 0.0
    %3760 = vmatprep.subr.mxu0 0.0
    %3761 = vmatpush2.msra.mxu0 0.0
    %3762 = vmatprep.subr.mxu0 0.0
    %3763 = vmatpush2.msra.mxu0 0.0
    %3764 = vmatprep.subr.mxu0 0.0
    %3765 = vmatpush2.msra.mxu0 0.0
    %3766 = vmatprep.subr.mxu0 0.0
    %3767 = vmatpush2.msra.mxu0 0.0
    %3768 = vmatprep.subr.mxu0 0.0
    %3769 = vmatpush2.msra.mxu0 0.0
    %3770 = vmatprep.subr.mxu0 0.0
    %3771 = vmatpush2.msra.mxu0 0.0
    %3772 = vmatprep.subr.mxu0 0.0
    %3773 = vmatpush2.msra.mxu0 0.0
    %3774 = vmatprep.subr.mxu0 0.0
    %3775 = vmatpush2.msra.mxu0 0.0
    %3776 = vmatprep.subr.mxu0 0.0
    %3777 = vmatpush2.msra.mxu0 0.0
    %3778 = vmatprep.subr.mxu0 0.0
    %3779 = vmatpush2.msra.mxu0 0.0
    %3780 = vmatprep.subr.mxu0 0.0
    %3781 = vmatpush2.msra.mxu0 0.0
    %3782 = vmatprep.subr.mxu0 0.0
    %3783 = vmatpush2.msra.mxu0 0.0
    %3784 = vmatprep.subr.mxu0 0.0
    %3785 = vmatpush2.msra.mxu0 0.0
    %3786 = vmatprep.subr.mxu0 0.0
    %3787 = vmatpush2.msra.mxu0 0.0
    %3788 = vmatprep.subr.mxu0 0.0
    %3789 = vmatpush2.msra.mxu0 0.0
    %3790 = vmatprep.mubr.f32.mxu0 0.0
    %3791 = vmatmul.mubr.f32.gmra.mxu0 %v3724
    %v3792 = vpop.f32.mrf.mxu0
    %v3793 = vadd.f32 0.0, %v3792
    %v3794 = vpop.f32.mrf.mxu0
    %3795 = vdwg.mxu0
    %v3797 = vsel %vm266, %v685, 0
    %3799 = vmatprep.subr.mxu0 0.0
    %3800 = vmatpush1.msra.mxu0 0.0
    %3801 = vmatprep.subr.mxu0 0.0
    %3802 = vmatpush1.msra.mxu0 0.0
    %3803 = vmatprep.subr.mxu0 0.0
    %3804 = vmatpush1.msra.mxu0 0.0
    %3805 = vmatprep.subr.mxu0 0.0
    %3806 = vmatpush1.msra.mxu0 0.0
    %3807 = vmatprep.subr.mxu0 0.0
    %3808 = vmatpush1.msra.mxu0 0.0
    %3809 = vmatprep.subr.mxu0 0.0
    %3810 = vmatpush1.msra.mxu0 0.0
    %3811 = vmatprep.subr.mxu0 0.0
    %3812 = vmatpush1.msra.mxu0 0.0
    %3813 = vmatprep.subr.mxu0 0.0
    %3814 = vmatpush1.msra.mxu0 0.0
    %3815 = vmatprep.subr.mxu0 0.0
    %3816 = vmatpush1.msra.mxu0 0.0
    %3817 = vmatprep.subr.mxu0 0.0
    %3818 = vmatpush1.msra.mxu0 0.0
    %3819 = vmatprep.subr.mxu0 0.0
    %3820 = vmatpush1.msra.mxu0 0.0
    %3821 = vmatprep.subr.mxu0 0.0
    %3822 = vmatpush1.msra.mxu0 0.0
    %3823 = vmatprep.subr.mxu0 0.0
    %3824 = vmatpush1.msra.mxu0 %v92
    %3825 = vmatprep.subr.mxu0 0.0
    %3826 = vmatpush1.msra.mxu0 %v91
    %3827 = vmatprep.subr.mxu0 0.0
    %3828 = vmatpush1.msra.mxu0 %v90
    %3829 = vmatprep.subr.mxu0 0.0
    %3830 = vmatpush1.msra.mxu0 %v89
    %3831 = vmatprep.subr.mxu0 0.0
    %3832 = vmatpush2.msra.mxu0 0.0
    %3833 = vmatprep.subr.mxu0 0.0
    %3834 = vmatpush2.msra.mxu0 0.0
    %3835 = vmatprep.subr.mxu0 0.0
    %3836 = vmatpush2.msra.mxu0 0.0
    %3837 = vmatprep.subr.mxu0 0.0
    %3838 = vmatpush2.msra.mxu0 0.0
    %3839 = vmatprep.subr.mxu0 0.0
    %3840 = vmatpush2.msra.mxu0 0.0
    %3841 = vmatprep.subr.mxu0 0.0
    %3842 = vmatpush2.msra.mxu0 0.0
    %3843 = vmatprep.subr.mxu0 0.0
    %3844 = vmatpush2.msra.mxu0 0.0
    %3845 = vmatprep.subr.mxu0 0.0
    %3846 = vmatpush2.msra.mxu0 0.0
    %3847 = vmatprep.subr.mxu0 0.0
    %3848 = vmatpush2.msra.mxu0 0.0
    %3849 = vmatprep.subr.mxu0 0.0
    %3850 = vmatpush2.msra.mxu0 0.0
    %3851 = vmatprep.subr.mxu0 0.0
    %3852 = vmatpush2.msra.mxu0 0.0
    %3853 = vmatprep.subr.mxu0 0.0
    %3854 = vmatpush2.msra.mxu0 0.0
    %3855 = vmatprep.subr.mxu0 0.0
    %3856 = vmatpush2.msra.mxu0 0.0
    %3857 = vmatprep.subr.mxu0 0.0
    %3858 = vmatpush2.msra.mxu0 0.0
    %3859 = vmatprep.subr.mxu0 0.0
    %3860 = vmatpush2.msra.mxu0 0.0
    %3861 = vmatprep.subr.mxu0 0.0
    %3862 = vmatpush2.msra.mxu0 0.0
    %3863 = vmatprep.mubr.f32.mxu0 0.0
    %3864 = vmatmul.mubr.f32.gmra.mxu0 %v3797
    %v3865 = vpop.f32.mrf.mxu0
    %v3866 = vadd.f32 %v3793, %v3865
    %v3867 = vpop.f32.mrf.mxu0
    %3868 = vdwg.mxu0
    %3869 = vmatprep.subr.mxu0 0.0
    %3870 = vmatpush1.msra.mxu0 0.0
    %3871 = vmatprep.subr.mxu0 0.0
    %3872 = vmatpush1.msra.mxu0 0.0
    %3873 = vmatprep.subr.mxu0 0.0
    %3874 = vmatpush1.msra.mxu0 0.0
    %3875 = vmatprep.subr.mxu0 0.0
    %3876 = vmatpush1.msra.mxu0 0.0
    %3877 = vmatprep.subr.mxu0 0.0
    %3878 = vmatpush1.msra.mxu0 0.0
    %3879 = vmatprep.subr.mxu0 0.0
    %3880 = vmatpush1.msra.mxu0 0.0
    %3881 = vmatprep.subr.mxu0 0.0
    %3882 = vmatpush1.msra.mxu0 0.0
    %3883 = vmatprep.subr.mxu0 0.0
    %3884 = vmatpush1.msra.mxu0 0.0
    %3885 = vmatprep.subr.mxu0 0.0
    %3886 = vmatpush1.msra.mxu0 0.0
    %3887 = vmatprep.subr.mxu0 0.0
    %3888 = vmatpush1.msra.mxu0 0.0
    %3889 = vmatprep.subr.mxu0 0.0
    %3890 = vmatpush1.msra.mxu0 0.0
    %3891 = vmatprep.subr.mxu0 0.0
    %3892 = vmatpush1.msra.mxu0 0.0
    %3893 = vmatprep.subr.mxu0 0.0
    %3894 = vmatpush1.msra.mxu0 %v100
    %3895 = vmatprep.subr.mxu0 0.0
    %3896 = vmatpush1.msra.mxu0 %v99
    %3897 = vmatprep.subr.mxu0 0.0
    %3898 = vmatpush1.msra.mxu0 %v98
    %3899 = vmatprep.subr.mxu0 0.0
    %3900 = vmatpush1.msra.mxu0 %v97
    %3901 = vmatprep.subr.mxu0 0.0
    %3902 = vmatpush2.msra.mxu0 0.0
    %3903 = vmatprep.subr.mxu0 0.0
    %3904 = vmatpush2.msra.mxu0 0.0
    %3905 = vmatprep.subr.mxu0 0.0
    %3906 = vmatpush2.msra.mxu0 0.0
    %3907 = vmatprep.subr.mxu0 0.0
    %3908 = vmatpush2.msra.mxu0 0.0
    %3909 = vmatprep.subr.mxu0 0.0
    %3910 = vmatpush2.msra.mxu0 0.0
    %3911 = vmatprep.subr.mxu0 0.0
    %3912 = vmatpush2.msra.mxu0 0.0
    %3913 = vmatprep.subr.mxu0 0.0
    %3914 = vmatpush2.msra.mxu0 0.0
    %3915 = vmatprep.subr.mxu0 0.0
    %3916 = vmatpush2.msra.mxu0 0.0
    %3917 = vmatprep.subr.mxu0 0.0
    %3918 = vmatpush2.msra.mxu0 0.0
    %3919 = vmatprep.subr.mxu0 0.0
    %3920 = vmatpush2.msra.mxu0 0.0
    %3921 = vmatprep.subr.mxu0 0.0
    %3922 = vmatpush2.msra.mxu0 0.0
    %3923 = vmatprep.subr.mxu0 0.0
    %3924 = vmatpush2.msra.mxu0 0.0
    %3925 = vmatprep.subr.mxu0 0.0
    %3926 = vmatpush2.msra.mxu0 0.0
    %3927 = vmatprep.subr.mxu0 0.0
    %3928 = vmatpush2.msra.mxu0 0.0
    %3929 = vmatprep.subr.mxu0 0.0
    %3930 = vmatpush2.msra.mxu0 0.0
    %3931 = vmatprep.subr.mxu0 0.0
    %3932 = vmatpush2.msra.mxu0 0.0
    %3933 = vmatprep.mubr.f32.mxu0 0.0
    %3934 = vmatmul.mubr.f32.gmra.mxu0 %v3287
    %v3935 = vpop.f32.mrf.mxu0
    %v3936 = vadd.f32 0.0, %v3935
    %v3937 = vpop.f32.mrf.mxu0
    %3938 = vdwg.mxu0
    %v3939 = vadd.f32 %v3866, %v3936
    %v3940 = vadd.f32 %v3939, %v113
    %v3941 = vxor.u32 %v3940, 2147483648
    %v3942 = vmul.f32 %v3941, 1.442695
    %v3943 = vpow.pop %v3942
    %v3944 = vadd.f32 %v3943, 1.0
    %v3945 = vrcp.pop %v3944
    %v3946 = vmul.f32 1.0, %v3945
    %v3947 = vtanh.pop %v3940
    %v3948 = vmul.f32 %v3946, %v3207
    %3950 = vrot.lane.b32.xlu0 %v3947, 64
    %v3951 = vpop.permute.xlu0 %3950
    %v3953 = vmul.f32 %v3946, %v3951
    %3955 = vrot.lane.b32.xlu0 %v3953, 32
    %v3956 = vpop.permute.xlu0 %3955
    %v3958 = vadd.f32 %v3948, %v3956
    %v3959 = vtanh.pop %v3958
    %3961 = vrot.lane.b32.xlu0 %v3959, 64
    %v3962 = vpop.permute.xlu0 %3961
    %v3964 = vmul.f32 %v3946, %v3962
    %3965 = vmatprep.subr.mxu0 0.0
    %3966 = vmatpush1.msra.mxu0 0.0
    %3967 = vmatprep.subr.mxu0 0.0
    %3968 = vmatpush1.msra.mxu0 0.0
    %3969 = vmatprep.subr.mxu0 0.0
    %3970 = vmatpush1.msra.mxu0 0.0
    %3971 = vmatprep.subr.mxu0 0.0
    %3972 = vmatpush1.msra.mxu0 0.0
    %3973 = vmatprep.subr.mxu0 0.0
    %3974 = vmatpush1.msra.mxu0 0.0
    %3975 = vmatprep.subr.mxu0 0.0
    %3976 = vmatpush1.msra.mxu0 0.0
    %3977 = vmatprep.subr.mxu0 0.0
    %3978 = vmatpush1.msra.mxu0 0.0
    %3979 = vmatprep.subr.mxu0 0.0
    %3980 = vmatpush1.msra.mxu0 0.0
    %3981 = vmatprep.subr.mxu0 0.0
    %3982 = vmatpush1.msra.mxu0 0.0
    %3983 = vmatprep.subr.mxu0 0.0
    %3984 = vmatpush1.msra.mxu0 0.0
    %3985 = vmatprep.subr.mxu0 0.0
    %3986 = vmatpush1.msra.mxu0 0.0
    %3987 = vmatprep.subr.mxu0 0.0
    %3988 = vmatpush1.msra.mxu0 0.0
    %3989 = vmatprep.subr.mxu0 0.0
    %3990 = vmatpush1.msra.mxu0 %v108
    %3991 = vmatprep.subr.mxu0 0.0
    %3992 = vmatpush1.msra.mxu0 %v107
    %3993 = vmatprep.subr.mxu0 0.0
    %3994 = vmatpush1.msra.mxu0 %v106
    %3995 = vmatprep.subr.mxu0 0.0
    %3996 = vmatpush1.msra.mxu0 %v105
    %3997 = vmatprep.subr.mxu0 0.0
    %3998 = vmatpush2.msra.mxu0 0.0
    %3999 = vmatprep.subr.mxu0 0.0
    %4000 = vmatpush2.msra.mxu0 0.0
    %4001 = vmatprep.subr.mxu0 0.0
    %4002 = vmatpush2.msra.mxu0 0.0
    %4003 = vmatprep.subr.mxu0 0.0
    %4004 = vmatpush2.msra.mxu0 0.0
    %4005 = vmatprep.subr.mxu0 0.0
    %4006 = vmatpush2.msra.mxu0 0.0
    %4007 = vmatprep.subr.mxu0 0.0
    %4008 = vmatpush2.msra.mxu0 0.0
    %4009 = vmatprep.subr.mxu0 0.0
    %4010 = vmatpush2.msra.mxu0 0.0
    %4011 = vmatprep.subr.mxu0 0.0
    %4012 = vmatpush2.msra.mxu0 0.0
    %4013 = vmatprep.subr.mxu0 0.0
    %4014 = vmatpush2.msra.mxu0 0.0
    %4015 = vmatprep.subr.mxu0 0.0
    %4016 = vmatpush2.msra.mxu0 0.0
    %4017 = vmatprep.subr.mxu0 0.0
    %4018 = vmatpush2.msra.mxu0 0.0
    %4019 = vmatprep.subr.mxu0 0.0
    %4020 = vmatpush2.msra.mxu0 0.0
    %4021 = vmatprep.subr.mxu0 0.0
    %4022 = vmatpush2.msra.mxu0 0.0
    %4023 = vmatprep.subr.mxu0 0.0
    %4024 = vmatpush2.msra.mxu0 0.0
    %4025 = vmatprep.subr.mxu0 0.0
    %4026 = vmatpush2.msra.mxu0 0.0
    %4027 = vmatprep.subr.mxu0 0.0
    %4028 = vmatpush2.msra.mxu0 0.0
    %4029 = vmatprep.mubr.f32.mxu0 0.0
    %4030 = vmatmul.mubr.f32.gmra.mxu0 %v3387
    %v4031 = vpop.f32.mrf.mxu0
    %v4032 = vadd.f32 0.0, %v4031
    %v4033 = vpop.f32.mrf.mxu0
    %4034 = vdwg.mxu0
    %4036 = vrot.lane.b32.xlu0 %v3964, 32
    %v4037 = vpop.permute.xlu0 %4036
    %v4038 = vsel %vm266, %v4037, 0
    %4040 = vmatprep.subr.mxu0 0.0
    %4041 = vmatpush1.msra.mxu0 0.0
    %4042 = vmatprep.subr.mxu0 0.0
    %4043 = vmatpush1.msra.mxu0 0.0
    %4044 = vmatprep.subr.mxu0 0.0
    %4045 = vmatpush1.msra.mxu0 0.0
    %4046 = vmatprep.subr.mxu0 0.0
    %4047 = vmatpush1.msra.mxu0 0.0
    %4048 = vmatprep.subr.mxu0 0.0
    %4049 = vmatpush1.msra.mxu0 0.0
    %4050 = vmatprep.subr.mxu0 0.0
    %4051 = vmatpush1.msra.mxu0 0.0
    %4052 = vmatprep.subr.mxu0 0.0
    %4053 = vmatpush1.msra.mxu0 0.0
    %4054 = vmatprep.subr.mxu0 0.0
    %4055 = vmatpush1.msra.mxu0 0.0
    %4056 = vmatprep.subr.mxu0 0.0
    %4057 = vmatpush1.msra.mxu0 0.0
    %4058 = vmatprep.subr.mxu0 0.0
    %4059 = vmatpush1.msra.mxu0 0.0
    %4060 = vmatprep.subr.mxu0 0.0
    %4061 = vmatpush1.msra.mxu0 0.0
    %4062 = vmatprep.subr.mxu0 0.0
    %4063 = vmatpush1.msra.mxu0 0.0
    %4064 = vmatprep.subr.mxu0 0.0
    %4065 = vmatpush1.msra.mxu0 %v104
    %4066 = vmatprep.subr.mxu0 0.0
    %4067 = vmatpush1.msra.mxu0 %v103
    %4068 = vmatprep.subr.mxu0 0.0
    %4069 = vmatpush1.msra.mxu0 %v102
    %4070 = vmatprep.subr.mxu0 0.0
    %4071 = vmatpush1.msra.mxu0 %v101
    %4072 = vmatprep.subr.mxu0 0.0
    %4073 = vmatpush2.msra.mxu0 0.0
    %4074 = vmatprep.subr.mxu0 0.0
    %4075 = vmatpush2.msra.mxu0 0.0
    %4076 = vmatprep.subr.mxu0 0.0
    %4077 = vmatpush2.msra.mxu0 0.0
    %4078 = vmatprep.subr.mxu0 0.0
    %4079 = vmatpush2.msra.mxu0 0.0
    %4080 = vmatprep.subr.mxu0 0.0
    %4081 = vmatpush2.msra.mxu0 0.0
    %4082 = vmatprep.subr.mxu0 0.0
    %4083 = vmatpush2.msra.mxu0 0.0
    %4084 = vmatprep.subr.mxu0 0.0
    %4085 = vmatpush2.msra.mxu0 0.0
    %4086 = vmatprep.subr.mxu0 0.0
    %4087 = vmatpush2.msra.mxu0 0.0
    %4088 = vmatprep.subr.mxu0 0.0
    %4089 = vmatpush2.msra.mxu0 0.0
    %4090 = vmatprep.subr.mxu0 0.0
    %4091 = vmatpush2.msra.mxu0 0.0
    %4092 = vmatprep.subr.mxu0 0.0
    %4093 = vmatpush2.msra.mxu0 0.0
    %4094 = vmatprep.subr.mxu0 0.0
    %4095 = vmatpush2.msra.mxu0 0.0
    %4096 = vmatprep.subr.mxu0 0.0
    %4097 = vmatpush2.msra.mxu0 0.0
    %4098 = vmatprep.subr.mxu0 0.0
    %4099 = vmatpush2.msra.mxu0 0.0
    %4100 = vmatprep.subr.mxu0 0.0
    %4101 = vmatpush2.msra.mxu0 0.0
    %4102 = vmatprep.subr.mxu0 0.0
    %4103 = vmatpush2.msra.mxu0 0.0
    %4104 = vmatprep.mubr.f32.mxu0 0.0
    %4105 = vmatmul.mubr.f32.gmra.mxu0 %v4038
    %v4106 = vpop.f32.mrf.mxu0
    %v4107 = vadd.f32 %v4032, %v4106
    %v4108 = vpop.f32.mrf.mxu0
    %4109 = vdwg.mxu0
    %v4110 = vadd.f32 %v4107, %v118
    %v4111 = vxor.u32 %v4110, 2147483648
    %v4112 = vmul.f32 %v4111, 1.442695
    %v4113 = vpow.pop %v4112
    %v4114 = vadd.f32 %v4113, 1.0
    %v4115 = vrcp.pop %v4114
    %v4116 = vmul.f32 1.0, %v4115
    %v4117 = vtanh.pop %v4110
    %v4118 = vmul.f32 %v4116, %v3377
    %4120 = vrot.lane.b32.xlu0 %v4117, 64
    %v4121 = vpop.permute.xlu0 %4120
    %v4123 = vmul.f32 %v4116, %v4121
    %4125 = vrot.lane.b32.xlu0 %v4123, 32
    %v4126 = vpop.permute.xlu0 %4125
    %v4128 = vadd.f32 %v4118, %v4126
    %v4129 = vtanh.pop %v4128
    %4131 = vrot.lane.b32.xlu0 %v4129, 64
    %v4132 = vpop.permute.xlu0 %4131
    %v4134 = vmul.f32 %v4116, %v4132
    %4136 = vrot.lane.b32.xlu0 %v4134, 32
    %v4137 = vpop.permute.xlu0 %4136
    %v4138 = vsel %vm266, %v4137, 0
    %4140 = vmatprep.subr.mxu0 0.0
    %4141 = vmatpush1.msra.mxu0 0.0
    %4142 = vmatprep.subr.mxu0 0.0
    %4143 = vmatpush1.msra.mxu0 0.0
    %4144 = vmatprep.subr.mxu0 0.0
    %4145 = vmatpush1.msra.mxu0 0.0
    %4146 = vmatprep.subr.mxu0 0.0
    %4147 = vmatpush1.msra.mxu0 0.0
    %4148 = vmatprep.subr.mxu0 0.0
    %4149 = vmatpush1.msra.mxu0 0.0
    %4150 = vmatprep.subr.mxu0 0.0
    %4151 = vmatpush1.msra.mxu0 0.0
    %4152 = vmatprep.subr.mxu0 0.0
    %4153 = vmatpush1.msra.mxu0 0.0
    %4154 = vmatprep.subr.mxu0 0.0
    %4155 = vmatpush1.msra.mxu0 0.0
    %4156 = vmatprep.subr.mxu0 0.0
    %4157 = vmatpush1.msra.mxu0 0.0
    %4158 = vmatprep.subr.mxu0 0.0
    %4159 = vmatpush1.msra.mxu0 0.0
    %4160 = vmatprep.subr.mxu0 0.0
    %4161 = vmatpush1.msra.mxu0 0.0
    %4162 = vmatprep.subr.mxu0 0.0
    %4163 = vmatpush1.msra.mxu0 0.0
    %4164 = vmatprep.subr.mxu0 0.0
    %4165 = vmatpush1.msra.mxu0 %v377
    %4166 = vmatprep.subr.mxu0 0.0
    %4167 = vmatpush1.msra.mxu0 %v372
    %4168 = vmatprep.subr.mxu0 0.0
    %4169 = vmatpush1.msra.mxu0 %v367
    %4170 = vmatprep.subr.mxu0 0.0
    %4171 = vmatpush1.msra.mxu0 %v362
    %4172 = vmatprep.subr.mxu0 0.0
    %4173 = vmatpush2.msra.mxu0 0.0
    %4174 = vmatprep.subr.mxu0 0.0
    %4175 = vmatpush2.msra.mxu0 0.0
    %4176 = vmatprep.subr.mxu0 0.0
    %4177 = vmatpush2.msra.mxu0 0.0
    %4178 = vmatprep.subr.mxu0 0.0
    %4179 = vmatpush2.msra.mxu0 0.0
    %4180 = vmatprep.subr.mxu0 0.0
    %4181 = vmatpush2.msra.mxu0 0.0
    %4182 = vmatprep.subr.mxu0 0.0
    %4183 = vmatpush2.msra.mxu0 0.0
    %4184 = vmatprep.subr.mxu0 0.0
    %4185 = vmatpush2.msra.mxu0 0.0
    %4186 = vmatprep.subr.mxu0 0.0
    %4187 = vmatpush2.msra.mxu0 0.0
    %4188 = vmatprep.subr.mxu0 0.0
    %4189 = vmatpush2.msra.mxu0 0.0
    %4190 = vmatprep.subr.mxu0 0.0
    %4191 = vmatpush2.msra.mxu0 0.0
    %4192 = vmatprep.subr.mxu0 0.0
    %4193 = vmatpush2.msra.mxu0 0.0
    %4194 = vmatprep.subr.mxu0 0.0
    %4195 = vmatpush2.msra.mxu0 0.0
    %4196 = vmatprep.subr.mxu0 0.0
    %4197 = vmatpush2.msra.mxu0 0.0
    %4198 = vmatprep.subr.mxu0 0.0
    %4199 = vmatpush2.msra.mxu0 0.0
    %4200 = vmatprep.subr.mxu0 0.0
    %4201 = vmatpush2.msra.mxu0 0.0
    %4202 = vmatprep.subr.mxu0 0.0
    %4203 = vmatpush2.msra.mxu0 0.0
    %4204 = vmatprep.mubr.f32.mxu0 0.0
    %4205 = vmatmul.mubr.f32.gmra.mxu0 %v4138
    %v4206 = vpop.f32.mrf.mxu0
    %v4207 = vadd.f32 0.0, %v4206
    %v4208 = vpop.f32.mrf.mxu0
    %4209 = vdwg.mxu0
    %v4210 = vmul.f32 %v4207, %v495
    %v4212 = vsel %vm1202, %v4210, 0
    %4214 = vmatprep.subr.mxu0 0.0
    %4215 = vmatpush1.msra.mxu0 0.0
    %4216 = vmatprep.subr.mxu0 0.0
    %4217 = vmatpush1.msra.mxu0 0.0
    %4218 = vmatprep.subr.mxu0 0.0
    %4219 = vmatpush1.msra.mxu0 0.0
    %4220 = vmatprep.subr.mxu0 0.0
    %4221 = vmatpush1.msra.mxu0 0.0
    %4222 = vmatprep.subr.mxu0 0.0
    %4223 = vmatpush1.msra.mxu0 0.0
    %4224 = vmatprep.subr.mxu0 0.0
    %4225 = vmatpush1.msra.mxu0 0.0
    %4226 = vmatprep.subr.mxu0 0.0
    %4227 = vmatpush1.msra.mxu0 0.0
    %4228 = vmatprep.subr.mxu0 0.0
    %4229 = vmatpush1.msra.mxu0 0.0
    %4230 = vmatprep.subr.mxu0 0.0
    %4231 = vmatpush1.msra.mxu0 %v534
    %4232 = vmatprep.subr.mxu0 0.0
    %4233 = vmatpush1.msra.mxu0 %v533
    %4234 = vmatprep.subr.mxu0 0.0
    %4235 = vmatpush1.msra.mxu0 %v532
    %4236 = vmatprep.subr.mxu0 0.0
    %4237 = vmatpush1.msra.mxu0 %v531
    %4238 = vmatprep.subr.mxu0 0.0
    %4239 = vmatpush1.msra.mxu0 %v530
    %4240 = vmatprep.subr.mxu0 0.0
    %4241 = vmatpush1.msra.mxu0 %v529
    %4242 = vmatprep.subr.mxu0 0.0
    %4243 = vmatpush1.msra.mxu0 %v528
    %4244 = vmatprep.subr.mxu0 0.0
    %4245 = vmatpush1.msra.mxu0 %v527
    %4246 = vmatprep.subr.mxu0 0.0
    %4247 = vmatpush2.msra.mxu0 0.0
    %4248 = vmatprep.subr.mxu0 0.0
    %4249 = vmatpush2.msra.mxu0 0.0
    %4250 = vmatprep.subr.mxu0 0.0
    %4251 = vmatpush2.msra.mxu0 0.0
    %4252 = vmatprep.subr.mxu0 0.0
    %4253 = vmatpush2.msra.mxu0 0.0
    %4254 = vmatprep.subr.mxu0 0.0
    %4255 = vmatpush2.msra.mxu0 0.0
    %4256 = vmatprep.subr.mxu0 0.0
    %4257 = vmatpush2.msra.mxu0 0.0
    %4258 = vmatprep.subr.mxu0 0.0
    %4259 = vmatpush2.msra.mxu0 0.0
    %4260 = vmatprep.subr.mxu0 0.0
    %4261 = vmatpush2.msra.mxu0 0.0
    %4262 = vmatprep.subr.mxu0 0.0
    %4263 = vmatpush2.msra.mxu0 0.0
    %4264 = vmatprep.subr.mxu0 0.0
    %4265 = vmatpush2.msra.mxu0 0.0
    %4266 = vmatprep.subr.mxu0 0.0
    %4267 = vmatpush2.msra.mxu0 0.0
    %4268 = vmatprep.subr.mxu0 0.0
    %4269 = vmatpush2.msra.mxu0 0.0
    %4270 = vmatprep.subr.mxu0 0.0
    %4271 = vmatpush2.msra.mxu0 0.0
    %4272 = vmatprep.subr.mxu0 0.0
    %4273 = vmatpush2.msra.mxu0 0.0
    %4274 = vmatprep.subr.mxu0 0.0
    %4275 = vmatpush2.msra.mxu0 0.0
    %4276 = vmatprep.subr.mxu0 0.0
    %4277 = vmatpush2.msra.mxu0 0.0
    %4278 = vmatprep.mubr.f32.mxu0 0.0
    %4279 = vmatmul.mubr.f32.gmra.mxu0 %v4212
    %v4280 = vpop.f32.mrf.mxu0
    %v4281 = vadd.f32 0.0, %v4280
    %v4282 = vpop.f32.mrf.mxu0
    %4283 = vdwg.mxu0
    %v4284 = vsel %vm1276, %v4281, -inf
    %4285 = vmax.xlane.f32.xlu0 %v4284
    %v4286 = vpop.xlane.xlu0 %4285
    %v4287 = vsub.f32 %v4281, %v4286
    %v4288 = vmul.f32 %v4287, 1.442695
    %v4289 = vpow.pop %v4288
    %v4290 = vsel %vm1276, %v4289, 0.0
    %4291 = vadd.xlane.f32.xlu0 %v4290
    %v4292 = vpop.xlane.xlu0 %4291
    %v4293 = vrcp.pop %v4292
    %v4294 = vmul.f32 %v4292, %v4293
    %v4295 = vsub.f32 2.0, %v4294
    %v4296 = vmul.f32 %v4293, %v4295
    %v4297 = vmul.f32 %v4289, %v4296
    %4299 = vrot.lane.b32.xlu0 %v4297, 8
    %v4300 = vpop.permute.xlu0 %4299
    %4302 = vrot.lane.b32.xlu0 %v4297, 16
    %v4303 = vpop.permute.xlu0 %4302
    %4305 = vrot.lane.b32.xlu0 %v4297, 24
    %v4306 = vpop.permute.xlu0 %4305
    %4308 = vrot.lane.b32.xlu0 %v4297, 32
    %v4309 = vpop.permute.xlu0 %4308
    %4311 = vrot.lane.b32.xlu0 %v4297, 40
    %v4312 = vpop.permute.xlu0 %4311
    %4314 = vrot.lane.b32.xlu0 %v4297, 48
    %v4315 = vpop.permute.xlu0 %4314
    %4317 = vrot.lane.b32.xlu0 %v4297, 56
    %v4318 = vpop.permute.xlu0 %4317
    %v4320 = vsel %vm1276, %v4297, %v4300
    %v4321 = vsel %vm579, %v4320, %v4303
    %v4322 = vsel %vm1315, %v4321, %v4306
    %v4323 = vsel %vm266, %v4322, %v4309
    %v4324 = vsel %vm1318, %v4323, %v4312
    %v4325 = vsel %vm1320, %v4324, %v4315
    %v4326 = vsel %vm1322, %v4325, %v4318
    %v4327 = vmul.f32 %v4326, %v495
    %4328 = vmatprep.subr.mxu0 0.0
    %4329 = vmatpush1.msra.mxu0 0.0
    %4330 = vmatprep.subr.mxu0 0.0
    %4331 = vmatpush1.msra.mxu0 0.0
    %4332 = vmatprep.subr.mxu0 0.0
    %4333 = vmatpush1.msra.mxu0 0.0
    %4334 = vmatprep.subr.mxu0 0.0
    %4335 = vmatpush1.msra.mxu0 0.0
    %4336 = vmatprep.subr.mxu0 0.0
    %4337 = vmatpush1.msra.mxu0 0.0
    %4338 = vmatprep.subr.mxu0 0.0
    %4339 = vmatpush1.msra.mxu0 0.0
    %4340 = vmatprep.subr.mxu0 0.0
    %4341 = vmatpush1.msra.mxu0 0.0
    %4342 = vmatprep.subr.mxu0 0.0
    %4343 = vmatpush1.msra.mxu0 0.0
    %4344 = vmatprep.subr.mxu0 0.0
    %4345 = vmatpush1.msra.mxu0 0.0
    %4346 = vmatprep.subr.mxu0 0.0
    %4347 = vmatpush1.msra.mxu0 0.0
    %4348 = vmatprep.subr.mxu0 0.0
    %4349 = vmatpush1.msra.mxu0 0.0
    %4350 = vmatprep.subr.mxu0 0.0
    %4351 = vmatpush1.msra.mxu0 0.0
    %4352 = vmatprep.subr.mxu0 0.0
    %4353 = vmatpush1.msra.mxu0 %v130
    %4354 = vmatprep.subr.mxu0 0.0
    %4355 = vmatpush1.msra.mxu0 %v129
    %4356 = vmatprep.subr.mxu0 0.0
    %4357 = vmatpush1.msra.mxu0 %v128
    %4358 = vmatprep.subr.mxu0 0.0
    %4359 = vmatpush1.msra.mxu0 %v127
    %4360 = vmatprep.subr.mxu0 0.0
    %4361 = vmatpush2.msra.mxu0 0.0
    %4362 = vmatprep.subr.mxu0 0.0
    %4363 = vmatpush2.msra.mxu0 0.0
    %4364 = vmatprep.subr.mxu0 0.0
    %4365 = vmatpush2.msra.mxu0 0.0
    %4366 = vmatprep.subr.mxu0 0.0
    %4367 = vmatpush2.msra.mxu0 0.0
    %4368 = vmatprep.subr.mxu0 0.0
    %4369 = vmatpush2.msra.mxu0 0.0
    %4370 = vmatprep.subr.mxu0 0.0
    %4371 = vmatpush2.msra.mxu0 0.0
    %4372 = vmatprep.subr.mxu0 0.0
    %4373 = vmatpush2.msra.mxu0 0.0
    %4374 = vmatprep.subr.mxu0 0.0
    %4375 = vmatpush2.msra.mxu0 0.0
    %4376 = vmatprep.subr.mxu0 0.0
    %4377 = vmatpush2.msra.mxu0 0.0
    %4378 = vmatprep.subr.mxu0 0.0
    %4379 = vmatpush2.msra.mxu0 0.0
    %4380 = vmatprep.subr.mxu0 0.0
    %4381 = vmatpush2.msra.mxu0 0.0
    %4382 = vmatprep.subr.mxu0 0.0
    %4383 = vmatpush2.msra.mxu0 0.0
    %4384 = vmatprep.subr.mxu0 0.0
    %4385 = vmatpush2.msra.mxu0 0.0
    %4386 = vmatprep.subr.mxu0 0.0
    %4387 = vmatpush2.msra.mxu0 0.0
    %4388 = vmatprep.subr.mxu0 0.0
    %4389 = vmatpush2.msra.mxu0 0.0
    %4390 = vmatprep.subr.mxu0 0.0
    %4391 = vmatpush2.msra.mxu0 0.0
    %4392 = vmatprep.mubr.f32.mxu0 0.0
    %4393 = vmatmul.mubr.f32.gmra.mxu0 %v4138
    %v4394 = vpop.f32.mrf.mxu0
    %v4395 = vadd.f32 0.0, %v4394
    %v4396 = vpop.f32.mrf.mxu0
    %4397 = vdwg.mxu0
    %v4399 = vsel %vm1202, %v4327, 0
    %4401 = vmatprep.subr.mxu0 0.0
    %4402 = vmatpush1.msra.mxu0 0.0
    %4403 = vmatprep.subr.mxu0 0.0
    %4404 = vmatpush1.msra.mxu0 0.0
    %4405 = vmatprep.subr.mxu0 0.0
    %4406 = vmatpush1.msra.mxu0 0.0
    %4407 = vmatprep.subr.mxu0 0.0
    %4408 = vmatpush1.msra.mxu0 0.0
    %4409 = vmatprep.subr.mxu0 0.0
    %4410 = vmatpush1.msra.mxu0 0.0
    %4411 = vmatprep.subr.mxu0 0.0
    %4412 = vmatpush1.msra.mxu0 0.0
    %4413 = vmatprep.subr.mxu0 0.0
    %4414 = vmatpush1.msra.mxu0 0.0
    %4415 = vmatprep.subr.mxu0 0.0
    %4416 = vmatpush1.msra.mxu0 0.0
    %4417 = vmatprep.subr.mxu0 0.0
    %4418 = vmatpush1.msra.mxu0 %v482
    %4419 = vmatprep.subr.mxu0 0.0
    %4420 = vmatpush1.msra.mxu0 %v477
    %4421 = vmatprep.subr.mxu0 0.0
    %4422 = vmatpush1.msra.mxu0 %v472
    %4423 = vmatprep.subr.mxu0 0.0
    %4424 = vmatpush1.msra.mxu0 %v467
    %4425 = vmatprep.subr.mxu0 0.0
    %4426 = vmatpush1.msra.mxu0 %v462
    %4427 = vmatprep.subr.mxu0 0.0
    %4428 = vmatpush1.msra.mxu0 %v457
    %4429 = vmatprep.subr.mxu0 0.0
    %4430 = vmatpush1.msra.mxu0 %v452
    %4431 = vmatprep.subr.mxu0 0.0
    %4432 = vmatpush1.msra.mxu0 %v447
    %4433 = vmatprep.subr.mxu0 0.0
    %4434 = vmatpush2.msra.mxu0 0.0
    %4435 = vmatprep.subr.mxu0 0.0
    %4436 = vmatpush2.msra.mxu0 0.0
    %4437 = vmatprep.subr.mxu0 0.0
    %4438 = vmatpush2.msra.mxu0 0.0
    %4439 = vmatprep.subr.mxu0 0.0
    %4440 = vmatpush2.msra.mxu0 0.0
    %4441 = vmatprep.subr.mxu0 0.0
    %4442 = vmatpush2.msra.mxu0 0.0
    %4443 = vmatprep.subr.mxu0 0.0
    %4444 = vmatpush2.msra.mxu0 0.0
    %4445 = vmatprep.subr.mxu0 0.0
    %4446 = vmatpush2.msra.mxu0 0.0
    %4447 = vmatprep.subr.mxu0 0.0
    %4448 = vmatpush2.msra.mxu0 0.0
    %4449 = vmatprep.subr.mxu0 0.0
    %4450 = vmatpush2.msra.mxu0 0.0
    %4451 = vmatprep.subr.mxu0 0.0
    %4452 = vmatpush2.msra.mxu0 0.0
    %4453 = vmatprep.subr.mxu0 0.0
    %4454 = vmatpush2.msra.mxu0 0.0
    %4455 = vmatprep.subr.mxu0 0.0
    %4456 = vmatpush2.msra.mxu0 0.0
    %4457 = vmatprep.subr.mxu0 0.0
    %4458 = vmatpush2.msra.mxu0 0.0
    %4459 = vmatprep.subr.mxu0 0.0
    %4460 = vmatpush2.msra.mxu0 0.0
    %4461 = vmatprep.subr.mxu0 0.0
    %4462 = vmatpush2.msra.mxu0 0.0
    %4463 = vmatprep.subr.mxu0 0.0
    %4464 = vmatpush2.msra.mxu0 0.0
    %4465 = vmatprep.mubr.f32.mxu0 0.0
    %4466 = vmatmul.mubr.f32.gmra.mxu0 %v4399
    %v4467 = vpop.f32.mrf.mxu0
    %v4468 = vadd.f32 %v4395, %v4467
    %v4469 = vpop.f32.mrf.mxu0
    %4470 = vdwg.mxu0
    %v4471 = vtanh.pop %v4468
    %s4472 = scalar_lea.vmem [#allocation10], 32
    %4473 = vst.msk [vmem:[%s4472] sm:$0xff] %vm266, %v4471
    %v4475 = vsel %vm266, %v4471, 0
    %4477 = vmatprep.subr.mxu0 0.0
    %4478 = vmatpush1.msra.mxu0 0.0
    %4479 = vmatprep.subr.mxu0 0.0
    %4480 = vmatpush1.msra.mxu0 0.0
    %4481 = vmatprep.subr.mxu0 0.0
    %4482 = vmatpush1.msra.mxu0 0.0
    %4483 = vmatprep.subr.mxu0 0.0
    %4484 = vmatpush1.msra.mxu0 0.0
    %4485 = vmatprep.subr.mxu0 0.0
    %4486 = vmatpush1.msra.mxu0 0.0
    %4487 = vmatprep.subr.mxu0 0.0
    %4488 = vmatpush1.msra.mxu0 0.0
    %4489 = vmatprep.subr.mxu0 0.0
    %4490 = vmatpush1.msra.mxu0 0.0
    %4491 = vmatprep.subr.mxu0 0.0
    %4492 = vmatpush1.msra.mxu0 0.0
    %4493 = vmatprep.subr.mxu0 0.0
    %4494 = vmatpush1.msra.mxu0 0.0
    %4495 = vmatprep.subr.mxu0 0.0
    %4496 = vmatpush1.msra.mxu0 0.0
    %4497 = vmatprep.subr.mxu0 0.0
    %4498 = vmatpush1.msra.mxu0 0.0
    %4499 = vmatprep.subr.mxu0 0.0
    %4500 = vmatpush1.msra.mxu0 0.0
    %4501 = vmatprep.subr.mxu0 0.0
    %4502 = vmatpush1.msra.mxu0 %v96
    %4503 = vmatprep.subr.mxu0 0.0
    %4504 = vmatpush1.msra.mxu0 %v95
    %4505 = vmatprep.subr.mxu0 0.0
    %4506 = vmatpush1.msra.mxu0 %v94
    %4507 = vmatprep.subr.mxu0 0.0
    %4508 = vmatpush1.msra.mxu0 %v93
    %4509 = vmatprep.subr.mxu0 0.0
    %4510 = vmatpush2.msra.mxu0 0.0
    %4511 = vmatprep.subr.mxu0 0.0
    %4512 = vmatpush2.msra.mxu0 0.0
    %4513 = vmatprep.subr.mxu0 0.0
    %4514 = vmatpush2.msra.mxu0 0.0
    %4515 = vmatprep.subr.mxu0 0.0
    %4516 = vmatpush2.msra.mxu0 0.0
    %4517 = vmatprep.subr.mxu0 0.0
    %4518 = vmatpush2.msra.mxu0 0.0
    %4519 = vmatprep.subr.mxu0 0.0
    %4520 = vmatpush2.msra.mxu0 0.0
    %4521 = vmatprep.subr.mxu0 0.0
    %4522 = vmatpush2.msra.mxu0 0.0
    %4523 = vmatprep.subr.mxu0 0.0
    %4524 = vmatpush2.msra.mxu0 0.0
    %4525 = vmatprep.subr.mxu0 0.0
    %4526 = vmatpush2.msra.mxu0 0.0
    %4527 = vmatprep.subr.mxu0 0.0
    %4528 = vmatpush2.msra.mxu0 0.0
    %4529 = vmatprep.subr.mxu0 0.0
    %4530 = vmatpush2.msra.mxu0 0.0
    %4531 = vmatprep.subr.mxu0 0.0
    %4532 = vmatpush2.msra.mxu0 0.0
    %4533 = vmatprep.subr.mxu0 0.0
    %4534 = vmatpush2.msra.mxu0 0.0
    %4535 = vmatprep.subr.mxu0 0.0
    %4536 = vmatpush2.msra.mxu0 0.0
    %4537 = vmatprep.subr.mxu0 0.0
    %4538 = vmatpush2.msra.mxu0 0.0
    %4539 = vmatprep.subr.mxu0 0.0
    %4540 = vmatpush2.msra.mxu0 0.0
    %4541 = vmatprep.mubr.f32.mxu0 0.0
    %4542 = vmatmul.mubr.f32.gmra.mxu0 %v4475
    %v4543 = vpop.f32.mrf.mxu0
    %v4544 = vadd.f32 0.0, %v4543
    %v4545 = vpop.f32.mrf.mxu0
    %4546 = vdwg.mxu0
    %v4548 = vsel %vm266, %v690, 0
    %4550 = vmatprep.subr.mxu0 0.0
    %4551 = vmatpush1.msra.mxu0 0.0
    %4552 = vmatprep.subr.mxu0 0.0
    %4553 = vmatpush1.msra.mxu0 0.0
    %4554 = vmatprep.subr.mxu0 0.0
    %4555 = vmatpush1.msra.mxu0 0.0
    %4556 = vmatprep.subr.mxu0 0.0
    %4557 = vmatpush1.msra.mxu0 0.0
    %4558 = vmatprep.subr.mxu0 0.0
    %4559 = vmatpush1.msra.mxu0 0.0
    %4560 = vmatprep.subr.mxu0 0.0
    %4561 = vmatpush1.msra.mxu0 0.0
    %4562 = vmatprep.subr.mxu0 0.0
    %4563 = vmatpush1.msra.mxu0 0.0
    %4564 = vmatprep.subr.mxu0 0.0
    %4565 = vmatpush1.msra.mxu0 0.0
    %4566 = vmatprep.subr.mxu0 0.0
    %4567 = vmatpush1.msra.mxu0 0.0
    %4568 = vmatprep.subr.mxu0 0.0
    %4569 = vmatpush1.msra.mxu0 0.0
    %4570 = vmatprep.subr.mxu0 0.0
    %4571 = vmatpush1.msra.mxu0 0.0
    %4572 = vmatprep.subr.mxu0 0.0
    %4573 = vmatpush1.msra.mxu0 0.0
    %4574 = vmatprep.subr.mxu0 0.0
    %4575 = vmatpush1.msra.mxu0 %v92
    %4576 = vmatprep.subr.mxu0 0.0
    %4577 = vmatpush1.msra.mxu0 %v91
    %4578 = vmatprep.subr.mxu0 0.0
    %4579 = vmatpush1.msra.mxu0 %v90
    %4580 = vmatprep.subr.mxu0 0.0
    %4581 = vmatpush1.msra.mxu0 %v89
    %4582 = vmatprep.subr.mxu0 0.0
    %4583 = vmatpush2.msra.mxu0 0.0
    %4584 = vmatprep.subr.mxu0 0.0
    %4585 = vmatpush2.msra.mxu0 0.0
    %4586 = vmatprep.subr.mxu0 0.0
    %4587 = vmatpush2.msra.mxu0 0.0
    %4588 = vmatprep.subr.mxu0 0.0
    %4589 = vmatpush2.msra.mxu0 0.0
    %4590 = vmatprep.subr.mxu0 0.0
    %4591 = vmatpush2.msra.mxu0 0.0
    %4592 = vmatprep.subr.mxu0 0.0
    %4593 = vmatpush2.msra.mxu0 0.0
    %4594 = vmatprep.subr.mxu0 0.0
    %4595 = vmatpush2.msra.mxu0 0.0
    %4596 = vmatprep.subr.mxu0 0.0
    %4597 = vmatpush2.msra.mxu0 0.0
    %4598 = vmatprep.subr.mxu0 0.0
    %4599 = vmatpush2.msra.mxu0 0.0
    %4600 = vmatprep.subr.mxu0 0.0
    %4601 = vmatpush2.msra.mxu0 0.0
    %4602 = vmatprep.subr.mxu0 0.0
    %4603 = vmatpush2.msra.mxu0 0.0
    %4604 = vmatprep.subr.mxu0 0.0
    %4605 = vmatpush2.msra.mxu0 0.0
    %4606 = vmatprep.subr.mxu0 0.0
    %4607 = vmatpush2.msra.mxu0 0.0
    %4608 = vmatprep.subr.mxu0 0.0
    %4609 = vmatpush2.msra.mxu0 0.0
    %4610 = vmatprep.subr.mxu0 0.0
    %4611 = vmatpush2.msra.mxu0 0.0
    %4612 = vmatprep.subr.mxu0 0.0
    %4613 = vmatpush2.msra.mxu0 0.0
    %4614 = vmatprep.mubr.f32.mxu0 0.0
    %4615 = vmatmul.mubr.f32.gmra.mxu0 %v4548
    %v4616 = vpop.f32.mrf.mxu0
    %v4617 = vadd.f32 %v4544, %v4616
    %v4618 = vpop.f32.mrf.mxu0
    %4619 = vdwg.mxu0
    %4620 = vmatprep.subr.mxu0 0.0
    %4621 = vmatpush1.msra.mxu0 0.0
    %4622 = vmatprep.subr.mxu0 0.0
    %4623 = vmatpush1.msra.mxu0 0.0
    %4624 = vmatprep.subr.mxu0 0.0
    %4625 = vmatpush1.msra.mxu0 0.0
    %4626 = vmatprep.subr.mxu0 0.0
    %4627 = vmatpush1.msra.mxu0 0.0
    %4628 = vmatprep.subr.mxu0 0.0
    %4629 = vmatpush1.msra.mxu0 0.0
    %4630 = vmatprep.subr.mxu0 0.0
    %4631 = vmatpush1.msra.mxu0 0.0
    %4632 = vmatprep.subr.mxu0 0.0
    %4633 = vmatpush1.msra.mxu0 0.0
    %4634 = vmatprep.subr.mxu0 0.0
    %4635 = vmatpush1.msra.mxu0 0.0
    %4636 = vmatprep.subr.mxu0 0.0
    %4637 = vmatpush1.msra.mxu0 0.0
    %4638 = vmatprep.subr.mxu0 0.0
    %4639 = vmatpush1.msra.mxu0 0.0
    %4640 = vmatprep.subr.mxu0 0.0
    %4641 = vmatpush1.msra.mxu0 0.0
    %4642 = vmatprep.subr.mxu0 0.0
    %4643 = vmatpush1.msra.mxu0 0.0
    %4644 = vmatprep.subr.mxu0 0.0
    %4645 = vmatpush1.msra.mxu0 %v100
    %4646 = vmatprep.subr.mxu0 0.0
    %4647 = vmatpush1.msra.mxu0 %v99
    %4648 = vmatprep.subr.mxu0 0.0
    %4649 = vmatpush1.msra.mxu0 %v98
    %4650 = vmatprep.subr.mxu0 0.0
    %4651 = vmatpush1.msra.mxu0 %v97
    %4652 = vmatprep.subr.mxu0 0.0
    %4653 = vmatpush2.msra.mxu0 0.0
    %4654 = vmatprep.subr.mxu0 0.0
    %4655 = vmatpush2.msra.mxu0 0.0
    %4656 = vmatprep.subr.mxu0 0.0
    %4657 = vmatpush2.msra.mxu0 0.0
    %4658 = vmatprep.subr.mxu0 0.0
    %4659 = vmatpush2.msra.mxu0 0.0
    %4660 = vmatprep.subr.mxu0 0.0
    %4661 = vmatpush2.msra.mxu0 0.0
    %4662 = vmatprep.subr.mxu0 0.0
    %4663 = vmatpush2.msra.mxu0 0.0
    %4664 = vmatprep.subr.mxu0 0.0
    %4665 = vmatpush2.msra.mxu0 0.0
    %4666 = vmatprep.subr.mxu0 0.0
    %4667 = vmatpush2.msra.mxu0 0.0
    %4668 = vmatprep.subr.mxu0 0.0
    %4669 = vmatpush2.msra.mxu0 0.0
    %4670 = vmatprep.subr.mxu0 0.0
    %4671 = vmatpush2.msra.mxu0 0.0
    %4672 = vmatprep.subr.mxu0 0.0
    %4673 = vmatpush2.msra.mxu0 0.0
    %4674 = vmatprep.subr.mxu0 0.0
    %4675 = vmatpush2.msra.mxu0 0.0
    %4676 = vmatprep.subr.mxu0 0.0
    %4677 = vmatpush2.msra.mxu0 0.0
    %4678 = vmatprep.subr.mxu0 0.0
    %4679 = vmatpush2.msra.mxu0 0.0
    %4680 = vmatprep.subr.mxu0 0.0
    %4681 = vmatpush2.msra.mxu0 0.0
    %4682 = vmatprep.subr.mxu0 0.0
    %4683 = vmatpush2.msra.mxu0 0.0
    %4684 = vmatprep.mubr.f32.mxu0 0.0
    %4685 = vmatmul.mubr.f32.gmra.mxu0 %v4038
    %v4686 = vpop.f32.mrf.mxu0
    %v4687 = vadd.f32 0.0, %v4686
    %v4688 = vpop.f32.mrf.mxu0
    %4689 = vdwg.mxu0
    %v4690 = vadd.f32 %v4617, %v4687
    %v4691 = vadd.f32 %v4690, %v113
    %v4692 = vxor.u32 %v4691, 2147483648
    %v4693 = vmul.f32 %v4692, 1.442695
    %v4694 = vpow.pop %v4693
    %v4695 = vadd.f32 %v4694, 1.0
    %v4696 = vrcp.pop %v4695
    %v4697 = vmul.f32 1.0, %v4696
    %v4698 = vtanh.pop %v4691
    %v4699 = vmul.f32 %v4697, %v3958
    %4701 = vrot.lane.b32.xlu0 %v4698, 64
    %v4702 = vpop.permute.xlu0 %4701
    %v4704 = vmul.f32 %v4697, %v4702
    %4706 = vrot.lane.b32.xlu0 %v4704, 32
    %v4707 = vpop.permute.xlu0 %4706
    %v4709 = vadd.f32 %v4699, %v4707
    %v4710 = vtanh.pop %v4709
    %4712 = vrot.lane.b32.xlu0 %v4710, 64
    %v4713 = vpop.permute.xlu0 %4712
    %v4715 = vmul.f32 %v4697, %v4713
    %4716 = vmatprep.subr.mxu0 0.0
    %4717 = vmatpush1.msra.mxu0 0.0
    %4718 = vmatprep.subr.mxu0 0.0
    %4719 = vmatpush1.msra.mxu0 0.0
    %4720 = vmatprep.subr.mxu0 0.0
    %4721 = vmatpush1.msra.mxu0 0.0
    %4722 = vmatprep.subr.mxu0 0.0
    %4723 = vmatpush1.msra.mxu0 0.0
    %4724 = vmatprep.subr.mxu0 0.0
    %4725 = vmatpush1.msra.mxu0 0.0
    %4726 = vmatprep.subr.mxu0 0.0
    %4727 = vmatpush1.msra.mxu0 0.0
    %4728 = vmatprep.subr.mxu0 0.0
    %4729 = vmatpush1.msra.mxu0 0.0
    %4730 = vmatprep.subr.mxu0 0.0
    %4731 = vmatpush1.msra.mxu0 0.0
    %4732 = vmatprep.subr.mxu0 0.0
    %4733 = vmatpush1.msra.mxu0 0.0
    %4734 = vmatprep.subr.mxu0 0.0
    %4735 = vmatpush1.msra.mxu0 0.0
    %4736 = vmatprep.subr.mxu0 0.0
    %4737 = vmatpush1.msra.mxu0 0.0
    %4738 = vmatprep.subr.mxu0 0.0
    %4739 = vmatpush1.msra.mxu0 0.0
    %4740 = vmatprep.subr.mxu0 0.0
    %4741 = vmatpush1.msra.mxu0 %v108
    %4742 = vmatprep.subr.mxu0 0.0
    %4743 = vmatpush1.msra.mxu0 %v107
    %4744 = vmatprep.subr.mxu0 0.0
    %4745 = vmatpush1.msra.mxu0 %v106
    %4746 = vmatprep.subr.mxu0 0.0
    %4747 = vmatpush1.msra.mxu0 %v105
    %4748 = vmatprep.subr.mxu0 0.0
    %4749 = vmatpush2.msra.mxu0 0.0
    %4750 = vmatprep.subr.mxu0 0.0
    %4751 = vmatpush2.msra.mxu0 0.0
    %4752 = vmatprep.subr.mxu0 0.0
    %4753 = vmatpush2.msra.mxu0 0.0
    %4754 = vmatprep.subr.mxu0 0.0
    %4755 = vmatpush2.msra.mxu0 0.0
    %4756 = vmatprep.subr.mxu0 0.0
    %4757 = vmatpush2.msra.mxu0 0.0
    %4758 = vmatprep.subr.mxu0 0.0
    %4759 = vmatpush2.msra.mxu0 0.0
    %4760 = vmatprep.subr.mxu0 0.0
    %4761 = vmatpush2.msra.mxu0 0.0
    %4762 = vmatprep.subr.mxu0 0.0
    %4763 = vmatpush2.msra.mxu0 0.0
    %4764 = vmatprep.subr.mxu0 0.0
    %4765 = vmatpush2.msra.mxu0 0.0
    %4766 = vmatprep.subr.mxu0 0.0
    %4767 = vmatpush2.msra.mxu0 0.0
    %4768 = vmatprep.subr.mxu0 0.0
    %4769 = vmatpush2.msra.mxu0 0.0
    %4770 = vmatprep.subr.mxu0 0.0
    %4771 = vmatpush2.msra.mxu0 0.0
    %4772 = vmatprep.subr.mxu0 0.0
    %4773 = vmatpush2.msra.mxu0 0.0
    %4774 = vmatprep.subr.mxu0 0.0
    %4775 = vmatpush2.msra.mxu0 0.0
    %4776 = vmatprep.subr.mxu0 0.0
    %4777 = vmatpush2.msra.mxu0 0.0
    %4778 = vmatprep.subr.mxu0 0.0
    %4779 = vmatpush2.msra.mxu0 0.0
    %4780 = vmatprep.mubr.f32.mxu0 0.0
    %4781 = vmatmul.mubr.f32.gmra.mxu0 %v4138
    %v4782 = vpop.f32.mrf.mxu0
    %v4783 = vadd.f32 0.0, %v4782
    %v4784 = vpop.f32.mrf.mxu0
    %4785 = vdwg.mxu0
    %4787 = vrot.lane.b32.xlu0 %v4715, 32
    %v4788 = vpop.permute.xlu0 %4787
    %v4789 = vsel %vm266, %v4788, 0
    %4791 = vmatprep.subr.mxu0 0.0
    %4792 = vmatpush1.msra.mxu0 0.0
    %4793 = vmatprep.subr.mxu0 0.0
    %4794 = vmatpush1.msra.mxu0 0.0
    %4795 = vmatprep.subr.mxu0 0.0
    %4796 = vmatpush1.msra.mxu0 0.0
    %4797 = vmatprep.subr.mxu0 0.0
    %4798 = vmatpush1.msra.mxu0 0.0
    %4799 = vmatprep.subr.mxu0 0.0
    %4800 = vmatpush1.msra.mxu0 0.0
    %4801 = vmatprep.subr.mxu0 0.0
    %4802 = vmatpush1.msra.mxu0 0.0
    %4803 = vmatprep.subr.mxu0 0.0
    %4804 = vmatpush1.msra.mxu0 0.0
    %4805 = vmatprep.subr.mxu0 0.0
    %4806 = vmatpush1.msra.mxu0 0.0
    %4807 = vmatprep.subr.mxu0 0.0
    %4808 = vmatpush1.msra.mxu0 0.0
    %4809 = vmatprep.subr.mxu0 0.0
    %4810 = vmatpush1.msra.mxu0 0.0
    %4811 = vmatprep.subr.mxu0 0.0
    %4812 = vmatpush1.msra.mxu0 0.0
    %4813 = vmatprep.subr.mxu0 0.0
    %4814 = vmatpush1.msra.mxu0 0.0
    %4815 = vmatprep.subr.mxu0 0.0
    %4816 = vmatpush1.msra.mxu0 %v104
    %4817 = vmatprep.subr.mxu0 0.0
    %4818 = vmatpush1.msra.mxu0 %v103
    %4819 = vmatprep.subr.mxu0 0.0
    %4820 = vmatpush1.msra.mxu0 %v102
    %4821 = vmatprep.subr.mxu0 0.0
    %4822 = vmatpush1.msra.mxu0 %v101
    %4823 = vmatprep.subr.mxu0 0.0
    %4824 = vmatpush2.msra.mxu0 0.0
    %4825 = vmatprep.subr.mxu0 0.0
    %4826 = vmatpush2.msra.mxu0 0.0
    %4827 = vmatprep.subr.mxu0 0.0
    %4828 = vmatpush2.msra.mxu0 0.0
    %4829 = vmatprep.subr.mxu0 0.0
    %4830 = vmatpush2.msra.mxu0 0.0
    %4831 = vmatprep.subr.mxu0 0.0
    %4832 = vmatpush2.msra.mxu0 0.0
    %4833 = vmatprep.subr.mxu0 0.0
    %4834 = vmatpush2.msra.mxu0 0.0
    %4835 = vmatprep.subr.mxu0 0.0
    %4836 = vmatpush2.msra.mxu0 0.0
    %4837 = vmatprep.subr.mxu0 0.0
    %4838 = vmatpush2.msra.mxu0 0.0
    %4839 = vmatprep.subr.mxu0 0.0
    %4840 = vmatpush2.msra.mxu0 0.0
    %4841 = vmatprep.subr.mxu0 0.0
    %4842 = vmatpush2.msra.mxu0 0.0
    %4843 = vmatprep.subr.mxu0 0.0
    %4844 = vmatpush2.msra.mxu0 0.0
    %4845 = vmatprep.subr.mxu0 0.0
    %4846 = vmatpush2.msra.mxu0 0.0
    %4847 = vmatprep.subr.mxu0 0.0
    %4848 = vmatpush2.msra.mxu0 0.0
    %4849 = vmatprep.subr.mxu0 0.0
    %4850 = vmatpush2.msra.mxu0 0.0
    %4851 = vmatprep.subr.mxu0 0.0
    %4852 = vmatpush2.msra.mxu0 0.0
    %4853 = vmatprep.subr.mxu0 0.0
    %4854 = vmatpush2.msra.mxu0 0.0
    %4855 = vmatprep.mubr.f32.mxu0 0.0
    %4856 = vmatmul.mubr.f32.gmra.mxu0 %v4789
    %v4857 = vpop.f32.mrf.mxu0
    %v4858 = vadd.f32 %v4783, %v4857
    %v4859 = vpop.f32.mrf.mxu0
    %4860 = vdwg.mxu0
    %v4861 = vadd.f32 %v4858, %v118
    %v4862 = vxor.u32 %v4861, 2147483648
    %v4863 = vmul.f32 %v4862, 1.442695
    %v4864 = vpow.pop %v4863
    %v4865 = vadd.f32 %v4864, 1.0
    %v4866 = vrcp.pop %v4865
    %v4867 = vmul.f32 1.0, %v4866
    %v4868 = vtanh.pop %v4861
    %v4869 = vmul.f32 %v4867, %v4128
    %4871 = vrot.lane.b32.xlu0 %v4868, 64
    %v4872 = vpop.permute.xlu0 %4871
    %v4874 = vmul.f32 %v4867, %v4872
    %4876 = vrot.lane.b32.xlu0 %v4874, 32
    %v4877 = vpop.permute.xlu0 %4876
    %v4879 = vadd.f32 %v4869, %v4877
    %v4880 = vtanh.pop %v4879
    %4882 = vrot.lane.b32.xlu0 %v4880, 64
    %v4883 = vpop.permute.xlu0 %4882
    %v4885 = vmul.f32 %v4867, %v4883
    %4887 = vrot.lane.b32.xlu0 %v4885, 32
    %v4888 = vpop.permute.xlu0 %4887
    %v4889 = vsel %vm266, %v4888, 0
    %4891 = vmatprep.subr.mxu0 0.0
    %4892 = vmatpush1.msra.mxu0 0.0
    %4893 = vmatprep.subr.mxu0 0.0
    %4894 = vmatpush1.msra.mxu0 0.0
    %4895 = vmatprep.subr.mxu0 0.0
    %4896 = vmatpush1.msra.mxu0 0.0
    %4897 = vmatprep.subr.mxu0 0.0
    %4898 = vmatpush1.msra.mxu0 0.0
    %4899 = vmatprep.subr.mxu0 0.0
    %4900 = vmatpush1.msra.mxu0 0.0
    %4901 = vmatprep.subr.mxu0 0.0
    %4902 = vmatpush1.msra.mxu0 0.0
    %4903 = vmatprep.subr.mxu0 0.0
    %4904 = vmatpush1.msra.mxu0 0.0
    %4905 = vmatprep.subr.mxu0 0.0
    %4906 = vmatpush1.msra.mxu0 0.0
    %4907 = vmatprep.subr.mxu0 0.0
    %4908 = vmatpush1.msra.mxu0 0.0
    %4909 = vmatprep.subr.mxu0 0.0
    %4910 = vmatpush1.msra.mxu0 0.0
    %4911 = vmatprep.subr.mxu0 0.0
    %4912 = vmatpush1.msra.mxu0 0.0
    %4913 = vmatprep.subr.mxu0 0.0
    %4914 = vmatpush1.msra.mxu0 0.0
    %4915 = vmatprep.subr.mxu0 0.0
    %4916 = vmatpush1.msra.mxu0 %v377
    %4917 = vmatprep.subr.mxu0 0.0
    %4918 = vmatpush1.msra.mxu0 %v372
    %4919 = vmatprep.subr.mxu0 0.0
    %4920 = vmatpush1.msra.mxu0 %v367
    %4921 = vmatprep.subr.mxu0 0.0
    %4922 = vmatpush1.msra.mxu0 %v362
    %4923 = vmatprep.subr.mxu0 0.0
    %4924 = vmatpush2.msra.mxu0 0.0
    %4925 = vmatprep.subr.mxu0 0.0
    %4926 = vmatpush2.msra.mxu0 0.0
    %4927 = vmatprep.subr.mxu0 0.0
    %4928 = vmatpush2.msra.mxu0 0.0
    %4929 = vmatprep.subr.mxu0 0.0
    %4930 = vmatpush2.msra.mxu0 0.0
    %4931 = vmatprep.subr.mxu0 0.0
    %4932 = vmatpush2.msra.mxu0 0.0
    %4933 = vmatprep.subr.mxu0 0.0
    %4934 = vmatpush2.msra.mxu0 0.0
    %4935 = vmatprep.subr.mxu0 0.0
    %4936 = vmatpush2.msra.mxu0 0.0
    %4937 = vmatprep.subr.mxu0 0.0
    %4938 = vmatpush2.msra.mxu0 0.0
    %4939 = vmatprep.subr.mxu0 0.0
    %4940 = vmatpush2.msra.mxu0 0.0
    %4941 = vmatprep.subr.mxu0 0.0
    %4942 = vmatpush2.msra.mxu0 0.0
    %4943 = vmatprep.subr.mxu0 0.0
    %4944 = vmatpush2.msra.mxu0 0.0
    %4945 = vmatprep.subr.mxu0 0.0
    %4946 = vmatpush2.msra.mxu0 0.0
    %4947 = vmatprep.subr.mxu0 0.0
    %4948 = vmatpush2.msra.mxu0 0.0
    %4949 = vmatprep.subr.mxu0 0.0
    %4950 = vmatpush2.msra.mxu0 0.0
    %4951 = vmatprep.subr.mxu0 0.0
    %4952 = vmatpush2.msra.mxu0 0.0
    %4953 = vmatprep.subr.mxu0 0.0
    %4954 = vmatpush2.msra.mxu0 0.0
    %4955 = vmatprep.mubr.f32.mxu0 0.0
    %4956 = vmatmul.mubr.f32.gmra.mxu0 %v4889
    %v4957 = vpop.f32.mrf.mxu0
    %v4958 = vadd.f32 0.0, %v4957
    %v4959 = vpop.f32.mrf.mxu0
    %4960 = vdwg.mxu0
    %v4961 = vmul.f32 %v4958, %v495
    %v4963 = vsel %vm1202, %v4961, 0
    %4965 = vmatprep.subr.mxu0 0.0
    %4966 = vmatpush1.msra.mxu0 0.0
    %4967 = vmatprep.subr.mxu0 0.0
    %4968 = vmatpush1.msra.mxu0 0.0
    %4969 = vmatprep.subr.mxu0 0.0
    %4970 = vmatpush1.msra.mxu0 0.0
    %4971 = vmatprep.subr.mxu0 0.0
    %4972 = vmatpush1.msra.mxu0 0.0
    %4973 = vmatprep.subr.mxu0 0.0
    %4974 = vmatpush1.msra.mxu0 0.0
    %4975 = vmatprep.subr.mxu0 0.0
    %4976 = vmatpush1.msra.mxu0 0.0
    %4977 = vmatprep.subr.mxu0 0.0
    %4978 = vmatpush1.msra.mxu0 0.0
    %4979 = vmatprep.subr.mxu0 0.0
    %4980 = vmatpush1.msra.mxu0 0.0
    %4981 = vmatprep.subr.mxu0 0.0
    %4982 = vmatpush1.msra.mxu0 %v534
    %4983 = vmatprep.subr.mxu0 0.0
    %4984 = vmatpush1.msra.mxu0 %v533
    %4985 = vmatprep.subr.mxu0 0.0
    %4986 = vmatpush1.msra.mxu0 %v532
    %4987 = vmatprep.subr.mxu0 0.0
    %4988 = vmatpush1.msra.mxu0 %v531
    %4989 = vmatprep.subr.mxu0 0.0
    %4990 = vmatpush1.msra.mxu0 %v530
    %4991 = vmatprep.subr.mxu0 0.0
    %4992 = vmatpush1.msra.mxu0 %v529
    %4993 = vmatprep.subr.mxu0 0.0
    %4994 = vmatpush1.msra.mxu0 %v528
    %4995 = vmatprep.subr.mxu0 0.0
    %4996 = vmatpush1.msra.mxu0 %v527
    %4997 = vmatprep.subr.mxu0 0.0
    %4998 = vmatpush2.msra.mxu0 0.0
    %4999 = vmatprep.subr.mxu0 0.0
    %5000 = vmatpush2.msra.mxu0 0.0
    %5001 = vmatprep.subr.mxu0 0.0
    %5002 = vmatpush2.msra.mxu0 0.0
    %5003 = vmatprep.subr.mxu0 0.0
    %5004 = vmatpush2.msra.mxu0 0.0
    %5005 = vmatprep.subr.mxu0 0.0
    %5006 = vmatpush2.msra.mxu0 0.0
    %5007 = vmatprep.subr.mxu0 0.0
    %5008 = vmatpush2.msra.mxu0 0.0
    %5009 = vmatprep.subr.mxu0 0.0
    %5010 = vmatpush2.msra.mxu0 0.0
    %5011 = vmatprep.subr.mxu0 0.0
    %5012 = vmatpush2.msra.mxu0 0.0
    %5013 = vmatprep.subr.mxu0 0.0
    %5014 = vmatpush2.msra.mxu0 0.0
    %5015 = vmatprep.subr.mxu0 0.0
    %5016 = vmatpush2.msra.mxu0 0.0
    %5017 = vmatprep.subr.mxu0 0.0
    %5018 = vmatpush2.msra.mxu0 0.0
    %5019 = vmatprep.subr.mxu0 0.0
    %5020 = vmatpush2.msra.mxu0 0.0
    %5021 = vmatprep.subr.mxu0 0.0
    %5022 = vmatpush2.msra.mxu0 0.0
    %5023 = vmatprep.subr.mxu0 0.0
    %5024 = vmatpush2.msra.mxu0 0.0
    %5025 = vmatprep.subr.mxu0 0.0
    %5026 = vmatpush2.msra.mxu0 0.0
    %5027 = vmatprep.subr.mxu0 0.0
    %5028 = vmatpush2.msra.mxu0 0.0
    %5029 = vmatprep.mubr.f32.mxu0 0.0
    %5030 = vmatmul.mubr.f32.gmra.mxu0 %v4963
    %v5031 = vpop.f32.mrf.mxu0
    %v5032 = vadd.f32 0.0, %v5031
    %v5033 = vpop.f32.mrf.mxu0
    %5034 = vdwg.mxu0
    %v5035 = vsel %vm1276, %v5032, -inf
    %5036 = vmax.xlane.f32.xlu0 %v5035
    %v5037 = vpop.xlane.xlu0 %5036
    %v5038 = vsub.f32 %v5032, %v5037
    %v5039 = vmul.f32 %v5038, 1.442695
    %v5040 = vpow.pop %v5039
    %v5041 = vsel %vm1276, %v5040, 0.0
    %5042 = vadd.xlane.f32.xlu0 %v5041
    %v5043 = vpop.xlane.xlu0 %5042
    %v5044 = vrcp.pop %v5043
    %v5045 = vmul.f32 %v5043, %v5044
    %v5046 = vsub.f32 2.0, %v5045
    %v5047 = vmul.f32 %v5044, %v5046
    %v5048 = vmul.f32 %v5040, %v5047
    %5050 = vrot.lane.b32.xlu0 %v5048, 8
    %v5051 = vpop.permute.xlu0 %5050
    %5053 = vrot.lane.b32.xlu0 %v5048, 16
    %v5054 = vpop.permute.xlu0 %5053
    %5056 = vrot.lane.b32.xlu0 %v5048, 24
    %v5057 = vpop.permute.xlu0 %5056
    %5059 = vrot.lane.b32.xlu0 %v5048, 32
    %v5060 = vpop.permute.xlu0 %5059
    %5062 = vrot.lane.b32.xlu0 %v5048, 40
    %v5063 = vpop.permute.xlu0 %5062
    %5065 = vrot.lane.b32.xlu0 %v5048, 48
    %v5066 = vpop.permute.xlu0 %5065
    %5068 = vrot.lane.b32.xlu0 %v5048, 56
    %v5069 = vpop.permute.xlu0 %5068
    %v5071 = vsel %vm1276, %v5048, %v5051
    %v5072 = vsel %vm579, %v5071, %v5054
    %v5073 = vsel %vm1315, %v5072, %v5057
    %v5074 = vsel %vm266, %v5073, %v5060
    %v5075 = vsel %vm1318, %v5074, %v5063
    %v5076 = vsel %vm1320, %v5075, %v5066
    %v5077 = vsel %vm1322, %v5076, %v5069
    %v5078 = vmul.f32 %v5077, %v495
    %5079 = vmatprep.subr.mxu0 0.0
    %5080 = vmatpush1.msra.mxu0 0.0
    %5081 = vmatprep.subr.mxu0 0.0
    %5082 = vmatpush1.msra.mxu0 0.0
    %5083 = vmatprep.subr.mxu0 0.0
    %5084 = vmatpush1.msra.mxu0 0.0
    %5085 = vmatprep.subr.mxu0 0.0
    %5086 = vmatpush1.msra.mxu0 0.0
    %5087 = vmatprep.subr.mxu0 0.0
    %5088 = vmatpush1.msra.mxu0 0.0
    %5089 = vmatprep.subr.mxu0 0.0
    %5090 = vmatpush1.msra.mxu0 0.0
    %5091 = vmatprep.subr.mxu0 0.0
    %5092 = vmatpush1.msra.mxu0 0.0
    %5093 = vmatprep.subr.mxu0 0.0
    %5094 = vmatpush1.msra.mxu0 0.0
    %5095 = vmatprep.subr.mxu0 0.0
    %5096 = vmatpush1.msra.mxu0 0.0
    %5097 = vmatprep.subr.mxu0 0.0
    %5098 = vmatpush1.msra.mxu0 0.0
    %5099 = vmatprep.subr.mxu0 0.0
    %5100 = vmatpush1.msra.mxu0 0.0
    %5101 = vmatprep.subr.mxu0 0.0
    %5102 = vmatpush1.msra.mxu0 0.0
    %5103 = vmatprep.subr.mxu0 0.0
    %5104 = vmatpush1.msra.mxu0 %v130
    %5105 = vmatprep.subr.mxu0 0.0
    %5106 = vmatpush1.msra.mxu0 %v129
    %5107 = vmatprep.subr.mxu0 0.0
    %5108 = vmatpush1.msra.mxu0 %v128
    %5109 = vmatprep.subr.mxu0 0.0
    %5110 = vmatpush1.msra.mxu0 %v127
    %5111 = vmatprep.subr.mxu0 0.0
    %5112 = vmatpush2.msra.mxu0 0.0
    %5113 = vmatprep.subr.mxu0 0.0
    %5114 = vmatpush2.msra.mxu0 0.0
    %5115 = vmatprep.subr.mxu0 0.0
    %5116 = vmatpush2.msra.mxu0 0.0
    %5117 = vmatprep.subr.mxu0 0.0
    %5118 = vmatpush2.msra.mxu0 0.0
    %5119 = vmatprep.subr.mxu0 0.0
    %5120 = vmatpush2.msra.mxu0 0.0
    %5121 = vmatprep.subr.mxu0 0.0
    %5122 = vmatpush2.msra.mxu0 0.0
    %5123 = vmatprep.subr.mxu0 0.0
    %5124 = vmatpush2.msra.mxu0 0.0
    %5125 = vmatprep.subr.mxu0 0.0
    %5126 = vmatpush2.msra.mxu0 0.0
    %5127 = vmatprep.subr.mxu0 0.0
    %5128 = vmatpush2.msra.mxu0 0.0
    %5129 = vmatprep.subr.mxu0 0.0
    %5130 = vmatpush2.msra.mxu0 0.0
    %5131 = vmatprep.subr.mxu0 0.0
    %5132 = vmatpush2.msra.mxu0 0.0
    %5133 = vmatprep.subr.mxu0 0.0
    %5134 = vmatpush2.msra.mxu0 0.0
    %5135 = vmatprep.subr.mxu0 0.0
    %5136 = vmatpush2.msra.mxu0 0.0
    %5137 = vmatprep.subr.mxu0 0.0
    %5138 = vmatpush2.msra.mxu0 0.0
    %5139 = vmatprep.subr.mxu0 0.0
    %5140 = vmatpush2.msra.mxu0 0.0
    %5141 = vmatprep.subr.mxu0 0.0
    %5142 = vmatpush2.msra.mxu0 0.0
    %5143 = vmatprep.mubr.f32.mxu0 0.0
    %5144 = vmatmul.mubr.f32.gmra.mxu0 %v4889
    %v5145 = vpop.f32.mrf.mxu0
    %v5146 = vadd.f32 0.0, %v5145
    %v5147 = vpop.f32.mrf.mxu0
    %5148 = vdwg.mxu0
    %v5150 = vsel %vm1202, %v5078, 0
    %5152 = vmatprep.subr.mxu0 0.0
    %5153 = vmatpush1.msra.mxu0 0.0
    %5154 = vmatprep.subr.mxu0 0.0
    %5155 = vmatpush1.msra.mxu0 0.0
    %5156 = vmatprep.subr.mxu0 0.0
    %5157 = vmatpush1.msra.mxu0 0.0
    %5158 = vmatprep.subr.mxu0 0.0
    %5159 = vmatpush1.msra.mxu0 0.0
    %5160 = vmatprep.subr.mxu0 0.0
    %5161 = vmatpush1.msra.mxu0 0.0
    %5162 = vmatprep.subr.mxu0 0.0
    %5163 = vmatpush1.msra.mxu0 0.0
    %5164 = vmatprep.subr.mxu0 0.0
    %5165 = vmatpush1.msra.mxu0 0.0
    %5166 = vmatprep.subr.mxu0 0.0
    %5167 = vmatpush1.msra.mxu0 0.0
    %5168 = vmatprep.subr.mxu0 0.0
    %5169 = vmatpush1.msra.mxu0 %v482
    %5170 = vmatprep.subr.mxu0 0.0
    %5171 = vmatpush1.msra.mxu0 %v477
    %5172 = vmatprep.subr.mxu0 0.0
    %5173 = vmatpush1.msra.mxu0 %v472
    %5174 = vmatprep.subr.mxu0 0.0
    %5175 = vmatpush1.msra.mxu0 %v467
    %5176 = vmatprep.subr.mxu0 0.0
    %5177 = vmatpush1.msra.mxu0 %v462
    %5178 = vmatprep.subr.mxu0 0.0
    %5179 = vmatpush1.msra.mxu0 %v457
    %5180 = vmatprep.subr.mxu0 0.0
    %5181 = vmatpush1.msra.mxu0 %v452
    %5182 = vmatprep.subr.mxu0 0.0
    %5183 = vmatpush1.msra.mxu0 %v447
    %5184 = vmatprep.subr.mxu0 0.0
    %5185 = vmatpush2.msra.mxu0 0.0
    %5186 = vmatprep.subr.mxu0 0.0
    %5187 = vmatpush2.msra.mxu0 0.0
    %5188 = vmatprep.subr.mxu0 0.0
    %5189 = vmatpush2.msra.mxu0 0.0
    %5190 = vmatprep.subr.mxu0 0.0
    %5191 = vmatpush2.msra.mxu0 0.0
    %5192 = vmatprep.subr.mxu0 0.0
    %5193 = vmatpush2.msra.mxu0 0.0
    %5194 = vmatprep.subr.mxu0 0.0
    %5195 = vmatpush2.msra.mxu0 0.0
    %5196 = vmatprep.subr.mxu0 0.0
    %5197 = vmatpush2.msra.mxu0 0.0
    %5198 = vmatprep.subr.mxu0 0.0
    %5199 = vmatpush2.msra.mxu0 0.0
    %5200 = vmatprep.subr.mxu0 0.0
    %5201 = vmatpush2.msra.mxu0 0.0
    %5202 = vmatprep.subr.mxu0 0.0
    %5203 = vmatpush2.msra.mxu0 0.0
    %5204 = vmatprep.subr.mxu0 0.0
    %5205 = vmatpush2.msra.mxu0 0.0
    %5206 = vmatprep.subr.mxu0 0.0
    %5207 = vmatpush2.msra.mxu0 0.0
    %5208 = vmatprep.subr.mxu0 0.0
    %5209 = vmatpush2.msra.mxu0 0.0
    %5210 = vmatprep.subr.mxu0 0.0
    %5211 = vmatpush2.msra.mxu0 0.0
    %5212 = vmatprep.subr.mxu0 0.0
    %5213 = vmatpush2.msra.mxu0 0.0
    %5214 = vmatprep.subr.mxu0 0.0
    %5215 = vmatpush2.msra.mxu0 0.0
    %5216 = vmatprep.mubr.f32.mxu0 0.0
    %5217 = vmatmul.mubr.f32.gmra.mxu0 %v5150
    %v5218 = vpop.f32.mrf.mxu0
    %v5219 = vadd.f32 %v5146, %v5218
    %v5220 = vpop.f32.mrf.mxu0
    %5221 = vdwg.mxu0
    %v5222 = vtanh.pop %v5219
    %s5223 = scalar_lea.vmem [#allocation10], 40
    %5224 = vst.msk [vmem:[%s5223] sm:$0xff] %vm266, %v5222
    %5226 = vst.msk [vmem:[#allocation11] sm:$0xff] %vm266, %v4788
    %5228 = vrot.lane.b32.xlu0 %v4709, 96
    %v5229 = vpop.permute.xlu0 %5228
    %5231 = vst.msk [vmem:[#allocation13] sm:$0xff] %vm266, %v5229
    %s5233 = scalar_lea.vmem [#allocation11], 8
    %5234 = vst.msk [vmem:[%s5233] sm:$0xff] %vm266, %v4888
    %5236 = vrot.lane.b32.xlu0 %v4879, 96
    %v5237 = vpop.permute.xlu0 %5236
    %s5239 = scalar_lea.vmem [#allocation13], 8
    %5240 = vst.msk [vmem:[%s5239] sm:$0xff] %vm266, %v5237
    %5241 = vst.msk [vmem:[#allocation14] sm:$0xff] %vm1276, %v5048
    // Predicated region
    $region50: #{tpu_custom_call.1} parent=1 // pred_check
      _
    $region51: #{tpu_custom_call.1} parent=1 // pred_check_branch
      %5243 = sbr.rel (0) target = $region53
    $region52: #{tpu_custom_call.1} parent=1 // pred_region
      %s5245 = ssub.s32 768, 768
      %5246 = vsyncadd [#allocation4], %s5245
      %s5247 = sshll.u32 [#allocation10], 4
      %s5248 = int_to_ptr.vmem [resolvable:$true] %s5247
      %5253 = dma.vmem_to_hbm [thread:$0]  %s5248, 768, %s8, [#allocation4], 128, 128, 8
    $region53: #{tpu_custom_call.1} parent=1 // pred_fallthru
      _
    // Predicated region
    $region54: #{tpu_custom_call.1} parent=1 // pred_check
      _
    $region55: #{tpu_custom_call.1} parent=1 // pred_check_branch
      %5255 = sbr.rel (0) target = $region57
    $region56: #{tpu_custom_call.1} parent=1 // pred_region
      %s5257 = ssub.s32 256, 256
      %5258 = vsyncadd [#allocation12], %s5257
      %s5259 = sshll.u32 [#allocation11], 4
      %s5260 = int_to_ptr.vmem [resolvable:$true] %s5259
      %5265 = dma.vmem_to_hbm [thread:$0]  %s5260, 256, %s9, [#allocation12], 128, 128, 8
    $region57: #{tpu_custom_call.1} parent=1 // pred_fallthru
      _
    // Predicated region
    $region58: #{tpu_custom_call.1} parent=1 // pred_check
      _
    $region59: #{tpu_custom_call.1} parent=1 // pred_check_branch
      %5267 = sbr.rel (0) target = $region61
    $region60: #{tpu_custom_call.1} parent=1 // pred_region
      %s5269 = ssub.s32 256, 256
      %5270 = vsyncadd [#allocation12], %s5269
      %s5271 = sshll.u32 [#allocation13], 4
      %s5272 = int_to_ptr.vmem [resolvable:$true] %s5271
      %5277 = dma.vmem_to_hbm [thread:$0]  %s5272, 256, %s10, [#allocation12], 128, 128, 8
    $region61: #{tpu_custom_call.1} parent=1 // pred_fallthru
      _
    // Predicated region
    $region62: #{tpu_custom_call.1} parent=1 // pred_check
      _
    $region63: #{tpu_custom_call.1} parent=1 // pred_check_branch
      %5279 = sbr.rel (0) target = $region65
    $region64: #{tpu_custom_call.1} parent=1 // pred_region
      %s5281 = ssub.s32 128, 128
      %5282 = vsyncadd [#allocation15], %s5281
      %s5284 = sshll.u32 [#allocation14], 4
      %s5285 = int_to_ptr.vmem [resolvable:$true] %s5284
      %5287 = dma.vmem_to_hbm [thread:$0]  %s5285, 128, %s11, [#allocation15]
    $region65: #{tpu_custom_call.1} parent=1 // pred_fallthru
      _
    // Predicated region
    $region66: #{tpu_custom_call.1} parent=1 // pred_check
      _
    $region67: #{tpu_custom_call.1} parent=1 // pred_check_branch
      %5289 = sbr.rel (0) target = $region69
    $region68: #{tpu_custom_call.1} parent=1 // pred_region
      %5290 = dma.done [#allocation4], 768
    $region69: #{tpu_custom_call.1} parent=1 // pred_fallthru
      _
    // Predicated region
    $region70: #{tpu_custom_call.1} parent=1 // pred_check
      _
    $region71: #{tpu_custom_call.1} parent=1 // pred_check_branch
      %5292 = sbr.rel (0) target = $region73
    $region72: #{tpu_custom_call.1} parent=1 // pred_region
      %5293 = dma.done [#allocation12], 256
    $region73: #{tpu_custom_call.1} parent=1 // pred_fallthru
      _
    // Predicated region
    $region74: #{tpu_custom_call.1} parent=1 // pred_check
      _
    $region75: #{tpu_custom_call.1} parent=1 // pred_check_branch
      %5295 = sbr.rel (0) target = $region77
    $region76: #{tpu_custom_call.1} parent=1 // pred_region
      %5296 = dma.done [#allocation12], 256
    $region77: #{tpu_custom_call.1} parent=1 // pred_fallthru
      _
    // Predicated region
    $region78: #{tpu_custom_call.1} parent=1 // pred_check
      _
    $region79: #{tpu_custom_call.1} parent=1 // pred_check_branch
      %5298 = sbr.rel (0) target = $region81
    $region80: #{tpu_custom_call.1} parent=1 // pred_region
      %5299 = dma.done [#allocation15], 128
    $region81: #{tpu_custom_call.1} parent=1 // pred_fallthru
      _
    %5300 = vsyncpa [#allocation3], 1
    %5301 = vsyncpa [#allocation6], 1
    %5302 = vsyncpa [#allocation9], 1
    %5303 = vsyncpa [#allocation4], 1
    %5304 = vsyncpa [#allocation12], 1
    %5305 = vsyncpa [#allocation15], 1

</llo_original>
